<compile_context>
chip_gen: v7x
topology: tpu7x:2x2x1
jax: 0.10.0
libtpu: 0.0.40
codegen_flags: <defaults>
</compile_context>

<pallas_src>
import math
import functools

import jax
import jax.numpy as jnp
from jax.experimental import pallas as pl
from jax.experimental.pallas import tpu as pltpu  # noqa: F401  (TPU backend; no extra params needed at this size)

EPS = 1e-6

# -------------------- model hyper-parameters (small, synthetic) --------------------
B = 2          # batch
L = 16         # src_len
D_MODEL = 32
HEADS = 4
D_K = 8
D_V = 8
D_FF = 64
# TODO(synk): training-mode dropout (stateful RNG masks) is not implemented (inference only).


# ------------------------------ fused Pallas kernel --------------------------------
def encoder_layer_kernel(
    x_ref, mask_ref, adj_ref,
    wqkv1_ref, bqkv1_ref, wo1_ref, bo1_ref,
    wqkv2_ref, bqkv2_ref, wo2_ref, bo2_ref,
    ln_g_ref, ln_b_ref,
    gm_ref, bm_ref, w1m_ref, b1m_ref, w2m_ref, b2m_ref,
    gf_ref, bf_ref, w1f_ref, b1f_ref, w2f_ref, b2f_ref,
    out_ref, attn_ref,
    *, batch, seq, d_model, heads, d_k, d_v,
):
    f32 = jnp.float32
    n_rows = batch * seq
    hdk = heads * d_k
    scale = 1.0 / math.sqrt(d_k)

    def layer_norm(x2d, gamma, beta):
        # a2 * (x - mean) / (std + eps) + b2, unbiased std (matches torch.std default).
        mean = jnp.mean(x2d, axis=-1, keepdims=True)
        cent = x2d - mean
        var = jnp.sum(cent * cent, axis=-1, keepdims=True) * (1.0 / (d_model - 1))
        inv = pl.reciprocal(jnp.sqrt(var) + EPS, approx=True)
        return gamma * cent * inv + beta

    def ffn(x2d, gamma, beta, w1, b1, w2, b2):
        # PositionwiseFeedForward: W2(relu(W1(LN(x)))) + x   on (B*L, D).
        xn = layer_norm(x2d, gamma, beta)
        h = jnp.dot(xn.astype(w1.dtype), w1, preferred_element_type=f32) + b1
        h = jnp.maximum(h, 0.0)
        y = jnp.dot(h.astype(w2.dtype), w2, preferred_element_type=f32) + b2
        return y + x2d

    def mha(x2d, add_mask, wqkv, bqkv, wo, bo):
        # Fused QKV projection on (B*L, D) @ (D, 3*H*d_k).
        qkv = jnp.dot(x2d.astype(wqkv.dtype), wqkv, preferred_element_type=f32) + bqkv

        def head_major(cols, d):
            # (B*L, H*d) -> (H*B, L, d); only leading-dim reshapes + major-axis concat.
            parts = [cols[:, h * d:(h + 1) * d].reshape(1, batch, seq, d)
                     for h in range(heads)]
            return jnp.concatenate(parts, axis=0).reshape(heads * batch, seq, d)

        q3 = head_major(qkv[:, :hdk], d_k).astype(jnp.bfloat16)
        k3 = head_major(qkv[:, hdk:2 * hdk], d_k).astype(jnp.bfloat16)
        v3 = head_major(qkv[:, 2 * hdk:], d_v).astype(jnp.bfloat16)

        # Batched-over-(head,batch) score matmul + additive mask + softmax (f32).
        scores = jnp.einsum('nqd,nkd->nqk', q3, k3,
                            preferred_element_type=f32) * scale      # (H*B, L, L)
        scores = scores.reshape(heads, batch, seq, seq) + add_mask[None]
        m = jnp.max(scores, axis=-1, keepdims=True)
        e = jnp.exp(scores - m)
        attn = e * pl.reciprocal(jnp.sum(e, axis=-1, keepdims=True), approx=True)

        # Batched attention @ V, then one (B*L, H*d_v) x (H*d_v, D) output matmul.
        ctx = jnp.einsum('nqk,nkd->nqd',
                         attn.reshape(heads * batch, seq, seq).astype(jnp.bfloat16),
                         v3, preferred_element_type=f32)             # (H*B, L, d_v)
        ctx = ctx.reshape(heads, n_rows, d_v)
        ctx2d = jnp.concatenate([ctx[h] for h in range(heads)], axis=-1)  # (B*L, H*d_v)
        out = jnp.dot(ctx2d.astype(wo.dtype), wo, preferred_element_type=f32) + bo
        return out, attn                                             # attn: (H, B, L, L)

    # ---- layer body ----
    x2d = x_ref[...].reshape(n_rows, d_model).astype(f32)
    neg = f32(-1e18)
    zero = f32(0.0)
    pad_add = jnp.where(mask_ref[...] != 0, neg, zero)   # (B, L, L)
    adj_add = jnp.where(adj_ref[...] != 0, neg, zero)    # (B, L, L)

    ln_g = ln_g_ref[...]
    ln_b = ln_b_ref[...]

    ctx1, _ = mha(x2d, pad_add, wqkv1_ref[...], bqkv1_ref[...], wo1_ref[...], bo1_ref[...])
    h1 = layer_norm(ctx1 + x2d, ln_g, ln_b)
    mid = ffn(h1, gm_ref[...], bm_ref[...], w1m_ref[...], b1m_ref[...],
              w2m_ref[...], b2m_ref[...])

    ctx2, attn2 = mha(mid, adj_add, wqkv2_ref[...], bqkv2_ref[...], wo2_ref[...], bo2_ref[...])
    attn_ref[...] = attn2                                           # single (H, B, L, L) store
    h2 = layer_norm(ctx2 + mid, ln_g, ln_b)
    y = ffn(h2, gf_ref[...], bf_ref[...], w1f_ref[...], b1f_ref[...],
            w2f_ref[...], b2f_ref[...])

    out_ref[...] = y.reshape(batch, seq, d_model).astype(out_ref.dtype)


# ------------------------------ wrapper ---------------------------------------------
def _prep_attn_params(p):
    # Fuse QKV weights/biases; weights in bf16 (halves weight DMA bytes; f32 accumulation).
    return dict(
        wqkv=jnp.concatenate([p["wq"], p["wk"], p["wv"]], axis=1).astype(jnp.bfloat16),
        bqkv=jnp.concatenate([p["bq"], p["bk"], p["bv"]], axis=1),
        wo=p["wo"].astype(jnp.bfloat16),
        bo=p["bo"],
    )


def _prep_ffn_params(p):
    return dict(gamma=p["gamma"], beta=p["beta"],
                w1=p["w1"].astype(jnp.bfloat16), b1=p["b1"],
                w2=p["w2"].astype(jnp.bfloat16), b2=p["b2"])


@jax.jit
def transformer_encoder_layer(inputs, mask, adjacency, params):
    """sytax_aware=True branch of the PyTorch forward (dropout == identity)."""
    Bb, Ll, Dd = inputs.shape
    a1 = _prep_attn_params(params["attn"])
    a2 = _prep_attn_params(params["attn_struc"])
    fm = _prep_ffn_params(params["ffn_mid"])
    ff = _prep_ffn_params(params["ffn"])

    kernel = functools.partial(
        encoder_layer_kernel,
        batch=Bb, seq=Ll, d_model=Dd, heads=HEADS, d_k=D_K, d_v=D_V)

    # Single fused call, no grid: every operand is a full-array VMEM block, DMA'd once.
    out, attn_hb = pl.pallas_call(
        kernel,
        out_shape=(
            jax.ShapeDtypeStruct((Bb, Ll, Dd), inputs.dtype),
            jax.ShapeDtypeStruct((HEADS, Bb, Ll, Ll), jnp.float32),
        ),
    )(inputs, mask, adjacency,
      a1["wqkv"], a1["bqkv"], a1["wo"], a1["bo"],
      a2["wqkv"], a2["bqkv"], a2["wo"], a2["bo"],
      params["ln_gamma"], params["ln_beta"],
      fm["gamma"], fm["beta"], fm["w1"], fm["b1"], fm["w2"], fm["b2"],
      ff["gamma"], ff["beta"], ff["w1"], ff["b1"], ff["w2"], ff["b2"])

    # (H, B, L, L) -> (B, H, L, L): pure layout plumbing outside the kernel.
    return out, jnp.transpose(attn_hb, (1, 0, 2, 3))


# ------------------------------ parameter init & reference --------------------------
def init_params(key):
    ks = iter(jax.random.split(key, 40))

    def lin(din, dout, scale=0.05):
        w = scale * jax.random.normal(next(ks), (din, dout), jnp.float32)
        b = 0.01 * jax.random.normal(next(ks), (1, dout), jnp.float32)
        return w, b

    def attn_params():
        wq, bq = lin(D_MODEL, HEADS * D_K)
        wk, bk = lin(D_MODEL, HEADS * D_K)
        wv, bv = lin(D_MODEL, HEADS * D_V)
        wo, bo = lin(HEADS * D_V, D_MODEL)
        return dict(wq=wq, bq=bq, wk=wk, bk=bk, wv=wv, bv=bv, wo=wo, bo=bo)

    def ffn_params():
        w1, b1 = lin(D_MODEL, D_FF)
        w2, b2 = lin(D_FF, D_MODEL)
        gamma = 1.0 + 0.1 * jax.random.normal(next(ks), (1, D_MODEL), jnp.float32)
        beta = 0.1 * jax.random.normal(next(ks), (1, D_MODEL), jnp.float32)
        return dict(w1=w1, b1=b1, w2=w2, b2=b2, gamma=gamma, beta=beta)

    return dict(
        attn=attn_params(),
        attn_struc=attn_params(),
        ffn_mid=ffn_params(),
        ffn=ffn_params(),
        ln_gamma=1.0 + 0.1 * jax.random.normal(next(ks), (1, D_MODEL), jnp.float32),
        ln_beta=0.1 * jax.random.normal(next(ks), (1, D_MODEL), jnp.float32),
    )


def _ref_ln(x, g, b):
    mean = jnp.mean(x, -1, keepdims=True)
    std = jnp.sqrt(jnp.sum((x - mean) ** 2, -1, keepdims=True) / (x.shape[-1] - 1))
    return g * (x - mean) / (std + EPS) + b


def _ref_mha(x, mask, p):
    Bb, Ll, _ = x.shape
    q = (x @ p["wq"] + p["bq"]).reshape(Bb, Ll, HEADS, D_K).transpose(0, 2, 1, 3) / math.sqrt(D_K)
    k = (x @ p["wk"] + p["bk"]).reshape(Bb, Ll, HEADS, D_K).transpose(0, 2, 1, 3)
    v = (x @ p["wv"] + p["bv"]).reshape(Bb, Ll, HEADS, D_V).transpose(0, 2, 1, 3)
    scores = jnp.einsum("bhqd,bhkd->bhqk", q, k, precision=jax.lax.Precision.HIGHEST)
    scores = jnp.where(mask[:, None] != 0, -1e18, scores)
    attn = jax.nn.softmax(scores, -1)
    ctx = jnp.einsum("bhqk,bhkd->bhqd", attn, v,
                     precision=jax.lax.Precision.HIGHEST).transpose(0, 2, 1, 3).reshape(Bb, Ll, HEADS * D_V)
    return ctx @ p["wo"] + p["bo"], attn


def _ref_ffn(x, p):
    h = jnp.maximum(_ref_ln(x, p["gamma"], p["beta"]) @ p["w1"] + p["b1"], 0.0)
    return h @ p["w2"] + p["b2"] + x


def reference(x, mask, adjacency, params):
    ctx1, _ = _ref_mha(x, mask, params["attn"])
    h1 = _ref_ln(ctx1 + x, params["ln_gamma"], params["ln_beta"])
    mid = _ref_ffn(h1, params["ffn_mid"])
    ctx2, attn2 = _ref_mha(mid, adjacency, params["attn_struc"])
    h2 = _ref_ln(ctx2 + mid, params["ln_gamma"], params["ln_beta"])
    return _ref_ffn(h2, params["ffn"]), attn2


# ------------------------------------ main -------------------------------------------
if __name__ == "__main__":
    key = jax.random.PRNGKey(0)
    k_in, k_adj, k_par = jax.random.split(key, 3)

    params = init_params(k_par)
    inputs = jax.random.normal(k_in, (B, L, D_MODEL), jnp.float32)

    # padding mask: nonzero => masked (key position is padding)
    lengths = jnp.array([L, L - 5], dtype=jnp.int32)
    col = jnp.arange(L)[None, None, :]                        # (1, 1, L)
    mask = (col >= lengths[:, None, None]).astype(jnp.int32)  # (B, L, L)

    # adjacency mask for the structural attention: nonzero => masked (no edge)
    adj = (jax.random.uniform(k_adj, (B, L, L)) > 0.5).astype(jnp.int32)
    adj = adj * (1 - jnp.eye(L, dtype=jnp.int32))[None]       # keep diagonal unmasked

    out, attn = transformer_encoder_layer(inputs, mask, adj, params)
    out = jax.block_until_ready(out)
    attn = jax.block_until_ready(attn)

    ref_out, ref_attn = reference(inputs, mask, adj, params)
    assert out.shape == (B, L, D_MODEL) and attn.shape == (B, HEADS, L, L)
    assert jnp.allclose(out, ref_out, rtol=5e-2, atol=5e-2), "output mismatch vs reference"
    assert jnp.allclose(attn, ref_attn, rtol=5e-2, atol=5e-2), "attention mismatch vs reference"

    print("KERNEL_OK")
</pallas_src>

<mosaic_0001>
module attributes {stable_mosaic.version = 11 : i64} {
  func.func @encoder_layer_kernel(%arg0: memref<2x16x32xf32, #tpu.memory_space<vmem>>, %arg1: memref<2x1x16xi32, #tpu.memory_space<vmem>>, %arg2: memref<2x16x16xi32, #tpu.memory_space<vmem>>, %arg3: memref<32x96xbf16, #tpu.memory_space<vmem>>, %arg4: memref<1x96xf32, #tpu.memory_space<vmem>>, %arg5: memref<32x32xbf16, #tpu.memory_space<vmem>>, %arg6: memref<1x32xf32, #tpu.memory_space<vmem>>, %arg7: memref<32x96xbf16, #tpu.memory_space<vmem>>, %arg8: memref<1x96xf32, #tpu.memory_space<vmem>>, %arg9: memref<32x32xbf16, #tpu.memory_space<vmem>>, %arg10: memref<1x32xf32, #tpu.memory_space<vmem>>, %arg11: memref<1x32xf32, #tpu.memory_space<vmem>>, %arg12: memref<1x32xf32, #tpu.memory_space<vmem>>, %arg13: memref<1x32xf32, #tpu.memory_space<vmem>>, %arg14: memref<1x32xf32, #tpu.memory_space<vmem>>, %arg15: memref<32x64xbf16, #tpu.memory_space<vmem>>, %arg16: memref<1x64xf32, #tpu.memory_space<vmem>>, %arg17: memref<64x32xbf16, #tpu.memory_space<vmem>>, %arg18: memref<1x32xf32, #tpu.memory_space<vmem>>, %arg19: memref<1x32xf32, #tpu.memory_space<vmem>>, %arg20: memref<1x32xf32, #tpu.memory_space<vmem>>, %arg21: memref<32x64xbf16, #tpu.memory_space<vmem>>, %arg22: memref<1x64xf32, #tpu.memory_space<vmem>>, %arg23: memref<64x32xbf16, #tpu.memory_space<vmem>>, %arg24: memref<1x32xf32, #tpu.memory_space<vmem>>, %arg25: memref<2x16x32xf32, #tpu.memory_space<vmem>>, %arg26: memref<4x2x16x16xf32, #tpu.memory_space<vmem>>) attributes {dimension_semantics = [], scalar_prefetch = 0 : i64, scratch_operands = 0 : i64, tpu.core_type = #tpu.core_type<tc>} {
    %c0 = arith.constant 0 : index
    %c0_0 = arith.constant 0 : index
    %c0_1 = arith.constant 0 : index
    %0 = vector.load %arg0[%c0, %c0_0, %c0_1] : memref<2x16x32xf32, #tpu.memory_space<vmem>>, vector<2x16x32xf32>
    %1 = vector.shape_cast %0 : vector<2x16x32xf32> to vector<32x32xf32>
    %c0_2 = arith.constant 0 : index
    %c0_3 = arith.constant 0 : index
    %c0_4 = arith.constant 0 : index
    %2 = vector.load %arg1[%c0_2, %c0_3, %c0_4] : memref<2x1x16xi32, #tpu.memory_space<vmem>>, vector<2x1x16xi32>
    %c0_i32 = arith.constant 0 : i32
    %3 = vector.broadcast %c0_i32 : i32 to vector<2x1x16xi32>
    %4 = arith.cmpi ne, %2, %3 : vector<2x1x16xi32>
    %cst = arith.constant -9.99999984E+17 : f32
    %cst_5 = arith.constant 0.000000e+00 : f32
    %5 = vector.broadcast %cst : f32 to vector<2x1x16xf32>
    %6 = vector.broadcast %cst_5 : f32 to vector<2x1x16xf32>
    %7 = arith.select %4, %5, %6 : vector<2x1x16xi1>, vector<2x1x16xf32>
    %c0_6 = arith.constant 0 : index
    %c0_7 = arith.constant 0 : index
    %c0_8 = arith.constant 0 : index
    %8 = vector.load %arg2[%c0_6, %c0_7, %c0_8] : memref<2x16x16xi32, #tpu.memory_space<vmem>>, vector<2x16x16xi32>
    %c0_i32_9 = arith.constant 0 : i32
    %9 = vector.broadcast %c0_i32_9 : i32 to vector<2x16x16xi32>
    %10 = arith.cmpi ne, %8, %9 : vector<2x16x16xi32>
    %cst_10 = arith.constant -9.99999984E+17 : f32
    %cst_11 = arith.constant 0.000000e+00 : f32
    %11 = vector.broadcast %cst_10 : f32 to vector<2x16x16xf32>
    %12 = vector.broadcast %cst_11 : f32 to vector<2x16x16xf32>
    %13 = arith.select %10, %11, %12 : vector<2x16x16xi1>, vector<2x16x16xf32>
    %c0_12 = arith.constant 0 : index
    %c0_13 = arith.constant 0 : index
    %14 = vector.load %arg11[%c0_12, %c0_13] : memref<1x32xf32, #tpu.memory_space<vmem>>, vector<1x32xf32>
    %c0_14 = arith.constant 0 : index
    %c0_15 = arith.constant 0 : index
    %15 = vector.load %arg12[%c0_14, %c0_15] : memref<1x32xf32, #tpu.memory_space<vmem>>, vector<1x32xf32>
    %c0_16 = arith.constant 0 : index
    %c0_17 = arith.constant 0 : index
    %16 = vector.load %arg3[%c0_16, %c0_17] : memref<32x96xbf16, #tpu.memory_space<vmem>>, vector<32x96xbf16>
    %c0_18 = arith.constant 0 : index
    %c0_19 = arith.constant 0 : index
    %17 = vector.load %arg4[%c0_18, %c0_19] : memref<1x96xf32, #tpu.memory_space<vmem>>, vector<1x96xf32>
    %c0_20 = arith.constant 0 : index
    %c0_21 = arith.constant 0 : index
    %18 = vector.load %arg5[%c0_20, %c0_21] : memref<32x32xbf16, #tpu.memory_space<vmem>>, vector<32x32xbf16>
    %c0_22 = arith.constant 0 : index
    %c0_23 = arith.constant 0 : index
    %19 = vector.load %arg6[%c0_22, %c0_23] : memref<1x32xf32, #tpu.memory_space<vmem>>, vector<1x32xf32>
    %20 = arith.truncf %1 : vector<32x32xf32> to vector<32x32xbf16>
    %cst_24 = arith.constant dense<0.000000e+00> : vector<32x96xf32>
    %21 = tpu.matmul %20, %16, %cst_24 {dimension_numbers = #tpu.dot_dimension_numbers<[1], [0], [0], [1], [0, 0, 1, 1], [], []>} : vector<32x32xbf16>, vector<32x96xbf16>, vector<32x96xf32> -> vector<32x96xf32>
    %22 = vector.broadcast %17 : vector<1x96xf32> to vector<32x96xf32>
    %23 = arith.addf %21, %22 : vector<32x96xf32>
    %24 = vector.extract_strided_slice %23 {offsets = [0, 0], sizes = [32, 32], strides = [1, 1]} : vector<32x96xf32> to vector<32x32xf32>
    %25 = vector.extract_strided_slice %24 {offsets = [0, 0], sizes = [32, 8], strides = [1, 1]} : vector<32x32xf32> to vector<32x8xf32>
    %26 = vector.shape_cast %25 : vector<32x8xf32> to vector<1x2x16x8xf32>
    %27 = vector.extract_strided_slice %24 {offsets = [0, 8], sizes = [32, 8], strides = [1, 1]} : vector<32x32xf32> to vector<32x8xf32>
    %28 = vector.shape_cast %27 : vector<32x8xf32> to vector<1x2x16x8xf32>
    %29 = vector.extract_strided_slice %24 {offsets = [0, 16], sizes = [32, 8], strides = [1, 1]} : vector<32x32xf32> to vector<32x8xf32>
    %30 = vector.shape_cast %29 : vector<32x8xf32> to vector<1x2x16x8xf32>
    %31 = vector.extract_strided_slice %24 {offsets = [0, 24], sizes = [32, 8], strides = [1, 1]} : vector<32x32xf32> to vector<32x8xf32>
    %32 = vector.shape_cast %31 : vector<32x8xf32> to vector<1x2x16x8xf32>
    %33 = tpu.concatenate %26, %28, %30, %32 in 0 : vector<1x2x16x8xf32>, vector<1x2x16x8xf32>, vector<1x2x16x8xf32>, vector<1x2x16x8xf32> -> vector<4x2x16x8xf32>
    %34 = vector.shape_cast %33 : vector<4x2x16x8xf32> to vector<8x16x8xf32>
    %35 = arith.truncf %34 : vector<8x16x8xf32> to vector<8x16x8xbf16>
    %36 = vector.extract_strided_slice %23 {offsets = [0, 32], sizes = [32, 32], strides = [1, 1]} : vector<32x96xf32> to vector<32x32xf32>
    %37 = vector.extract_strided_slice %36 {offsets = [0, 0], sizes = [32, 8], strides = [1, 1]} : vector<32x32xf32> to vector<32x8xf32>
    %38 = vector.shape_cast %37 : vector<32x8xf32> to vector<1x2x16x8xf32>
    %39 = vector.extract_strided_slice %36 {offsets = [0, 8], sizes = [32, 8], strides = [1, 1]} : vector<32x32xf32> to vector<32x8xf32>
    %40 = vector.shape_cast %39 : vector<32x8xf32> to vector<1x2x16x8xf32>
    %41 = vector.extract_strided_slice %36 {offsets = [0, 16], sizes = [32, 8], strides = [1, 1]} : vector<32x32xf32> to vector<32x8xf32>
    %42 = vector.shape_cast %41 : vector<32x8xf32> to vector<1x2x16x8xf32>
    %43 = vector.extract_strided_slice %36 {offsets = [0, 24], sizes = [32, 8], strides = [1, 1]} : vector<32x32xf32> to vector<32x8xf32>
    %44 = vector.shape_cast %43 : vector<32x8xf32> to vector<1x2x16x8xf32>
    %45 = tpu.concatenate %38, %40, %42, %44 in 0 : vector<1x2x16x8xf32>, vector<1x2x16x8xf32>, vector<1x2x16x8xf32>, vector<1x2x16x8xf32> -> vector<4x2x16x8xf32>
    %46 = vector.shape_cast %45 : vector<4x2x16x8xf32> to vector<8x16x8xf32>
    %47 = arith.truncf %46 : vector<8x16x8xf32> to vector<8x16x8xbf16>
    %48 = vector.extract_strided_slice %23 {offsets = [0, 64], sizes = [32, 32], strides = [1, 1]} : vector<32x96xf32> to vector<32x32xf32>
    %49 = vector.extract_strided_slice %48 {offsets = [0, 0], sizes = [32, 8], strides = [1, 1]} : vector<32x32xf32> to vector<32x8xf32>
    %50 = vector.shape_cast %49 : vector<32x8xf32> to vector<1x2x16x8xf32>
    %51 = vector.extract_strided_slice %48 {offsets = [0, 8], sizes = [32, 8], strides = [1, 1]} : vector<32x32xf32> to vector<32x8xf32>
    %52 = vector.shape_cast %51 : vector<32x8xf32> to vector<1x2x16x8xf32>
    %53 = vector.extract_strided_slice %48 {offsets = [0, 16], sizes = [32, 8], strides = [1, 1]} : vector<32x32xf32> to vector<32x8xf32>
    %54 = vector.shape_cast %53 : vector<32x8xf32> to vector<1x2x16x8xf32>
    %55 = vector.extract_strided_slice %48 {offsets = [0, 24], sizes = [32, 8], strides = [1, 1]} : vector<32x32xf32> to vector<32x8xf32>
    %56 = vector.shape_cast %55 : vector<32x8xf32> to vector<1x2x16x8xf32>
    %57 = tpu.concatenate %50, %52, %54, %56 in 0 : vector<1x2x16x8xf32>, vector<1x2x16x8xf32>, vector<1x2x16x8xf32>, vector<1x2x16x8xf32> -> vector<4x2x16x8xf32>
    %58 = vector.shape_cast %57 : vector<4x2x16x8xf32> to vector<8x16x8xf32>
    %59 = arith.truncf %58 : vector<8x16x8xf32> to vector<8x16x8xbf16>
    "tpu.trace_start"() <{level = 10 : i32, message = "nqd,nkd->nqk"}> : () -> ()
    %cst_25 = arith.constant dense<0.000000e+00> : vector<8x16x16xf32>
    %60 = tpu.matmul %35, %47, %cst_25 {dimension_numbers = #tpu.dot_dimension_numbers<[2], [2], [1], [1], [0, 0, 0, 1, 1, 1], [0], [0]>} : vector<8x16x8xbf16>, vector<8x16x8xbf16>, vector<8x16x16xf32> -> vector<8x16x16xf32>
    "tpu.trace_stop"() : () -> ()
    %cst_26 = arith.constant 0.353553385 : f32
    %61 = vector.broadcast %cst_26 : f32 to vector<8x16x16xf32>
    %62 = arith.mulf %60, %61 : vector<8x16x16xf32>
    %63 = vector.shape_cast %62 : vector<8x16x16xf32> to vector<4x2x16x16xf32>
    %64 = vector.shape_cast %7 : vector<2x1x16xf32> to vector<1x2x1x16xf32>
    %65 = vector.broadcast %64 : vector<1x2x1x16xf32> to vector<4x2x16x16xf32>
    %66 = arith.addf %63, %65 : vector<4x2x16x16xf32>
    %cst_27 = arith.constant dense<0xFF800000> : vector<4x2x16xf32>
    %67 = vector.multi_reduction <maximumf>, %66, %cst_27 [3] : vector<4x2x16x16xf32> to vector<4x2x16xf32>
    %68 = vector.shape_cast %67 : vector<4x2x16xf32> to vector<4x2x16x1xf32>
    %69 = vector.broadcast %68 : vector<4x2x16x1xf32> to vector<4x2x16x16xf32>
    %70 = arith.subf %66, %69 : vector<4x2x16x16xf32>
    %71 = math.exp %70 : vector<4x2x16x16xf32>
    %cst_28 = arith.constant dense<0.000000e+00> : vector<4x2x16xf32>
    %72 = vector.multi_reduction <add>, %71, %cst_28 [3] : vector<4x2x16x16xf32> to vector<4x2x16xf32>
    %73 = vector.shape_cast %72 : vector<4x2x16xf32> to vector<4x2x16x1xf32>
    %74 = tpu.reciprocal %73 {approx = true} : vector<4x2x16x1xf32> -> vector<4x2x16x1xf32>
    %75 = vector.broadcast %74 : vector<4x2x16x1xf32> to vector<4x2x16x16xf32>
    %76 = arith.mulf %71, %75 : vector<4x2x16x16xf32>
    %77 = vector.shape_cast %76 : vector<4x2x16x16xf32> to vector<8x16x16xf32>
    %78 = arith.truncf %77 : vector<8x16x16xf32> to vector<8x16x16xbf16>
    "tpu.trace_start"() <{level = 10 : i32, message = "nqk,nkd->nqd"}> : () -> ()
    %cst_29 = arith.constant dense<0.000000e+00> : vector<8x16x8xf32>
    %79 = tpu.matmul %78, %59, %cst_29 {dimension_numbers = #tpu.dot_dimension_numbers<[2], [1], [1], [2], [0, 0, 0, 1, 1, 2], [0], [0]>} : vector<8x16x16xbf16>, vector<8x16x8xbf16>, vector<8x16x8xf32> -> vector<8x16x8xf32>
    "tpu.trace_stop"() : () -> ()
    %80 = vector.shape_cast %79 : vector<8x16x8xf32> to vector<4x32x8xf32>
    %81 = vector.extract_strided_slice %80 {offsets = [0, 0, 0], sizes = [1, 32, 8], strides = [1, 1, 1]} : vector<4x32x8xf32> to vector<1x32x8xf32>
    %82 = vector.shape_cast %81 : vector<1x32x8xf32> to vector<32x8xf32>
    %83 = vector.extract_strided_slice %80 {offsets = [1, 0, 0], sizes = [1, 32, 8], strides = [1, 1, 1]} : vector<4x32x8xf32> to vector<1x32x8xf32>
    %84 = vector.shape_cast %83 : vector<1x32x8xf32> to vector<32x8xf32>
    %85 = vector.extract_strided_slice %80 {offsets = [2, 0, 0], sizes = [1, 32, 8], strides = [1, 1, 1]} : vector<4x32x8xf32> to vector<1x32x8xf32>
    %86 = vector.shape_cast %85 : vector<1x32x8xf32> to vector<32x8xf32>
    %87 = vector.extract_strided_slice %80 {offsets = [3, 0, 0], sizes = [1, 32, 8], strides = [1, 1, 1]} : vector<4x32x8xf32> to vector<1x32x8xf32>
    %88 = vector.shape_cast %87 : vector<1x32x8xf32> to vector<32x8xf32>
    %89 = tpu.concatenate %82, %84, %86, %88 in 1 : vector<32x8xf32>, vector<32x8xf32>, vector<32x8xf32>, vector<32x8xf32> -> vector<32x32xf32>
    %90 = arith.truncf %89 : vector<32x32xf32> to vector<32x32xbf16>
    %cst_30 = arith.constant dense<0.000000e+00> : vector<32x32xf32>
    %91 = tpu.matmul %90, %18, %cst_30 {dimension_numbers = #tpu.dot_dimension_numbers<[1], [0], [0], [1], [0, 0, 1, 1], [], []>} : vector<32x32xbf16>, vector<32x32xbf16>, vector<32x32xf32> -> vector<32x32xf32>
    %92 = vector.broadcast %19 : vector<1x32xf32> to vector<32x32xf32>
    %93 = arith.addf %91, %92 : vector<32x32xf32>
    %94 = arith.addf %93, %1 : vector<32x32xf32>
    %cst_31 = arith.constant dense<0.000000e+00> : vector<32xf32>
    %95 = vector.multi_reduction <add>, %94, %cst_31 [1] : vector<32x32xf32> to vector<32xf32>
    %96 = vector.shape_cast %95 : vector<32xf32> to vector<32x1xf32>
    %cst_32 = arith.constant 3.200000e+01 : f32
    %97 = vector.broadcast %cst_32 : f32 to vector<32x1xf32>
    %98 = arith.divf %96, %97 : vector<32x1xf32>
    %99 = vector.broadcast %98 : vector<32x1xf32> to vector<32x32xf32>
    %100 = arith.subf %94, %99 : vector<32x32xf32>
    %101 = arith.mulf %100, %100 : vector<32x32xf32>
    %cst_33 = arith.constant dense<0.000000e+00> : vector<32xf32>
    %102 = vector.multi_reduction <add>, %101, %cst_33 [1] : vector<32x32xf32> to vector<32xf32>
    %103 = vector.shape_cast %102 : vector<32xf32> to vector<32x1xf32>
    %cst_34 = arith.constant 0.0322580636 : f32
    %104 = vector.broadcast %cst_34 : f32 to vector<32x1xf32>
    %105 = arith.mulf %103, %104 : vector<32x1xf32>
    %106 = math.sqrt %105 : vector<32x1xf32>
    %cst_35 = arith.constant 9.99999997E-7 : f32
    %107 = vector.broadcast %cst_35 : f32 to vector<32x1xf32>
    %108 = arith.addf %106, %107 : vector<32x1xf32>
    %109 = tpu.reciprocal %108 {approx = true} : vector<32x1xf32> -> vector<32x1xf32>
    %110 = vector.broadcast %14 : vector<1x32xf32> to vector<32x32xf32>
    %111 = arith.mulf %110, %100 : vector<32x32xf32>
    %112 = vector.broadcast %109 : vector<32x1xf32> to vector<32x32xf32>
    %113 = arith.mulf %111, %112 : vector<32x32xf32>
    %114 = vector.broadcast %15 : vector<1x32xf32> to vector<32x32xf32>
    %115 = arith.addf %113, %114 : vector<32x32xf32>
    %c0_36 = arith.constant 0 : index
    %c0_37 = arith.constant 0 : index
    %116 = vector.load %arg13[%c0_36, %c0_37] : memref<1x32xf32, #tpu.memory_space<vmem>>, vector<1x32xf32>
    %c0_38 = arith.constant 0 : index
    %c0_39 = arith.constant 0 : index
    %117 = vector.load %arg14[%c0_38, %c0_39] : memref<1x32xf32, #tpu.memory_space<vmem>>, vector<1x32xf32>
    %c0_40 = arith.constant 0 : index
    %c0_41 = arith.constant 0 : index
    %118 = vector.load %arg15[%c0_40, %c0_41] : memref<32x64xbf16, #tpu.memory_space<vmem>>, vector<32x64xbf16>
    %c0_42 = arith.constant 0 : index
    %c0_43 = arith.constant 0 : index
    %119 = vector.load %arg16[%c0_42, %c0_43] : memref<1x64xf32, #tpu.memory_space<vmem>>, vector<1x64xf32>
    %c0_44 = arith.constant 0 : index
    %c0_45 = arith.constant 0 : index
    %120 = vector.load %arg17[%c0_44, %c0_45] : memref<64x32xbf16, #tpu.memory_space<vmem>>, vector<64x32xbf16>
    %c0_46 = arith.constant 0 : index
    %c0_47 = arith.constant 0 : index
    %121 = vector.load %arg18[%c0_46, %c0_47] : memref<1x32xf32, #tpu.memory_space<vmem>>, vector<1x32xf32>
    %cst_48 = arith.constant dense<0.000000e+00> : vector<32xf32>
    %122 = vector.multi_reduction <add>, %115, %cst_48 [1] : vector<32x32xf32> to vector<32xf32>
    %123 = vector.shape_cast %122 : vector<32xf32> to vector<32x1xf32>
    %cst_49 = arith.constant 3.200000e+01 : f32
    %124 = vector.broadcast %cst_49 : f32 to vector<32x1xf32>
    %125 = arith.divf %123, %124 : vector<32x1xf32>
    %126 = vector.broadcast %125 : vector<32x1xf32> to vector<32x32xf32>
    %127 = arith.subf %115, %126 : vector<32x32xf32>
    %128 = arith.mulf %127, %127 : vector<32x32xf32>
    %cst_50 = arith.constant dense<0.000000e+00> : vector<32xf32>
    %129 = vector.multi_reduction <add>, %128, %cst_50 [1] : vector<32x32xf32> to vector<32xf32>
    %130 = vector.shape_cast %129 : vector<32xf32> to vector<32x1xf32>
    %cst_51 = arith.constant 0.0322580636 : f32
    %131 = vector.broadcast %cst_51 : f32 to vector<32x1xf32>
    %132 = arith.mulf %130, %131 : vector<32x1xf32>
    %133 = math.sqrt %132 : vector<32x1xf32>
    %cst_52 = arith.constant 9.99999997E-7 : f32
    %134 = vector.broadcast %cst_52 : f32 to vector<32x1xf32>
    %135 = arith.addf %133, %134 : vector<32x1xf32>
    %136 = tpu.reciprocal %135 {approx = true} : vector<32x1xf32> -> vector<32x1xf32>
    %137 = vector.broadcast %116 : vector<1x32xf32> to vector<32x32xf32>
    %138 = arith.mulf %137, %127 : vector<32x32xf32>
    %139 = vector.broadcast %136 : vector<32x1xf32> to vector<32x32xf32>
    %140 = arith.mulf %138, %139 : vector<32x32xf32>
    %141 = vector.broadcast %117 : vector<1x32xf32> to vector<32x32xf32>
    %142 = arith.addf %140, %141 : vector<32x32xf32>
    %143 = arith.truncf %142 : vector<32x32xf32> to vector<32x32xbf16>
    %cst_53 = arith.constant dense<0.000000e+00> : vector<32x64xf32>
    %144 = tpu.matmul %143, %118, %cst_53 {dimension_numbers = #tpu.dot_dimension_numbers<[1], [0], [0], [1], [0, 0, 1, 1], [], []>} : vector<32x32xbf16>, vector<32x64xbf16>, vector<32x64xf32> -> vector<32x64xf32>
    %145 = vector.broadcast %119 : vector<1x64xf32> to vector<32x64xf32>
    %146 = arith.addf %144, %145 : vector<32x64xf32>
    %cst_54 = arith.constant 0.000000e+00 : f32
    %147 = vector.broadcast %cst_54 : f32 to vector<32x64xf32>
    %148 = arith.maximumf %146, %147 : vector<32x64xf32>
    %149 = arith.truncf %148 : vector<32x64xf32> to vector<32x64xbf16>
    %cst_55 = arith.constant dense<0.000000e+00> : vector<32x32xf32>
    %150 = tpu.matmul %149, %120, %cst_55 {dimension_numbers = #tpu.dot_dimension_numbers<[1], [0], [0], [1], [0, 0, 1, 1], [], []>} : vector<32x64xbf16>, vector<64x32xbf16>, vector<32x32xf32> -> vector<32x32xf32>
    %151 = vector.broadcast %121 : vector<1x32xf32> to vector<32x32xf32>
    %152 = arith.addf %150, %151 : vector<32x32xf32>
    %153 = arith.addf %152, %115 : vector<32x32xf32>
    %c0_56 = arith.constant 0 : index
    %c0_57 = arith.constant 0 : index
    %154 = vector.load %arg7[%c0_56, %c0_57] : memref<32x96xbf16, #tpu.memory_space<vmem>>, vector<32x96xbf16>
    %c0_58 = arith.constant 0 : index
    %c0_59 = arith.constant 0 : index
    %155 = vector.load %arg8[%c0_58, %c0_59] : memref<1x96xf32, #tpu.memory_space<vmem>>, vector<1x96xf32>
    %c0_60 = arith.constant 0 : index
    %c0_61 = arith.constant 0 : index
    %156 = vector.load %arg9[%c0_60, %c0_61] : memref<32x32xbf16, #tpu.memory_space<vmem>>, vector<32x32xbf16>
    %c0_62 = arith.constant 0 : index
    %c0_63 = arith.constant 0 : index
    %157 = vector.load %arg10[%c0_62, %c0_63] : memref<1x32xf32, #tpu.memory_space<vmem>>, vector<1x32xf32>
    %158 = arith.truncf %153 : vector<32x32xf32> to vector<32x32xbf16>
    %cst_64 = arith.constant dense<0.000000e+00> : vector<32x96xf32>
    %159 = tpu.matmul %158, %154, %cst_64 {dimension_numbers = #tpu.dot_dimension_numbers<[1], [0], [0], [1], [0, 0, 1, 1], [], []>} : vector<32x32xbf16>, vector<32x96xbf16>, vector<32x96xf32> -> vector<32x96xf32>
    %160 = vector.broadcast %155 : vector<1x96xf32> to vector<32x96xf32>
    %161 = arith.addf %159, %160 : vector<32x96xf32>
    %162 = vector.extract_strided_slice %161 {offsets = [0, 0], sizes = [32, 32], strides = [1, 1]} : vector<32x96xf32> to vector<32x32xf32>
    %163 = vector.extract_strided_slice %162 {offsets = [0, 0], sizes = [32, 8], strides = [1, 1]} : vector<32x32xf32> to vector<32x8xf32>
    %164 = vector.shape_cast %163 : vector<32x8xf32> to vector<1x2x16x8xf32>
    %165 = vector.extract_strided_slice %162 {offsets = [0, 8], sizes = [32, 8], strides = [1, 1]} : vector<32x32xf32> to vector<32x8xf32>
    %166 = vector.shape_cast %165 : vector<32x8xf32> to vector<1x2x16x8xf32>
    %167 = vector.extract_strided_slice %162 {offsets = [0, 16], sizes = [32, 8], strides = [1, 1]} : vector<32x32xf32> to vector<32x8xf32>
    %168 = vector.shape_cast %167 : vector<32x8xf32> to vector<1x2x16x8xf32>
    %169 = vector.extract_strided_slice %162 {offsets = [0, 24], sizes = [32, 8], strides = [1, 1]} : vector<32x32xf32> to vector<32x8xf32>
    %170 = vector.shape_cast %169 : vector<32x8xf32> to vector<1x2x16x8xf32>
    %171 = tpu.concatenate %164, %166, %168, %170 in 0 : vector<1x2x16x8xf32>, vector<1x2x16x8xf32>, vector<1x2x16x8xf32>, vector<1x2x16x8xf32> -> vector<4x2x16x8xf32>
    %172 = vector.shape_cast %171 : vector<4x2x16x8xf32> to vector<8x16x8xf32>
    %173 = arith.truncf %172 : vector<8x16x8xf32> to vector<8x16x8xbf16>
    %174 = vector.extract_strided_slice %161 {offsets = [0, 32], sizes = [32, 32], strides = [1, 1]} : vector<32x96xf32> to vector<32x32xf32>
    %175 = vector.extract_strided_slice %174 {offsets = [0, 0], sizes = [32, 8], strides = [1, 1]} : vector<32x32xf32> to vector<32x8xf32>
    %176 = vector.shape_cast %175 : vector<32x8xf32> to vector<1x2x16x8xf32>
    %177 = vector.extract_strided_slice %174 {offsets = [0, 8], sizes = [32, 8], strides = [1, 1]} : vector<32x32xf32> to vector<32x8xf32>
    %178 = vector.shape_cast %177 : vector<32x8xf32> to vector<1x2x16x8xf32>
    %179 = vector.extract_strided_slice %174 {offsets = [0, 16], sizes = [32, 8], strides = [1, 1]} : vector<32x32xf32> to vector<32x8xf32>
    %180 = vector.shape_cast %179 : vector<32x8xf32> to vector<1x2x16x8xf32>
    %181 = vector.extract_strided_slice %174 {offsets = [0, 24], sizes = [32, 8], strides = [1, 1]} : vector<32x32xf32> to vector<32x8xf32>
    %182 = vector.shape_cast %181 : vector<32x8xf32> to vector<1x2x16x8xf32>
    %183 = tpu.concatenate %176, %178, %180, %182 in 0 : vector<1x2x16x8xf32>, vector<1x2x16x8xf32>, vector<1x2x16x8xf32>, vector<1x2x16x8xf32> -> vector<4x2x16x8xf32>
    %184 = vector.shape_cast %183 : vector<4x2x16x8xf32> to vector<8x16x8xf32>
    %185 = arith.truncf %184 : vector<8x16x8xf32> to vector<8x16x8xbf16>
    %186 = vector.extract_strided_slice %161 {offsets = [0, 64], sizes = [32, 32], strides = [1, 1]} : vector<32x96xf32> to vector<32x32xf32>
    %187 = vector.extract_strided_slice %186 {offsets = [0, 0], sizes = [32, 8], strides = [1, 1]} : vector<32x32xf32> to vector<32x8xf32>
    %188 = vector.shape_cast %187 : vector<32x8xf32> to vector<1x2x16x8xf32>
    %189 = vector.extract_strided_slice %186 {offsets = [0, 8], sizes = [32, 8], strides = [1, 1]} : vector<32x32xf32> to vector<32x8xf32>
    %190 = vector.shape_cast %189 : vector<32x8xf32> to vector<1x2x16x8xf32>
    %191 = vector.extract_strided_slice %186 {offsets = [0, 16], sizes = [32, 8], strides = [1, 1]} : vector<32x32xf32> to vector<32x8xf32>
    %192 = vector.shape_cast %191 : vector<32x8xf32> to vector<1x2x16x8xf32>
    %193 = vector.extract_strided_slice %186 {offsets = [0, 24], sizes = [32, 8], strides = [1, 1]} : vector<32x32xf32> to vector<32x8xf32>
    %194 = vector.shape_cast %193 : vector<32x8xf32> to vector<1x2x16x8xf32>
    %195 = tpu.concatenate %188, %190, %192, %194 in 0 : vector<1x2x16x8xf32>, vector<1x2x16x8xf32>, vector<1x2x16x8xf32>, vector<1x2x16x8xf32> -> vector<4x2x16x8xf32>
    %196 = vector.shape_cast %195 : vector<4x2x16x8xf32> to vector<8x16x8xf32>
    %197 = arith.truncf %196 : vector<8x16x8xf32> to vector<8x16x8xbf16>
    "tpu.trace_start"() <{level = 10 : i32, message = "nqd,nkd->nqk"}> : () -> ()
    %cst_65 = arith.constant dense<0.000000e+00> : vector<8x16x16xf32>
    %198 = tpu.matmul %173, %185, %cst_65 {dimension_numbers = #tpu.dot_dimension_numbers<[2], [2], [1], [1], [0, 0, 0, 1, 1, 1], [0], [0]>} : vector<8x16x8xbf16>, vector<8x16x8xbf16>, vector<8x16x16xf32> -> vector<8x16x16xf32>
    "tpu.trace_stop"() : () -> ()
    %cst_66 = arith.constant 0.353553385 : f32
    %199 = vector.broadcast %cst_66 : f32 to vector<8x16x16xf32>
    %200 = arith.mulf %198, %199 : vector<8x16x16xf32>
    %201 = vector.shape_cast %200 : vector<8x16x16xf32> to vector<4x2x16x16xf32>
    %202 = vector.shape_cast %13 : vector<2x16x16xf32> to vector<1x2x16x16xf32>
    %203 = vector.broadcast %202 : vector<1x2x16x16xf32> to vector<4x2x16x16xf32>
    %204 = arith.addf %201, %203 : vector<4x2x16x16xf32>
    %cst_67 = arith.constant dense<0xFF800000> : vector<4x2x16xf32>
    %205 = vector.multi_reduction <maximumf>, %204, %cst_67 [3] : vector<4x2x16x16xf32> to vector<4x2x16xf32>
    %206 = vector.shape_cast %205 : vector<4x2x16xf32> to vector<4x2x16x1xf32>
    %207 = vector.broadcast %206 : vector<4x2x16x1xf32> to vector<4x2x16x16xf32>
    %208 = arith.subf %204, %207 : vector<4x2x16x16xf32>
    %209 = math.exp %208 : vector<4x2x16x16xf32>
    %cst_68 = arith.constant dense<0.000000e+00> : vector<4x2x16xf32>
    %210 = vector.multi_reduction <add>, %209, %cst_68 [3] : vector<4x2x16x16xf32> to vector<4x2x16xf32>
    %211 = vector.shape_cast %210 : vector<4x2x16xf32> to vector<4x2x16x1xf32>
    %212 = tpu.reciprocal %211 {approx = true} : vector<4x2x16x1xf32> -> vector<4x2x16x1xf32>
    %213 = vector.broadcast %212 : vector<4x2x16x1xf32> to vector<4x2x16x16xf32>
    %214 = arith.mulf %209, %213 : vector<4x2x16x16xf32>
    %215 = vector.shape_cast %214 : vector<4x2x16x16xf32> to vector<8x16x16xf32>
    %216 = arith.truncf %215 : vector<8x16x16xf32> to vector<8x16x16xbf16>
    "tpu.trace_start"() <{level = 10 : i32, message = "nqk,nkd->nqd"}> : () -> ()
    %cst_69 = arith.constant dense<0.000000e+00> : vector<8x16x8xf32>
    %217 = tpu.matmul %216, %197, %cst_69 {dimension_numbers = #tpu.dot_dimension_numbers<[2], [1], [1], [2], [0, 0, 0, 1, 1, 2], [0], [0]>} : vector<8x16x16xbf16>, vector<8x16x8xbf16>, vector<8x16x8xf32> -> vector<8x16x8xf32>
    "tpu.trace_stop"() : () -> ()
    %218 = vector.shape_cast %217 : vector<8x16x8xf32> to vector<4x32x8xf32>
    %219 = vector.extract_strided_slice %218 {offsets = [0, 0, 0], sizes = [1, 32, 8], strides = [1, 1, 1]} : vector<4x32x8xf32> to vector<1x32x8xf32>
    %220 = vector.shape_cast %219 : vector<1x32x8xf32> to vector<32x8xf32>
    %221 = vector.extract_strided_slice %218 {offsets = [1, 0, 0], sizes = [1, 32, 8], strides = [1, 1, 1]} : vector<4x32x8xf32> to vector<1x32x8xf32>
    %222 = vector.shape_cast %221 : vector<1x32x8xf32> to vector<32x8xf32>
    %223 = vector.extract_strided_slice %218 {offsets = [2, 0, 0], sizes = [1, 32, 8], strides = [1, 1, 1]} : vector<4x32x8xf32> to vector<1x32x8xf32>
    %224 = vector.shape_cast %223 : vector<1x32x8xf32> to vector<32x8xf32>
    %225 = vector.extract_strided_slice %218 {offsets = [3, 0, 0], sizes = [1, 32, 8], strides = [1, 1, 1]} : vector<4x32x8xf32> to vector<1x32x8xf32>
    %226 = vector.shape_cast %225 : vector<1x32x8xf32> to vector<32x8xf32>
    %227 = tpu.concatenate %220, %222, %224, %226 in 1 : vector<32x8xf32>, vector<32x8xf32>, vector<32x8xf32>, vector<32x8xf32> -> vector<32x32xf32>
    %228 = arith.truncf %227 : vector<32x32xf32> to vector<32x32xbf16>
    %cst_70 = arith.constant dense<0.000000e+00> : vector<32x32xf32>
    %229 = tpu.matmul %228, %156, %cst_70 {dimension_numbers = #tpu.dot_dimension_numbers<[1], [0], [0], [1], [0, 0, 1, 1], [], []>} : vector<32x32xbf16>, vector<32x32xbf16>, vector<32x32xf32> -> vector<32x32xf32>
    %230 = vector.broadcast %157 : vector<1x32xf32> to vector<32x32xf32>
    %231 = arith.addf %229, %230 : vector<32x32xf32>
    %c0_71 = arith.constant 0 : index
    %c0_72 = arith.constant 0 : index
    %c0_73 = arith.constant 0 : index
    %c0_74 = arith.constant 0 : index
    %232 = vector.load %arg26[%c0_71, %c0_72, %c0_73, %c0_74] : memref<4x2x16x16xf32, #tpu.memory_space<vmem>>, vector<4x2x16x16xf32>
    tpu.vector_store %arg26[%c0_71, %c0_72, %c0_73, %c0_74], %214 {strides = array<i32>} : memref<4x2x16x16xf32, #tpu.memory_space<vmem>>, vector<4x2x16x16xf32>,
    %233 = arith.addf %231, %153 : vector<32x32xf32>
    %cst_75 = arith.constant dense<0.000000e+00> : vector<32xf32>
    %234 = vector.multi_reduction <add>, %233, %cst_75 [1] : vector<32x32xf32> to vector<32xf32>
    %235 = vector.shape_cast %234 : vector<32xf32> to vector<32x1xf32>
    %cst_76 = arith.constant 3.200000e+01 : f32
    %236 = vector.broadcast %cst_76 : f32 to vector<32x1xf32>
    %237 = arith.divf %235, %236 : vector<32x1xf32>
    %238 = vector.broadcast %237 : vector<32x1xf32> to vector<32x32xf32>
    %239 = arith.subf %233, %238 : vector<32x32xf32>
    %240 = arith.mulf %239, %239 : vector<32x32xf32>
    %cst_77 = arith.constant dense<0.000000e+00> : vector<32xf32>
    %241 = vector.multi_reduction <add>, %240, %cst_77 [1] : vector<32x32xf32> to vector<32xf32>
    %242 = vector.shape_cast %241 : vector<32xf32> to vector<32x1xf32>
    %cst_78 = arith.constant 0.0322580636 : f32
    %243 = vector.broadcast %cst_78 : f32 to vector<32x1xf32>
    %244 = arith.mulf %242, %243 : vector<32x1xf32>
    %245 = math.sqrt %244 : vector<32x1xf32>
    %cst_79 = arith.constant 9.99999997E-7 : f32
    %246 = vector.broadcast %cst_79 : f32 to vector<32x1xf32>
    %247 = arith.addf %245, %246 : vector<32x1xf32>
    %248 = tpu.reciprocal %247 {approx = true} : vector<32x1xf32> -> vector<32x1xf32>
    %249 = vector.broadcast %14 : vector<1x32xf32> to vector<32x32xf32>
    %250 = arith.mulf %249, %239 : vector<32x32xf32>
    %251 = vector.broadcast %248 : vector<32x1xf32> to vector<32x32xf32>
    %252 = arith.mulf %250, %251 : vector<32x32xf32>
    %253 = vector.broadcast %15 : vector<1x32xf32> to vector<32x32xf32>
    %254 = arith.addf %252, %253 : vector<32x32xf32>
    %c0_80 = arith.constant 0 : index
    %c0_81 = arith.constant 0 : index
    %255 = vector.load %arg19[%c0_80, %c0_81] : memref<1x32xf32, #tpu.memory_space<vmem>>, vector<1x32xf32>
    %c0_82 = arith.constant 0 : index
    %c0_83 = arith.constant 0 : index
    %256 = vector.load %arg20[%c0_82, %c0_83] : memref<1x32xf32, #tpu.memory_space<vmem>>, vector<1x32xf32>
    %c0_84 = arith.constant 0 : index
    %c0_85 = arith.constant 0 : index
    %257 = vector.load %arg21[%c0_84, %c0_85] : memref<32x64xbf16, #tpu.memory_space<vmem>>, vector<32x64xbf16>
    %c0_86 = arith.constant 0 : index
    %c0_87 = arith.constant 0 : index
    %258 = vector.load %arg22[%c0_86, %c0_87] : memref<1x64xf32, #tpu.memory_space<vmem>>, vector<1x64xf32>
    %c0_88 = arith.constant 0 : index
    %c0_89 = arith.constant 0 : index
    %259 = vector.load %arg23[%c0_88, %c0_89] : memref<64x32xbf16, #tpu.memory_space<vmem>>, vector<64x32xbf16>
    %c0_90 = arith.constant 0 : index
    %c0_91 = arith.constant 0 : index
    %260 = vector.load %arg24[%c0_90, %c0_91] : memref<1x32xf32, #tpu.memory_space<vmem>>, vector<1x32xf32>
    %cst_92 = arith.constant dense<0.000000e+00> : vector<32xf32>
    %261 = vector.multi_reduction <add>, %254, %cst_92 [1] : vector<32x32xf32> to vector<32xf32>
    %262 = vector.shape_cast %261 : vector<32xf32> to vector<32x1xf32>
    %cst_93 = arith.constant 3.200000e+01 : f32
    %263 = vector.broadcast %cst_93 : f32 to vector<32x1xf32>
    %264 = arith.divf %262, %263 : vector<32x1xf32>
    %265 = vector.broadcast %264 : vector<32x1xf32> to vector<32x32xf32>
    %266 = arith.subf %254, %265 : vector<32x32xf32>
    %267 = arith.mulf %266, %266 : vector<32x32xf32>
    %cst_94 = arith.constant dense<0.000000e+00> : vector<32xf32>
    %268 = vector.multi_reduction <add>, %267, %cst_94 [1] : vector<32x32xf32> to vector<32xf32>
    %269 = vector.shape_cast %268 : vector<32xf32> to vector<32x1xf32>
    %cst_95 = arith.constant 0.0322580636 : f32
    %270 = vector.broadcast %cst_95 : f32 to vector<32x1xf32>
    %271 = arith.mulf %269, %270 : vector<32x1xf32>
    %272 = math.sqrt %271 : vector<32x1xf32>
    %cst_96 = arith.constant 9.99999997E-7 : f32
    %273 = vector.broadcast %cst_96 : f32 to vector<32x1xf32>
    %274 = arith.addf %272, %273 : vector<32x1xf32>
    %275 = tpu.reciprocal %274 {approx = true} : vector<32x1xf32> -> vector<32x1xf32>
    %276 = vector.broadcast %255 : vector<1x32xf32> to vector<32x32xf32>
    %277 = arith.mulf %276, %266 : vector<32x32xf32>
    %278 = vector.broadcast %275 : vector<32x1xf32> to vector<32x32xf32>
    %279 = arith.mulf %277, %278 : vector<32x32xf32>
    %280 = vector.broadcast %256 : vector<1x32xf32> to vector<32x32xf32>
    %281 = arith.addf %279, %280 : vector<32x32xf32>
    %282 = arith.truncf %281 : vector<32x32xf32> to vector<32x32xbf16>
    %cst_97 = arith.constant dense<0.000000e+00> : vector<32x64xf32>
    %283 = tpu.matmul %282, %257, %cst_97 {dimension_numbers = #tpu.dot_dimension_numbers<[1], [0], [0], [1], [0, 0, 1, 1], [], []>} : vector<32x32xbf16>, vector<32x64xbf16>, vector<32x64xf32> -> vector<32x64xf32>
    %284 = vector.broadcast %258 : vector<1x64xf32> to vector<32x64xf32>
    %285 = arith.addf %283, %284 : vector<32x64xf32>
    %cst_98 = arith.constant 0.000000e+00 : f32
    %286 = vector.broadcast %cst_98 : f32 to vector<32x64xf32>
    %287 = arith.maximumf %285, %286 : vector<32x64xf32>
    %288 = arith.truncf %287 : vector<32x64xf32> to vector<32x64xbf16>
    %cst_99 = arith.constant dense<0.000000e+00> : vector<32x32xf32>
    %289 = tpu.matmul %288, %259, %cst_99 {dimension_numbers = #tpu.dot_dimension_numbers<[1], [0], [0], [1], [0, 0, 1, 1], [], []>} : vector<32x64xbf16>, vector<64x32xbf16>, vector<32x32xf32> -> vector<32x32xf32>
    %290 = vector.broadcast %260 : vector<1x32xf32> to vector<32x32xf32>
    %291 = arith.addf %289, %290 : vector<32x32xf32>
    %292 = arith.addf %291, %254 : vector<32x32xf32>
    %293 = vector.shape_cast %292 : vector<32x32xf32> to vector<2x16x32xf32>
    %c0_100 = arith.constant 0 : index
    %c0_101 = arith.constant 0 : index
    %c0_102 = arith.constant 0 : index
    %294 = vector.load %arg25[%c0_100, %c0_101, %c0_102] : memref<2x16x32xf32, #tpu.memory_space<vmem>>, vector<2x16x32xf32>
    tpu.vector_store %arg25[%c0_100, %c0_101, %c0_102], %293 {strides = array<i32>} : memref<2x16x32xf32, #tpu.memory_space<vmem>>, vector<2x16x32xf32>,
    return
  }
}

</mosaic_0001>

<llo_original>
// kernel: transformer_encoder_layer.1
$region0: #{transformer_encoder_layer.1}
  #allocation0 [shape = 'u32[]', space=smem, size = 0x4, offset = 0x4, fixed_abs, tag = 'smem constant byte address 0x4 - core index']
  #allocation1 [shape = 'u32[144,128]{1,0:T(1,128)}', space=vmem, size = 0x12000, scoped, tag = 'internal scratch']
  %s0 = inlined_call_operand.vmem [shape: f32[2,16,32], index: 0, kind: input, shape index: {}]
  %s1 = inlined_call_operand.vmem [shape: s32[2,1,16], index: 1, kind: input, shape index: {}]
  %s2 = inlined_call_operand.vmem [shape: s32[2,16,16], index: 2, kind: input, shape index: {}]
  %s3 = inlined_call_operand.vmem [shape: bf16[32,96], index: 3, kind: input, shape index: {}]
  %s4 = inlined_call_operand.vmem [shape: f32[1,96], index: 4, kind: input, shape index: {}]
  %s5 = inlined_call_operand.vmem [shape: bf16[32,32], index: 5, kind: input, shape index: {}]
  %s6 = inlined_call_operand.vmem [shape: f32[1,32], index: 6, kind: input, shape index: {}]
  %s7 = inlined_call_operand.vmem [shape: bf16[32,96], index: 7, kind: input, shape index: {}]
  %s8 = inlined_call_operand.vmem [shape: f32[1,96], index: 8, kind: input, shape index: {}]
  %s9 = inlined_call_operand.vmem [shape: bf16[32,32], index: 9, kind: input, shape index: {}]
  %s10 = inlined_call_operand.vmem [shape: f32[1,32], index: 10, kind: input, shape index: {}]
  %s11 = inlined_call_operand.vmem [shape: f32[1,32], index: 11, kind: input, shape index: {}]
  %s12 = inlined_call_operand.vmem [shape: f32[1,32], index: 12, kind: input, shape index: {}]
  %s13 = inlined_call_operand.vmem [shape: f32[1,32], index: 13, kind: input, shape index: {}]
  %s14 = inlined_call_operand.vmem [shape: f32[1,32], index: 14, kind: input, shape index: {}]
  %s15 = inlined_call_operand.vmem [shape: bf16[32,64], index: 15, kind: input, shape index: {}]
  %s16 = inlined_call_operand.vmem [shape: f32[1,64], index: 16, kind: input, shape index: {}]
  %s17 = inlined_call_operand.vmem [shape: bf16[64,32], index: 17, kind: input, shape index: {}]
  %s18 = inlined_call_operand.vmem [shape: f32[1,32], index: 18, kind: input, shape index: {}]
  %s19 = inlined_call_operand.vmem [shape: f32[1,32], index: 19, kind: input, shape index: {}]
  %s20 = inlined_call_operand.vmem [shape: f32[1,32], index: 20, kind: input, shape index: {}]
  %s21 = inlined_call_operand.vmem [shape: bf16[32,64], index: 21, kind: input, shape index: {}]
  %s22 = inlined_call_operand.vmem [shape: f32[1,64], index: 22, kind: input, shape index: {}]
  %s23 = inlined_call_operand.vmem [shape: bf16[64,32], index: 23, kind: input, shape index: {}]
  %s24 = inlined_call_operand.vmem [shape: f32[1,32], index: 24, kind: input, shape index: {}]
  %s25 = inlined_call_operand.hbm [shape: f32[2,16,32], index: 25, kind: output, shape index: {0}]
  %s26 = inlined_call_operand.vmem [shape: f32[4,2,16,16], index: 26, kind: output, shape index: {1}]
  %27 = xla_tuple %s25, %s26
  %s28 = sld [smem:[#allocation0]]
  $region118: #{transformer_encoder_layer.1} parent=0
    _
  %s30 = ssub.s32 1, %s28
  %s31 = scalar_select 0, %s30, %s28
  $region1: #{transformer_encoder_layer.1} parent=0
    #allocation2 [shape = 'u8[16384]{0}', space=vmem, size = 0x4000, scoped, tag = 'output window, operand 0, single buffered']
    #allocation3 [shape = 's32[1]{0}', space=sflag, size = 0x4, scoped, tag = 'scoped memory for transformer_encoder_layer.1']
    %32 = vsyncpa [#allocation3], 0
    // Predicated region
    $region2: #{transformer_encoder_layer.1} parent=1 // pred_check
      _
    $region3: #{transformer_encoder_layer.1} parent=1 // pred_check_branch
      %34 = sbr.rel (0) target = $region5
    $region4: #{transformer_encoder_layer.1} parent=1 // pred_region
      _
    $region5: #{transformer_encoder_layer.1} parent=1 // pred_fallthru
      _
    // Predicated region
    $region6: #{transformer_encoder_layer.1} parent=1 // pred_check
      _
    $region7: #{transformer_encoder_layer.1} parent=1 // pred_check_branch
      %36 = sbr.rel (0) target = $region9
    $region8: #{transformer_encoder_layer.1} parent=1 // pred_region
      _
    $region9: #{transformer_encoder_layer.1} parent=1 // pred_fallthru
      _
    // Predicated region
    $region10: #{transformer_encoder_layer.1} parent=1 // pred_check
      _
    $region11: #{transformer_encoder_layer.1} parent=1 // pred_check_branch
      %38 = sbr.rel (0) target = $region13
    $region12: #{transformer_encoder_layer.1} parent=1 // pred_region
      _
    $region13: #{transformer_encoder_layer.1} parent=1 // pred_fallthru
      _
    // Predicated region
    $region14: #{transformer_encoder_layer.1} parent=1 // pred_check
      _
    $region15: #{transformer_encoder_layer.1} parent=1 // pred_check_branch
      %40 = sbr.rel (0) target = $region17
    $region16: #{transformer_encoder_layer.1} parent=1 // pred_region
      _
    $region17: #{transformer_encoder_layer.1} parent=1 // pred_fallthru
      _
    // Predicated region
    $region18: #{transformer_encoder_layer.1} parent=1 // pred_check
      _
    $region19: #{transformer_encoder_layer.1} parent=1 // pred_check_branch
      %42 = sbr.rel (0) target = $region21
    $region20: #{transformer_encoder_layer.1} parent=1 // pred_region
      _
    $region21: #{transformer_encoder_layer.1} parent=1 // pred_fallthru
      _
    // Predicated region
    $region22: #{transformer_encoder_layer.1} parent=1 // pred_check
      _
    $region23: #{transformer_encoder_layer.1} parent=1 // pred_check_branch
      %44 = sbr.rel (0) target = $region25
    $region24: #{transformer_encoder_layer.1} parent=1 // pred_region
      _
    $region25: #{transformer_encoder_layer.1} parent=1 // pred_fallthru
      _
    // Predicated region
    $region26: #{transformer_encoder_layer.1} parent=1 // pred_check
      _
    $region27: #{transformer_encoder_layer.1} parent=1 // pred_check_branch
      %46 = sbr.rel (0) target = $region29
    $region28: #{transformer_encoder_layer.1} parent=1 // pred_region
      _
    $region29: #{transformer_encoder_layer.1} parent=1 // pred_fallthru
      _
    // Predicated region
    $region30: #{transformer_encoder_layer.1} parent=1 // pred_check
      _
    $region31: #{transformer_encoder_layer.1} parent=1 // pred_check_branch
      %48 = sbr.rel (0) target = $region33
    $region32: #{transformer_encoder_layer.1} parent=1 // pred_region
      _
    $region33: #{transformer_encoder_layer.1} parent=1 // pred_fallthru
      _
    // Predicated region
    $region34: #{transformer_encoder_layer.1} parent=1 // pred_check
      _
    $region35: #{transformer_encoder_layer.1} parent=1 // pred_check_branch
      %50 = sbr.rel (0) target = $region37
    $region36: #{transformer_encoder_layer.1} parent=1 // pred_region
      _
    $region37: #{transformer_encoder_layer.1} parent=1 // pred_fallthru
      _
    // Predicated region
    $region38: #{transformer_encoder_layer.1} parent=1 // pred_check
      _
    $region39: #{transformer_encoder_layer.1} parent=1 // pred_check_branch
      %52 = sbr.rel (0) target = $region41
    $region40: #{transformer_encoder_layer.1} parent=1 // pred_region
      _
    $region41: #{transformer_encoder_layer.1} parent=1 // pred_fallthru
      _
    // Predicated region
    $region42: #{transformer_encoder_layer.1} parent=1 // pred_check
      _
    $region43: #{transformer_encoder_layer.1} parent=1 // pred_check_branch
      %54 = sbr.rel (0) target = $region45
    $region44: #{transformer_encoder_layer.1} parent=1 // pred_region
      _
    $region45: #{transformer_encoder_layer.1} parent=1 // pred_fallthru
      _
    // Predicated region
    $region46: #{transformer_encoder_layer.1} parent=1 // pred_check
      _
    $region47: #{transformer_encoder_layer.1} parent=1 // pred_check_branch
      %56 = sbr.rel (0) target = $region49
    $region48: #{transformer_encoder_layer.1} parent=1 // pred_region
      _
    $region49: #{transformer_encoder_layer.1} parent=1 // pred_fallthru
      _
    // Predicated region
    $region50: #{transformer_encoder_layer.1} parent=1 // pred_check
      _
    $region51: #{transformer_encoder_layer.1} parent=1 // pred_check_branch
      %58 = sbr.rel (0) target = $region53
    $region52: #{transformer_encoder_layer.1} parent=1 // pred_region
      _
    $region53: #{transformer_encoder_layer.1} parent=1 // pred_fallthru
      _
    // Predicated region
    $region54: #{transformer_encoder_layer.1} parent=1 // pred_check
      _
    $region55: #{transformer_encoder_layer.1} parent=1 // pred_check_branch
      %60 = sbr.rel (0) target = $region57
    $region56: #{transformer_encoder_layer.1} parent=1 // pred_region
      _
    $region57: #{transformer_encoder_layer.1} parent=1 // pred_fallthru
      _
    // Predicated region
    $region58: #{transformer_encoder_layer.1} parent=1 // pred_check
      _
    $region59: #{transformer_encoder_layer.1} parent=1 // pred_check_branch
      %62 = sbr.rel (0) target = $region61
    $region60: #{transformer_encoder_layer.1} parent=1 // pred_region
      _
    $region61: #{transformer_encoder_layer.1} parent=1 // pred_fallthru
      _
    // Predicated region
    $region62: #{transformer_encoder_layer.1} parent=1 // pred_check
      _
    $region63: #{transformer_encoder_layer.1} parent=1 // pred_check_branch
      %64 = sbr.rel (0) target = $region65
    $region64: #{transformer_encoder_layer.1} parent=1 // pred_region
      _
    $region65: #{transformer_encoder_layer.1} parent=1 // pred_fallthru
      _
    // Predicated region
    $region66: #{transformer_encoder_layer.1} parent=1 // pred_check
      _
    $region67: #{transformer_encoder_layer.1} parent=1 // pred_check_branch
      %66 = sbr.rel (0) target = $region69
    $region68: #{transformer_encoder_layer.1} parent=1 // pred_region
      _
    $region69: #{transformer_encoder_layer.1} parent=1 // pred_fallthru
      _
    // Predicated region
    $region70: #{transformer_encoder_layer.1} parent=1 // pred_check
      _
    $region71: #{transformer_encoder_layer.1} parent=1 // pred_check_branch
      %68 = sbr.rel (0) target = $region73
    $region72: #{transformer_encoder_layer.1} parent=1 // pred_region
      _
    $region73: #{transformer_encoder_layer.1} parent=1 // pred_fallthru
      _
    // Predicated region
    $region74: #{transformer_encoder_layer.1} parent=1 // pred_check
      _
    $region75: #{transformer_encoder_layer.1} parent=1 // pred_check_branch
      %70 = sbr.rel (0) target = $region77
    $region76: #{transformer_encoder_layer.1} parent=1 // pred_region
      _
    $region77: #{transformer_encoder_layer.1} parent=1 // pred_fallthru
      _
    // Predicated region
    $region78: #{transformer_encoder_layer.1} parent=1 // pred_check
      _
    $region79: #{transformer_encoder_layer.1} parent=1 // pred_check_branch
      %72 = sbr.rel (0) target = $region81
    $region80: #{transformer_encoder_layer.1} parent=1 // pred_region
      _
    $region81: #{transformer_encoder_layer.1} parent=1 // pred_fallthru
      _
    // Predicated region
    $region82: #{transformer_encoder_layer.1} parent=1 // pred_check
      _
    $region83: #{transformer_encoder_layer.1} parent=1 // pred_check_branch
      %74 = sbr.rel (0) target = $region85
    $region84: #{transformer_encoder_layer.1} parent=1 // pred_region
      _
    $region85: #{transformer_encoder_layer.1} parent=1 // pred_fallthru
      _
    // Predicated region
    $region86: #{transformer_encoder_layer.1} parent=1 // pred_check
      _
    $region87: #{transformer_encoder_layer.1} parent=1 // pred_check_branch
      %76 = sbr.rel (0) target = $region89
    $region88: #{transformer_encoder_layer.1} parent=1 // pred_region
      _
    $region89: #{transformer_encoder_layer.1} parent=1 // pred_fallthru
      _
    // Predicated region
    $region90: #{transformer_encoder_layer.1} parent=1 // pred_check
      _
    $region91: #{transformer_encoder_layer.1} parent=1 // pred_check_branch
      %78 = sbr.rel (0) target = $region93
    $region92: #{transformer_encoder_layer.1} parent=1 // pred_region
      _
    $region93: #{transformer_encoder_layer.1} parent=1 // pred_fallthru
      _
    // Predicated region
    $region94: #{transformer_encoder_layer.1} parent=1 // pred_check
      _
    $region95: #{transformer_encoder_layer.1} parent=1 // pred_check_branch
      %80 = sbr.rel (0) target = $region97
    $region96: #{transformer_encoder_layer.1} parent=1 // pred_region
      _
    $region97: #{transformer_encoder_layer.1} parent=1 // pred_fallthru
      _
    // Predicated region
    $region98: #{transformer_encoder_layer.1} parent=1 // pred_check
      _
    $region99: #{transformer_encoder_layer.1} parent=1 // pred_check_branch
      %82 = sbr.rel (0) target = $region101
    $region100: #{transformer_encoder_layer.1} parent=1 // pred_region
      _
    $region101: #{transformer_encoder_layer.1} parent=1 // pred_fallthru
      _
    %v84 = vld [vmem:[%s0] sm:$0xff]
    %v85 = vld [vmem:[%s0 + $0x8] sm:$0xff]
    %v86 = vld [vmem:[%s0 + $0x10] sm:$0xff]
    %v87 = vld [vmem:[%s0 + $0x18] sm:$0xff]
    %v88 = vld [vmem:[%s1] sm:$0x1]
    %v89 = vld [vmem:[%s1 + $0x1] sm:$0x1]
    %vm90 = vcmp.ne.s32.totalorder %v88, 0
    %vm91 = vcmp.ne.s32.totalorder %v89, 0
    %v92 = vsel %vm90, -1e+18, 0.0
    %v93 = vsel %vm91, -1e+18, 0.0
    %v94 = vld [vmem:[%s2] sm:$0xff]
    %v95 = vld [vmem:[%s2 + $0x8] sm:$0xff]
    %v96 = vld [vmem:[%s2 + $0x10] sm:$0xff]
    %v97 = vld [vmem:[%s2 + $0x18] sm:$0xff]
    %vm98 = vcmp.ne.s32.totalorder %v94, 0
    %vm99 = vcmp.ne.s32.totalorder %v95, 0
    %vm100 = vcmp.ne.s32.totalorder %v96, 0
    %vm101 = vcmp.ne.s32.totalorder %v97, 0
    %v102 = vsel %vm98, -1e+18, 0.0
    %v103 = vsel %vm99, -1e+18, 0.0
    %v104 = vsel %vm100, -1e+18, 0.0
    %v105 = vsel %vm101, -1e+18, 0.0
    %v106 = vld [vmem:[%s11] sm:$0x1]
    %v107 = vld [vmem:[%s12] sm:$0x1]
    %v108 = vld [vmem:[%s3] sm:$0xf]
    %v109 = vld [vmem:[%s3 + $0x4] sm:$0xf]
    %v110 = vld [vmem:[%s3 + $0x8] sm:$0xf]
    %v111 = vld [vmem:[%s3 + $0xc] sm:$0xf]
    %v112 = vld [vmem:[%s4] sm:$0x1]
    %v113 = vld [vmem:[%s5] sm:$0xf]
    %v114 = vld [vmem:[%s5 + $0x4] sm:$0xf]
    %v115 = vld [vmem:[%s5 + $0x8] sm:$0xf]
    %v116 = vld [vmem:[%s5 + $0xc] sm:$0xf]
    %v117 = vld [vmem:[%s6] sm:$0x1]
    %v118 = vpack.c.bf16 %v85, %v84
    %v119 = vpack.c.bf16 %v87, %v86
    %v121 = vlaneseq
    %v122 = vshrl.u32 %v121, 7
    %v123 = vsub.s32 0, %v122
    %v124 = vrot.slane %v112, %v123
    %v130 = vunpack.c.l.b16 %v108
    %v131 = vunpack.c.l.b16 %v109
    %v132 = vunpack.c.l.b16 %v110
    %v133 = vunpack.c.l.b16 %v111
    %v134 = vpack.c.b16 %v131, %v130
    %v135 = vpack.c.b16 %v133, %v132
    %vm138 = vcmask 261120
    %v140 = vsel %vm138, %v118, 0
    %v143 = vsel %vm138, %v119, 0
    %145 = vmatprep.subr.bf16.mxu0 0
    %146 = vmatpush1.bf16.msra.mxu0 %v134
    %147 = vmatprep.subr.bf16.mxu0 0
    %148 = vmatpush1.bf16.msra.mxu0 %v135
    %149 = vmatprep.subr.bf16.mxu0 0
    %150 = vmatpush1.bf16.msra.mxu0 0
    %151 = vmatprep.subr.bf16.mxu0 0
    %152 = vmatpush1.bf16.msra.mxu0 0
    %153 = vmatprep.subr.bf16.mxu0 0
    %154 = vmatpush1.bf16.msra.mxu0 0
    %155 = vmatprep.subr.bf16.mxu0 0
    %156 = vmatpush1.bf16.msra.mxu0 0
    %157 = vmatprep.subr.bf16.mxu0 0
    %158 = vmatpush1.bf16.msra.mxu0 0
    %159 = vmatprep.subr.bf16.mxu0 0
    %160 = vmatpush1.bf16.msra.mxu0 0
    %161 = vmatprep.subr.bf16.mxu0 0
    %162 = vmatpush1.bf16.msra.mxu0 0
    %163 = vmatprep.subr.bf16.mxu0 0
    %164 = vmatpush1.bf16.msra.mxu0 0
    %165 = vmatprep.subr.bf16.mxu0 0
    %166 = vmatpush1.bf16.msra.mxu0 0
    %167 = vmatprep.subr.bf16.mxu0 0
    %168 = vmatpush1.bf16.msra.mxu0 0
    %169 = vmatprep.subr.bf16.mxu0 0
    %170 = vmatpush1.bf16.msra.mxu0 0
    %171 = vmatprep.subr.bf16.mxu0 0
    %172 = vmatpush1.bf16.msra.mxu0 0
    %173 = vmatprep.subr.bf16.mxu0 0
    %174 = vmatpush1.bf16.msra.mxu0 0
    %175 = vmatprep.subr.bf16.mxu0 0
    %176 = vmatpush1.bf16.msra.mxu0 0
    %177 = vmatprep.mubr.bf16.mxu0 0
    %178 = vmatmul.mubr.bf16.gmra.mrb[0].mxu0 %v140
    %v179 = vpop.f32.mrb[0].mxu0
    %v180 = vadd.f32 %v124, %v179
    %v181 = vpop.f32.mrb[0].mxu0
    %v182 = vpop.f32.mrb[0].mxu0
    %v183 = vadd.f32 %v124, %v182
    %v184 = vpop.f32.mrb[0].mxu0
    %185 = vmatprep.mubr.bf16.mxu0 0
    %186 = vmatmul.mubr.bf16.gmra.mrb[0].mxu0 %v143
    %v187 = vpop.f32.mrb[0].mxu0
    %v188 = vadd.f32 %v124, %v187
    %v189 = vpop.f32.mrb[0].mxu0
    %v190 = vpop.f32.mrb[0].mxu0
    %v191 = vadd.f32 %v124, %v190
    %v192 = vpop.f32.mrb[0].mxu0
    %193 = vdwg.mxu0
    %198 = vrot.lane.b32.xlu0 %v180, 120
    %v199 = vpop.permute.xlu0 %198
    %200 = vrot.lane.b32.xlu0 %v183, 120
    %v201 = vpop.permute.xlu0 %200
    %202 = vrot.lane.b32.xlu0 %v188, 120
    %v203 = vpop.permute.xlu0 %202
    %204 = vrot.lane.b32.xlu0 %v191, 120
    %v205 = vpop.permute.xlu0 %204
    %210 = vrot.lane.b32.xlu0 %v180, 112
    %v211 = vpop.permute.xlu0 %210
    %212 = vrot.lane.b32.xlu0 %v183, 112
    %v213 = vpop.permute.xlu0 %212
    %214 = vrot.lane.b32.xlu0 %v188, 112
    %v215 = vpop.permute.xlu0 %214
    %216 = vrot.lane.b32.xlu0 %v191, 112
    %v217 = vpop.permute.xlu0 %216
    %222 = vrot.lane.b32.xlu0 %v180, 104
    %v223 = vpop.permute.xlu0 %222
    %224 = vrot.lane.b32.xlu0 %v183, 104
    %v225 = vpop.permute.xlu0 %224
    %226 = vrot.lane.b32.xlu0 %v188, 104
    %v227 = vpop.permute.xlu0 %226
    %228 = vrot.lane.b32.xlu0 %v191, 104
    %v229 = vpop.permute.xlu0 %228
    %v234 = vpack.c.bf16 %v183, %v180
    %v235 = vpack.c.bf16 %v191, %v188
    %v236 = vpack.c.bf16 %v201, %v199
    %v237 = vpack.c.bf16 %v205, %v203
    %v238 = vpack.c.bf16 %v213, %v211
    %v239 = vpack.c.bf16 %v217, %v215
    %v240 = vpack.c.bf16 %v225, %v223
    %v241 = vpack.c.bf16 %v229, %v227
    %243 = vrot.lane.b32.xlu0 %v234, 96
    %v244 = vpop.permute.xlu0 %243
    %vm245 = vcmask 64512
    %v247 = vsel %vm245, %v234, 0
    %v250 = vsel %vm245, %v244, 0
    %252 = vmatprep.subr.bf16.mxu0 0
    %253 = vmatpush1.bf16.xpose.msra.mxu0 %v250
    %254 = vmatprep.subr.bf16.mxu0 0
    %255 = vmatpush1.bf16.xpose.msra.mxu0 0
    %256 = vmatprep.subr.bf16.mxu0 0
    %257 = vmatpush1.bf16.xpose.msra.mxu0 0
    %258 = vmatprep.subr.bf16.mxu0 0
    %259 = vmatpush1.bf16.xpose.msra.mxu0 0
    %260 = vmatprep.subr.bf16.mxu0 0
    %261 = vmatpush1.bf16.xpose.msra.mxu0 0
    %262 = vmatprep.subr.bf16.mxu0 0
    %263 = vmatpush1.bf16.xpose.msra.mxu0 0
    %264 = vmatprep.subr.bf16.mxu0 0
    %265 = vmatpush1.bf16.xpose.msra.mxu0 0
    %266 = vmatprep.subr.bf16.mxu0 0
    %267 = vmatpush1.bf16.xpose.msra.mxu0 0
    %268 = vmatprep.subr.bf16.mxu0 0
    %269 = vmatpush1.bf16.xpose.msra.mxu0 0
    %270 = vmatprep.subr.bf16.mxu0 0
    %271 = vmatpush1.bf16.xpose.msra.mxu0 0
    %272 = vmatprep.subr.bf16.mxu0 0
    %273 = vmatpush1.bf16.xpose.msra.mxu0 0
    %274 = vmatprep.subr.bf16.mxu0 0
    %275 = vmatpush1.bf16.xpose.msra.mxu0 0
    %276 = vmatprep.subr.bf16.mxu0 0
    %277 = vmatpush1.bf16.xpose.msra.mxu0 0
    %278 = vmatprep.subr.bf16.mxu0 0
    %279 = vmatpush1.bf16.xpose.msra.mxu0 0
    %280 = vmatprep.subr.bf16.mxu0 0
    %281 = vmatpush1.bf16.xpose.msra.mxu0 0
    %282 = vmatprep.subr.bf16.mxu0 0
    %283 = vmatpush1.bf16.xpose.msra.mxu0 0
    %284 = vmatprep.mubr.bf16.mxu0 0
    %285 = vmatmul.mubr.bf16.gmra.mrb[0].mxu0 %v247
    %v286 = vpop.f32.mrb[0].mxu0
    %v287 = vadd.f32 0.0, %v286
    %v288 = vpop.f32.mrb[0].mxu0
    %v289 = vpop.f32.mrb[0].mxu0
    %v290 = vadd.f32 0.0, %v289
    %v291 = vpop.f32.mrb[0].mxu0
    %292 = vdwg.mxu0
    %294 = vrot.lane.b32.xlu0 %v235, 96
    %v295 = vpop.permute.xlu0 %294
    %v297 = vsel %vm245, %v235, 0
    %v300 = vsel %vm245, %v295, 0
    %302 = vmatprep.subr.bf16.mxu0 0
    %303 = vmatpush1.bf16.xpose.msra.mxu0 %v300
    %304 = vmatprep.subr.bf16.mxu0 0
    %305 = vmatpush1.bf16.xpose.msra.mxu0 0
    %306 = vmatprep.subr.bf16.mxu0 0
    %307 = vmatpush1.bf16.xpose.msra.mxu0 0
    %308 = vmatprep.subr.bf16.mxu0 0
    %309 = vmatpush1.bf16.xpose.msra.mxu0 0
    %310 = vmatprep.subr.bf16.mxu0 0
    %311 = vmatpush1.bf16.xpose.msra.mxu0 0
    %312 = vmatprep.subr.bf16.mxu0 0
    %313 = vmatpush1.bf16.xpose.msra.mxu0 0
    %314 = vmatprep.subr.bf16.mxu0 0
    %315 = vmatpush1.bf16.xpose.msra.mxu0 0
    %316 = vmatprep.subr.bf16.mxu0 0
    %317 = vmatpush1.bf16.xpose.msra.mxu0 0
    %318 = vmatprep.subr.bf16.mxu0 0
    %319 = vmatpush1.bf16.xpose.msra.mxu0 0
    %320 = vmatprep.subr.bf16.mxu0 0
    %321 = vmatpush1.bf16.xpose.msra.mxu0 0
    %322 = vmatprep.subr.bf16.mxu0 0
    %323 = vmatpush1.bf16.xpose.msra.mxu0 0
    %324 = vmatprep.subr.bf16.mxu0 0
    %325 = vmatpush1.bf16.xpose.msra.mxu0 0
    %326 = vmatprep.subr.bf16.mxu0 0
    %327 = vmatpush1.bf16.xpose.msra.mxu0 0
    %328 = vmatprep.subr.bf16.mxu0 0
    %329 = vmatpush1.bf16.xpose.msra.mxu0 0
    %330 = vmatprep.subr.bf16.mxu0 0
    %331 = vmatpush1.bf16.xpose.msra.mxu0 0
    %332 = vmatprep.subr.bf16.mxu0 0
    %333 = vmatpush1.bf16.xpose.msra.mxu0 0
    %334 = vmatprep.mubr.bf16.mxu0 0
    %335 = vmatmul.mubr.bf16.gmra.mrb[0].mxu0 %v297
    %v336 = vpop.f32.mrb[0].mxu0
    %v337 = vadd.f32 0.0, %v336
    %v338 = vpop.f32.mrb[0].mxu0
    %v339 = vpop.f32.mrb[0].mxu0
    %v340 = vadd.f32 0.0, %v339
    %v341 = vpop.f32.mrb[0].mxu0
    %342 = vdwg.mxu0
    %344 = vrot.lane.b32.xlu0 %v236, 96
    %v345 = vpop.permute.xlu0 %344
    %v347 = vsel %vm245, %v236, 0
    %v350 = vsel %vm245, %v345, 0
    %352 = vmatprep.subr.bf16.mxu0 0
    %353 = vmatpush1.bf16.xpose.msra.mxu0 %v350
    %354 = vmatprep.subr.bf16.mxu0 0
    %355 = vmatpush1.bf16.xpose.msra.mxu0 0
    %356 = vmatprep.subr.bf16.mxu0 0
    %357 = vmatpush1.bf16.xpose.msra.mxu0 0
    %358 = vmatprep.subr.bf16.mxu0 0
    %359 = vmatpush1.bf16.xpose.msra.mxu0 0
    %360 = vmatprep.subr.bf16.mxu0 0
    %361 = vmatpush1.bf16.xpose.msra.mxu0 0
    %362 = vmatprep.subr.bf16.mxu0 0
    %363 = vmatpush1.bf16.xpose.msra.mxu0 0
    %364 = vmatprep.subr.bf16.mxu0 0
    %365 = vmatpush1.bf16.xpose.msra.mxu0 0
    %366 = vmatprep.subr.bf16.mxu0 0
    %367 = vmatpush1.bf16.xpose.msra.mxu0 0
    %368 = vmatprep.subr.bf16.mxu0 0
    %369 = vmatpush1.bf16.xpose.msra.mxu0 0
    %370 = vmatprep.subr.bf16.mxu0 0
    %371 = vmatpush1.bf16.xpose.msra.mxu0 0
    %372 = vmatprep.subr.bf16.mxu0 0
    %373 = vmatpush1.bf16.xpose.msra.mxu0 0
    %374 = vmatprep.subr.bf16.mxu0 0
    %375 = vmatpush1.bf16.xpose.msra.mxu0 0
    %376 = vmatprep.subr.bf16.mxu0 0
    %377 = vmatpush1.bf16.xpose.msra.mxu0 0
    %378 = vmatprep.subr.bf16.mxu0 0
    %379 = vmatpush1.bf16.xpose.msra.mxu0 0
    %380 = vmatprep.subr.bf16.mxu0 0
    %381 = vmatpush1.bf16.xpose.msra.mxu0 0
    %382 = vmatprep.subr.bf16.mxu0 0
    %383 = vmatpush1.bf16.xpose.msra.mxu0 0
    %384 = vmatprep.mubr.bf16.mxu0 0
    %385 = vmatmul.mubr.bf16.gmra.mrb[0].mxu0 %v347
    %v386 = vpop.f32.mrb[0].mxu0
    %v387 = vadd.f32 0.0, %v386
    %v388 = vpop.f32.mrb[0].mxu0
    %v389 = vpop.f32.mrb[0].mxu0
    %v390 = vadd.f32 0.0, %v389
    %v391 = vpop.f32.mrb[0].mxu0
    %392 = vdwg.mxu0
    %394 = vrot.lane.b32.xlu0 %v237, 96
    %v395 = vpop.permute.xlu0 %394
    %v397 = vsel %vm245, %v237, 0
    %v400 = vsel %vm245, %v395, 0
    %402 = vmatprep.subr.bf16.mxu0 0
    %403 = vmatpush1.bf16.xpose.msra.mxu0 %v400
    %404 = vmatprep.subr.bf16.mxu0 0
    %405 = vmatpush1.bf16.xpose.msra.mxu0 0
    %406 = vmatprep.subr.bf16.mxu0 0
    %407 = vmatpush1.bf16.xpose.msra.mxu0 0
    %408 = vmatprep.subr.bf16.mxu0 0
    %409 = vmatpush1.bf16.xpose.msra.mxu0 0
    %410 = vmatprep.subr.bf16.mxu0 0
    %411 = vmatpush1.bf16.xpose.msra.mxu0 0
    %412 = vmatprep.subr.bf16.mxu0 0
    %413 = vmatpush1.bf16.xpose.msra.mxu0 0
    %414 = vmatprep.subr.bf16.mxu0 0
    %415 = vmatpush1.bf16.xpose.msra.mxu0 0
    %416 = vmatprep.subr.bf16.mxu0 0
    %417 = vmatpush1.bf16.xpose.msra.mxu0 0
    %418 = vmatprep.subr.bf16.mxu0 0
    %419 = vmatpush1.bf16.xpose.msra.mxu0 0
    %420 = vmatprep.subr.bf16.mxu0 0
    %421 = vmatpush1.bf16.xpose.msra.mxu0 0
    %422 = vmatprep.subr.bf16.mxu0 0
    %423 = vmatpush1.bf16.xpose.msra.mxu0 0
    %424 = vmatprep.subr.bf16.mxu0 0
    %425 = vmatpush1.bf16.xpose.msra.mxu0 0
    %426 = vmatprep.subr.bf16.mxu0 0
    %427 = vmatpush1.bf16.xpose.msra.mxu0 0
    %428 = vmatprep.subr.bf16.mxu0 0
    %429 = vmatpush1.bf16.xpose.msra.mxu0 0
    %430 = vmatprep.subr.bf16.mxu0 0
    %431 = vmatpush1.bf16.xpose.msra.mxu0 0
    %432 = vmatprep.subr.bf16.mxu0 0
    %433 = vmatpush1.bf16.xpose.msra.mxu0 0
    %434 = vmatprep.mubr.bf16.mxu0 0
    %435 = vmatmul.mubr.bf16.gmra.mrb[0].mxu0 %v397
    %v436 = vpop.f32.mrb[0].mxu0
    %v437 = vadd.f32 0.0, %v436
    %v438 = vpop.f32.mrb[0].mxu0
    %v439 = vpop.f32.mrb[0].mxu0
    %v440 = vadd.f32 0.0, %v439
    %v441 = vpop.f32.mrb[0].mxu0
    %442 = vdwg.mxu0
    %444 = vrot.lane.b32.xlu0 %v238, 96
    %v445 = vpop.permute.xlu0 %444
    %v447 = vsel %vm245, %v238, 0
    %v450 = vsel %vm245, %v445, 0
    %452 = vmatprep.subr.bf16.mxu0 0
    %453 = vmatpush1.bf16.xpose.msra.mxu0 %v450
    %454 = vmatprep.subr.bf16.mxu0 0
    %455 = vmatpush1.bf16.xpose.msra.mxu0 0
    %456 = vmatprep.subr.bf16.mxu0 0
    %457 = vmatpush1.bf16.xpose.msra.mxu0 0
    %458 = vmatprep.subr.bf16.mxu0 0
    %459 = vmatpush1.bf16.xpose.msra.mxu0 0
    %460 = vmatprep.subr.bf16.mxu0 0
    %461 = vmatpush1.bf16.xpose.msra.mxu0 0
    %462 = vmatprep.subr.bf16.mxu0 0
    %463 = vmatpush1.bf16.xpose.msra.mxu0 0
    %464 = vmatprep.subr.bf16.mxu0 0
    %465 = vmatpush1.bf16.xpose.msra.mxu0 0
    %466 = vmatprep.subr.bf16.mxu0 0
    %467 = vmatpush1.bf16.xpose.msra.mxu0 0
    %468 = vmatprep.subr.bf16.mxu0 0
    %469 = vmatpush1.bf16.xpose.msra.mxu0 0
    %470 = vmatprep.subr.bf16.mxu0 0
    %471 = vmatpush1.bf16.xpose.msra.mxu0 0
    %472 = vmatprep.subr.bf16.mxu0 0
    %473 = vmatpush1.bf16.xpose.msra.mxu0 0
    %474 = vmatprep.subr.bf16.mxu0 0
    %475 = vmatpush1.bf16.xpose.msra.mxu0 0
    %476 = vmatprep.subr.bf16.mxu0 0
    %477 = vmatpush1.bf16.xpose.msra.mxu0 0
    %478 = vmatprep.subr.bf16.mxu0 0
    %479 = vmatpush1.bf16.xpose.msra.mxu0 0
    %480 = vmatprep.subr.bf16.mxu0 0
    %481 = vmatpush1.bf16.xpose.msra.mxu0 0
    %482 = vmatprep.subr.bf16.mxu0 0
    %483 = vmatpush1.bf16.xpose.msra.mxu0 0
    %484 = vmatprep.mubr.bf16.mxu0 0
    %485 = vmatmul.mubr.bf16.gmra.mrb[0].mxu0 %v447
    %v486 = vpop.f32.mrb[0].mxu0
    %v487 = vadd.f32 0.0, %v486
    %v488 = vpop.f32.mrb[0].mxu0
    %v489 = vpop.f32.mrb[0].mxu0
    %v490 = vadd.f32 0.0, %v489
    %v491 = vpop.f32.mrb[0].mxu0
    %492 = vdwg.mxu0
    %494 = vrot.lane.b32.xlu0 %v239, 96
    %v495 = vpop.permute.xlu0 %494
    %v497 = vsel %vm245, %v239, 0
    %v500 = vsel %vm245, %v495, 0
    %502 = vmatprep.subr.bf16.mxu0 0
    %503 = vmatpush1.bf16.xpose.msra.mxu0 %v500
    %504 = vmatprep.subr.bf16.mxu0 0
    %505 = vmatpush1.bf16.xpose.msra.mxu0 0
    %506 = vmatprep.subr.bf16.mxu0 0
    %507 = vmatpush1.bf16.xpose.msra.mxu0 0
    %508 = vmatprep.subr.bf16.mxu0 0
    %509 = vmatpush1.bf16.xpose.msra.mxu0 0
    %510 = vmatprep.subr.bf16.mxu0 0
    %511 = vmatpush1.bf16.xpose.msra.mxu0 0
    %512 = vmatprep.subr.bf16.mxu0 0
    %513 = vmatpush1.bf16.xpose.msra.mxu0 0
    %514 = vmatprep.subr.bf16.mxu0 0
    %515 = vmatpush1.bf16.xpose.msra.mxu0 0
    %516 = vmatprep.subr.bf16.mxu0 0
    %517 = vmatpush1.bf16.xpose.msra.mxu0 0
    %518 = vmatprep.subr.bf16.mxu0 0
    %519 = vmatpush1.bf16.xpose.msra.mxu0 0
    %520 = vmatprep.subr.bf16.mxu0 0
    %521 = vmatpush1.bf16.xpose.msra.mxu0 0
    %522 = vmatprep.subr.bf16.mxu0 0
    %523 = vmatpush1.bf16.xpose.msra.mxu0 0
    %524 = vmatprep.subr.bf16.mxu0 0
    %525 = vmatpush1.bf16.xpose.msra.mxu0 0
    %526 = vmatprep.subr.bf16.mxu0 0
    %527 = vmatpush1.bf16.xpose.msra.mxu0 0
    %528 = vmatprep.subr.bf16.mxu0 0
    %529 = vmatpush1.bf16.xpose.msra.mxu0 0
    %530 = vmatprep.subr.bf16.mxu0 0
    %531 = vmatpush1.bf16.xpose.msra.mxu0 0
    %532 = vmatprep.subr.bf16.mxu0 0
    %533 = vmatpush1.bf16.xpose.msra.mxu0 0
    %534 = vmatprep.mubr.bf16.mxu0 0
    %535 = vmatmul.mubr.bf16.gmra.mrb[0].mxu0 %v497
    %v536 = vpop.f32.mrb[0].mxu0
    %v537 = vadd.f32 0.0, %v536
    %v538 = vpop.f32.mrb[0].mxu0
    %v539 = vpop.f32.mrb[0].mxu0
    %v540 = vadd.f32 0.0, %v539
    %v541 = vpop.f32.mrb[0].mxu0
    %542 = vdwg.mxu0
    %544 = vrot.lane.b32.xlu0 %v240, 96
    %v545 = vpop.permute.xlu0 %544
    %v547 = vsel %vm245, %v240, 0
    %v550 = vsel %vm245, %v545, 0
    %552 = vmatprep.subr.bf16.mxu0 0
    %553 = vmatpush1.bf16.xpose.msra.mxu0 %v550
    %554 = vmatprep.subr.bf16.mxu0 0
    %555 = vmatpush1.bf16.xpose.msra.mxu0 0
    %556 = vmatprep.subr.bf16.mxu0 0
    %557 = vmatpush1.bf16.xpose.msra.mxu0 0
    %558 = vmatprep.subr.bf16.mxu0 0
    %559 = vmatpush1.bf16.xpose.msra.mxu0 0
    %560 = vmatprep.subr.bf16.mxu0 0
    %561 = vmatpush1.bf16.xpose.msra.mxu0 0
    %562 = vmatprep.subr.bf16.mxu0 0
    %563 = vmatpush1.bf16.xpose.msra.mxu0 0
    %564 = vmatprep.subr.bf16.mxu0 0
    %565 = vmatpush1.bf16.xpose.msra.mxu0 0
    %566 = vmatprep.subr.bf16.mxu0 0
    %567 = vmatpush1.bf16.xpose.msra.mxu0 0
    %568 = vmatprep.subr.bf16.mxu0 0
    %569 = vmatpush1.bf16.xpose.msra.mxu0 0
    %570 = vmatprep.subr.bf16.mxu0 0
    %571 = vmatpush1.bf16.xpose.msra.mxu0 0
    %572 = vmatprep.subr.bf16.mxu0 0
    %573 = vmatpush1.bf16.xpose.msra.mxu0 0
    %574 = vmatprep.subr.bf16.mxu0 0
    %575 = vmatpush1.bf16.xpose.msra.mxu0 0
    %576 = vmatprep.subr.bf16.mxu0 0
    %577 = vmatpush1.bf16.xpose.msra.mxu0 0
    %578 = vmatprep.subr.bf16.mxu0 0
    %579 = vmatpush1.bf16.xpose.msra.mxu0 0
    %580 = vmatprep.subr.bf16.mxu0 0
    %581 = vmatpush1.bf16.xpose.msra.mxu0 0
    %582 = vmatprep.subr.bf16.mxu0 0
    %583 = vmatpush1.bf16.xpose.msra.mxu0 0
    %584 = vmatprep.mubr.bf16.mxu0 0
    %585 = vmatmul.mubr.bf16.gmra.mrb[0].mxu0 %v547
    %v586 = vpop.f32.mrb[0].mxu0
    %v587 = vadd.f32 0.0, %v586
    %v588 = vpop.f32.mrb[0].mxu0
    %v589 = vpop.f32.mrb[0].mxu0
    %v590 = vadd.f32 0.0, %v589
    %v591 = vpop.f32.mrb[0].mxu0
    %592 = vdwg.mxu0
    %594 = vrot.lane.b32.xlu0 %v241, 96
    %v595 = vpop.permute.xlu0 %594
    %v597 = vsel %vm245, %v241, 0
    %v600 = vsel %vm245, %v595, 0
    %602 = vmatprep.subr.bf16.mxu0 0
    %603 = vmatpush1.bf16.xpose.msra.mxu0 %v600
    %604 = vmatprep.subr.bf16.mxu0 0
    %605 = vmatpush1.bf16.xpose.msra.mxu0 0
    %606 = vmatprep.subr.bf16.mxu0 0
    %607 = vmatpush1.bf16.xpose.msra.mxu0 0
    %608 = vmatprep.subr.bf16.mxu0 0
    %609 = vmatpush1.bf16.xpose.msra.mxu0 0
    %610 = vmatprep.subr.bf16.mxu0 0
    %611 = vmatpush1.bf16.xpose.msra.mxu0 0
    %612 = vmatprep.subr.bf16.mxu0 0
    %613 = vmatpush1.bf16.xpose.msra.mxu0 0
    %614 = vmatprep.subr.bf16.mxu0 0
    %615 = vmatpush1.bf16.xpose.msra.mxu0 0
    %616 = vmatprep.subr.bf16.mxu0 0
    %617 = vmatpush1.bf16.xpose.msra.mxu0 0
    %618 = vmatprep.subr.bf16.mxu0 0
    %619 = vmatpush1.bf16.xpose.msra.mxu0 0
    %620 = vmatprep.subr.bf16.mxu0 0
    %621 = vmatpush1.bf16.xpose.msra.mxu0 0
    %622 = vmatprep.subr.bf16.mxu0 0
    %623 = vmatpush1.bf16.xpose.msra.mxu0 0
    %624 = vmatprep.subr.bf16.mxu0 0
    %625 = vmatpush1.bf16.xpose.msra.mxu0 0
    %626 = vmatprep.subr.bf16.mxu0 0
    %627 = vmatpush1.bf16.xpose.msra.mxu0 0
    %628 = vmatprep.subr.bf16.mxu0 0
    %629 = vmatpush1.bf16.xpose.msra.mxu0 0
    %630 = vmatprep.subr.bf16.mxu0 0
    %631 = vmatpush1.bf16.xpose.msra.mxu0 0
    %632 = vmatprep.subr.bf16.mxu0 0
    %633 = vmatpush1.bf16.xpose.msra.mxu0 0
    %634 = vmatprep.mubr.bf16.mxu0 0
    %635 = vmatmul.mubr.bf16.gmra.mrb[0].mxu0 %v597
    %v636 = vpop.f32.mrb[0].mxu0
    %v637 = vadd.f32 0.0, %v636
    %v638 = vpop.f32.mrb[0].mxu0
    %v639 = vpop.f32.mrb[0].mxu0
    %v640 = vadd.f32 0.0, %v639
    %v641 = vpop.f32.mrb[0].mxu0
    %642 = vdwg.mxu0
    %v643 = vmul.f32 %v287, 0.35355338
    %v644 = vmul.f32 %v290, 0.35355338
    %v645 = vmul.f32 %v337, 0.35355338
    %v646 = vmul.f32 %v340, 0.35355338
    %v647 = vmul.f32 %v387, 0.35355338
    %v648 = vmul.f32 %v390, 0.35355338
    %v649 = vmul.f32 %v437, 0.35355338
    %v650 = vmul.f32 %v440, 0.35355338
    %v651 = vmul.f32 %v487, 0.35355338
    %v652 = vmul.f32 %v490, 0.35355338
    %v653 = vmul.f32 %v537, 0.35355338
    %v654 = vmul.f32 %v540, 0.35355338
    %v655 = vmul.f32 %v587, 0.35355338
    %v656 = vmul.f32 %v590, 0.35355338
    %v657 = vmul.f32 %v637, 0.35355338
    %v658 = vmul.f32 %v640, 0.35355338
    %v661 = vlaneseq
    %v662 = vshrl.u32 %v661, 7
    %v663 = vsub.s32 0, %v662
    %v664 = vrot.slane %v92, %v663
    %v665 = vlaneseq
    %v666 = vshrl.u32 %v665, 7
    %v667 = vsub.s32 0, %v666
    %v668 = vrot.slane %v93, %v667
    %v671 = vadd.f32 %v643, %v664
    %v672 = vadd.f32 %v644, %v664
    %v673 = vadd.f32 %v645, %v668
    %v674 = vadd.f32 %v646, %v668
    %v675 = vadd.f32 %v647, %v664
    %v676 = vadd.f32 %v648, %v664
    %v677 = vadd.f32 %v649, %v668
    %v678 = vadd.f32 %v650, %v668
    %v679 = vadd.f32 %v651, %v664
    %v680 = vadd.f32 %v652, %v664
    %v681 = vadd.f32 %v653, %v668
    %v682 = vadd.f32 %v654, %v668
    %v683 = vadd.f32 %v655, %v664
    %v684 = vadd.f32 %v656, %v664
    %v685 = vadd.f32 %v657, %v668
    %v686 = vadd.f32 %v658, %v668
    %vm687 = vcmask 130048
    %v688 = vsel %vm687, %v671, -inf
    %689 = vmax.xlane.f32.xlu0 %v688
    %v690 = vpop.xlane.xlu0 %689
    %v691 = vsel %vm687, %v672, -inf
    %692 = vmax.xlane.f32.xlu0 %v691
    %v693 = vpop.xlane.xlu0 %692
    %v694 = vsel %vm687, %v673, -inf
    %695 = vmax.xlane.f32.xlu0 %v694
    %v696 = vpop.xlane.xlu0 %695
    %v697 = vsel %vm687, %v674, -inf
    %698 = vmax.xlane.f32.xlu0 %v697
    %v699 = vpop.xlane.xlu0 %698
    %v700 = vsel %vm687, %v675, -inf
    %701 = vmax.xlane.f32.xlu0 %v700
    %v702 = vpop.xlane.xlu0 %701
    %v703 = vsel %vm687, %v676, -inf
    %704 = vmax.xlane.f32.xlu0 %v703
    %v705 = vpop.xlane.xlu0 %704
    %v706 = vsel %vm687, %v677, -inf
    %707 = vmax.xlane.f32.xlu0 %v706
    %v708 = vpop.xlane.xlu0 %707
    %v709 = vsel %vm687, %v678, -inf
    %710 = vmax.xlane.f32.xlu0 %v709
    %v711 = vpop.xlane.xlu0 %710
    %v712 = vsel %vm687, %v679, -inf
    %713 = vmax.xlane.f32.xlu0 %v712
    %v714 = vpop.xlane.xlu0 %713
    %v715 = vsel %vm687, %v680, -inf
    %716 = vmax.xlane.f32.xlu0 %v715
    %v717 = vpop.xlane.xlu0 %716
    %v718 = vsel %vm687, %v681, -inf
    %719 = vmax.xlane.f32.xlu0 %v718
    %v720 = vpop.xlane.xlu0 %719
    %v721 = vsel %vm687, %v682, -inf
    %722 = vmax.xlane.f32.xlu0 %v721
    %v723 = vpop.xlane.xlu0 %722
    %v724 = vsel %vm687, %v683, -inf
    %725 = vmax.xlane.f32.xlu0 %v724
    %v726 = vpop.xlane.xlu0 %725
    %v727 = vsel %vm687, %v684, -inf
    %728 = vmax.xlane.f32.xlu0 %v727
    %v729 = vpop.xlane.xlu0 %728
    %v730 = vsel %vm687, %v685, -inf
    %731 = vmax.xlane.f32.xlu0 %v730
    %v732 = vpop.xlane.xlu0 %731
    %v733 = vsel %vm687, %v686, -inf
    %734 = vmax.xlane.f32.xlu0 %v733
    %v735 = vpop.xlane.xlu0 %734
    %v736 = vsub.f32 %v671, %v690
    %v737 = vsub.f32 %v672, %v693
    %v738 = vsub.f32 %v673, %v696
    %v739 = vsub.f32 %v674, %v699
    %v740 = vsub.f32 %v675, %v702
    %v741 = vsub.f32 %v676, %v705
    %v742 = vsub.f32 %v677, %v708
    %v743 = vsub.f32 %v678, %v711
    %v744 = vsub.f32 %v679, %v714
    %v745 = vsub.f32 %v680, %v717
    %v746 = vsub.f32 %v681, %v720
    %v747 = vsub.f32 %v682, %v723
    %v748 = vsub.f32 %v683, %v726
    %v749 = vsub.f32 %v684, %v729
    %v750 = vsub.f32 %v685, %v732
    %v751 = vsub.f32 %v686, %v735
    %v752 = vmul.f32 %v736, 1.442695
    %v753 = vpow.pop %v752
    %v754 = vmul.f32 %v737, 1.442695
    %v755 = vpow.pop %v754
    %v756 = vmul.f32 %v738, 1.442695
    %v757 = vpow.pop %v756
    %v758 = vmul.f32 %v739, 1.442695
    %v759 = vpow.pop %v758
    %v760 = vmul.f32 %v740, 1.442695
    %v761 = vpow.pop %v760
    %v762 = vmul.f32 %v741, 1.442695
    %v763 = vpow.pop %v762
    %v764 = vmul.f32 %v742, 1.442695
    %v765 = vpow.pop %v764
    %v766 = vmul.f32 %v743, 1.442695
    %v767 = vpow.pop %v766
    %v768 = vmul.f32 %v744, 1.442695
    %v769 = vpow.pop %v768
    %v770 = vmul.f32 %v745, 1.442695
    %v771 = vpow.pop %v770
    %v772 = vmul.f32 %v746, 1.442695
    %v773 = vpow.pop %v772
    %v774 = vmul.f32 %v747, 1.442695
    %v775 = vpow.pop %v774
    %v776 = vmul.f32 %v748, 1.442695
    %v777 = vpow.pop %v776
    %v778 = vmul.f32 %v749, 1.442695
    %v779 = vpow.pop %v778
    %v780 = vmul.f32 %v750, 1.442695
    %v781 = vpow.pop %v780
    %v782 = vmul.f32 %v751, 1.442695
    %v783 = vpow.pop %v782
    %v784 = vsel %vm687, %v753, 0.0
    %785 = vadd.xlane.f32.xlu0 %v784
    %v786 = vpop.xlane.xlu0 %785
    %v787 = vsel %vm687, %v755, 0.0
    %788 = vadd.xlane.f32.xlu0 %v787
    %v789 = vpop.xlane.xlu0 %788
    %v790 = vsel %vm687, %v757, 0.0
    %791 = vadd.xlane.f32.xlu0 %v790
    %v792 = vpop.xlane.xlu0 %791
    %v793 = vsel %vm687, %v759, 0.0
    %794 = vadd.xlane.f32.xlu0 %v793
    %v795 = vpop.xlane.xlu0 %794
    %v796 = vsel %vm687, %v761, 0.0
    %797 = vadd.xlane.f32.xlu0 %v796
    %v798 = vpop.xlane.xlu0 %797
    %v799 = vsel %vm687, %v763, 0.0
    %800 = vadd.xlane.f32.xlu0 %v799
    %v801 = vpop.xlane.xlu0 %800
    %v802 = vsel %vm687, %v765, 0.0
    %803 = vadd.xlane.f32.xlu0 %v802
    %v804 = vpop.xlane.xlu0 %803
    %v805 = vsel %vm687, %v767, 0.0
    %806 = vadd.xlane.f32.xlu0 %v805
    %v807 = vpop.xlane.xlu0 %806
    %v808 = vsel %vm687, %v769, 0.0
    %809 = vadd.xlane.f32.xlu0 %v808
    %v810 = vpop.xlane.xlu0 %809
    %v811 = vsel %vm687, %v771, 0.0
    %812 = vadd.xlane.f32.xlu0 %v811
    %v813 = vpop.xlane.xlu0 %812
    %v814 = vsel %vm687, %v773, 0.0
    %815 = vadd.xlane.f32.xlu0 %v814
    %v816 = vpop.xlane.xlu0 %815
    %v817 = vsel %vm687, %v775, 0.0
    %818 = vadd.xlane.f32.xlu0 %v817
    %v819 = vpop.xlane.xlu0 %818
    %v820 = vsel %vm687, %v777, 0.0
    %821 = vadd.xlane.f32.xlu0 %v820
    %v822 = vpop.xlane.xlu0 %821
    %v823 = vsel %vm687, %v779, 0.0
    %824 = vadd.xlane.f32.xlu0 %v823
    %v825 = vpop.xlane.xlu0 %824
    %v826 = vsel %vm687, %v781, 0.0
    %827 = vadd.xlane.f32.xlu0 %v826
    %v828 = vpop.xlane.xlu0 %827
    %v829 = vsel %vm687, %v783, 0.0
    %830 = vadd.xlane.f32.xlu0 %v829
    %v831 = vpop.xlane.xlu0 %830
    %v832 = vrcp.pop %v786
    %v833 = vrcp.pop %v789
    %v834 = vrcp.pop %v792
    %v835 = vrcp.pop %v795
    %v836 = vrcp.pop %v798
    %v837 = vrcp.pop %v801
    %v838 = vrcp.pop %v804
    %v839 = vrcp.pop %v807
    %v840 = vrcp.pop %v810
    %v841 = vrcp.pop %v813
    %v842 = vrcp.pop %v816
    %v843 = vrcp.pop %v819
    %v844 = vrcp.pop %v822
    %v845 = vrcp.pop %v825
    %v846 = vrcp.pop %v828
    %v847 = vrcp.pop %v831
    %v848 = vmul.f32 %v753, %v832
    %v849 = vmul.f32 %v755, %v833
    %v850 = vmul.f32 %v757, %v834
    %v851 = vmul.f32 %v759, %v835
    %v852 = vmul.f32 %v761, %v836
    %v853 = vmul.f32 %v763, %v837
    %v854 = vmul.f32 %v765, %v838
    %v855 = vmul.f32 %v767, %v839
    %v856 = vmul.f32 %v769, %v840
    %v857 = vmul.f32 %v771, %v841
    %v858 = vmul.f32 %v773, %v842
    %v859 = vmul.f32 %v775, %v843
    %v860 = vmul.f32 %v777, %v844
    %v861 = vmul.f32 %v779, %v845
    %v862 = vmul.f32 %v781, %v846
    %v863 = vmul.f32 %v783, %v847
    %v864 = vpack.c.bf16 %v849, %v848
    %v865 = vpack.c.bf16 %v851, %v850
    %v866 = vpack.c.bf16 %v853, %v852
    %v867 = vpack.c.bf16 %v855, %v854
    %v868 = vpack.c.bf16 %v857, %v856
    %v869 = vpack.c.bf16 %v859, %v858
    %v870 = vpack.c.bf16 %v861, %v860
    %v871 = vpack.c.bf16 %v863, %v862
    %872 = vrot.lane.b32.xlu0 %v234, 64
    %v873 = vpop.permute.xlu0 %872
    %v876 = vsel %vm687, %v864, 0
    %878 = vmatprep.subr.bf16.mxu0 0
    %879 = vmatpush1.bf16.msra.mxu0 %v873
    %880 = vmatprep.subr.bf16.mxu0 0
    %881 = vmatpush1.bf16.msra.mxu0 0
    %882 = vmatprep.subr.bf16.mxu0 0
    %883 = vmatpush1.bf16.msra.mxu0 0
    %884 = vmatprep.subr.bf16.mxu0 0
    %885 = vmatpush1.bf16.msra.mxu0 0
    %886 = vmatprep.subr.bf16.mxu0 0
    %887 = vmatpush1.bf16.msra.mxu0 0
    %888 = vmatprep.subr.bf16.mxu0 0
    %889 = vmatpush1.bf16.msra.mxu0 0
    %890 = vmatprep.subr.bf16.mxu0 0
    %891 = vmatpush1.bf16.msra.mxu0 0
    %892 = vmatprep.subr.bf16.mxu0 0
    %893 = vmatpush1.bf16.msra.mxu0 0
    %894 = vmatprep.subr.bf16.mxu0 0
    %895 = vmatpush1.bf16.msra.mxu0 0
    %896 = vmatprep.subr.bf16.mxu0 0
    %897 = vmatpush1.bf16.msra.mxu0 0
    %898 = vmatprep.subr.bf16.mxu0 0
    %899 = vmatpush1.bf16.msra.mxu0 0
    %900 = vmatprep.subr.bf16.mxu0 0
    %901 = vmatpush1.bf16.msra.mxu0 0
    %902 = vmatprep.subr.bf16.mxu0 0
    %903 = vmatpush1.bf16.msra.mxu0 0
    %904 = vmatprep.subr.bf16.mxu0 0
    %905 = vmatpush1.bf16.msra.mxu0 0
    %906 = vmatprep.subr.bf16.mxu0 0
    %907 = vmatpush1.bf16.msra.mxu0 0
    %908 = vmatprep.subr.bf16.mxu0 0
    %909 = vmatpush1.bf16.msra.mxu0 0
    %910 = vmatprep.mubr.bf16.mxu0 0
    %911 = vmatmul.mubr.bf16.gmra.mrb[0].mxu0 %v876
    %v912 = vpop.f32.mrb[0].mxu0
    %v913 = vadd.f32 0.0, %v912
    %v914 = vpop.f32.mrb[0].mxu0
    %v915 = vpop.f32.mrb[0].mxu0
    %v916 = vadd.f32 0.0, %v915
    %v917 = vpop.f32.mrb[0].mxu0
    %918 = vdwg.mxu0
    %919 = vrot.lane.b32.xlu0 %v235, 64
    %v920 = vpop.permute.xlu0 %919
    %v923 = vsel %vm687, %v865, 0
    %925 = vmatprep.subr.bf16.mxu0 0
    %926 = vmatpush1.bf16.msra.mxu0 %v920
    %927 = vmatprep.subr.bf16.mxu0 0
    %928 = vmatpush1.bf16.msra.mxu0 0
    %929 = vmatprep.subr.bf16.mxu0 0
    %930 = vmatpush1.bf16.msra.mxu0 0
    %931 = vmatprep.subr.bf16.mxu0 0
    %932 = vmatpush1.bf16.msra.mxu0 0
    %933 = vmatprep.subr.bf16.mxu0 0
    %934 = vmatpush1.bf16.msra.mxu0 0
    %935 = vmatprep.subr.bf16.mxu0 0
    %936 = vmatpush1.bf16.msra.mxu0 0
    %937 = vmatprep.subr.bf16.mxu0 0
    %938 = vmatpush1.bf16.msra.mxu0 0
    %939 = vmatprep.subr.bf16.mxu0 0
    %940 = vmatpush1.bf16.msra.mxu0 0
    %941 = vmatprep.subr.bf16.mxu0 0
    %942 = vmatpush1.bf16.msra.mxu0 0
    %943 = vmatprep.subr.bf16.mxu0 0
    %944 = vmatpush1.bf16.msra.mxu0 0
    %945 = vmatprep.subr.bf16.mxu0 0
    %946 = vmatpush1.bf16.msra.mxu0 0
    %947 = vmatprep.subr.bf16.mxu0 0
    %948 = vmatpush1.bf16.msra.mxu0 0
    %949 = vmatprep.subr.bf16.mxu0 0
    %950 = vmatpush1.bf16.msra.mxu0 0
    %951 = vmatprep.subr.bf16.mxu0 0
    %952 = vmatpush1.bf16.msra.mxu0 0
    %953 = vmatprep.subr.bf16.mxu0 0
    %954 = vmatpush1.bf16.msra.mxu0 0
    %955 = vmatprep.subr.bf16.mxu0 0
    %956 = vmatpush1.bf16.msra.mxu0 0
    %957 = vmatprep.mubr.bf16.mxu0 0
    %958 = vmatmul.mubr.bf16.gmra.mrb[0].mxu0 %v923
    %v959 = vpop.f32.mrb[0].mxu0
    %v960 = vadd.f32 0.0, %v959
    %v961 = vpop.f32.mrb[0].mxu0
    %v962 = vpop.f32.mrb[0].mxu0
    %v963 = vadd.f32 0.0, %v962
    %v964 = vpop.f32.mrb[0].mxu0
    %965 = vdwg.mxu0
    %966 = vrot.lane.b32.xlu0 %v236, 64
    %v967 = vpop.permute.xlu0 %966
    %v970 = vsel %vm687, %v866, 0
    %972 = vmatprep.subr.bf16.mxu0 0
    %973 = vmatpush1.bf16.msra.mxu0 %v967
    %974 = vmatprep.subr.bf16.mxu0 0
    %975 = vmatpush1.bf16.msra.mxu0 0
    %976 = vmatprep.subr.bf16.mxu0 0
    %977 = vmatpush1.bf16.msra.mxu0 0
    %978 = vmatprep.subr.bf16.mxu0 0
    %979 = vmatpush1.bf16.msra.mxu0 0
    %980 = vmatprep.subr.bf16.mxu0 0
    %981 = vmatpush1.bf16.msra.mxu0 0
    %982 = vmatprep.subr.bf16.mxu0 0
    %983 = vmatpush1.bf16.msra.mxu0 0
    %984 = vmatprep.subr.bf16.mxu0 0
    %985 = vmatpush1.bf16.msra.mxu0 0
    %986 = vmatprep.subr.bf16.mxu0 0
    %987 = vmatpush1.bf16.msra.mxu0 0
    %988 = vmatprep.subr.bf16.mxu0 0
    %989 = vmatpush1.bf16.msra.mxu0 0
    %990 = vmatprep.subr.bf16.mxu0 0
    %991 = vmatpush1.bf16.msra.mxu0 0
    %992 = vmatprep.subr.bf16.mxu0 0
    %993 = vmatpush1.bf16.msra.mxu0 0
    %994 = vmatprep.subr.bf16.mxu0 0
    %995 = vmatpush1.bf16.msra.mxu0 0
    %996 = vmatprep.subr.bf16.mxu0 0
    %997 = vmatpush1.bf16.msra.mxu0 0
    %998 = vmatprep.subr.bf16.mxu0 0
    %999 = vmatpush1.bf16.msra.mxu0 0
    %1000 = vmatprep.subr.bf16.mxu0 0
    %1001 = vmatpush1.bf16.msra.mxu0 0
    %1002 = vmatprep.subr.bf16.mxu0 0
    %1003 = vmatpush1.bf16.msra.mxu0 0
    %1004 = vmatprep.mubr.bf16.mxu0 0
    %1005 = vmatmul.mubr.bf16.gmra.mrb[0].mxu0 %v970
    %v1006 = vpop.f32.mrb[0].mxu0
    %v1007 = vadd.f32 0.0, %v1006
    %v1008 = vpop.f32.mrb[0].mxu0
    %v1009 = vpop.f32.mrb[0].mxu0
    %v1010 = vadd.f32 0.0, %v1009
    %v1011 = vpop.f32.mrb[0].mxu0
    %1012 = vdwg.mxu0
    %1013 = vrot.lane.b32.xlu0 %v237, 64
    %v1014 = vpop.permute.xlu0 %1013
    %v1017 = vsel %vm687, %v867, 0
    %1019 = vmatprep.subr.bf16.mxu0 0
    %1020 = vmatpush1.bf16.msra.mxu0 %v1014
    %1021 = vmatprep.subr.bf16.mxu0 0
    %1022 = vmatpush1.bf16.msra.mxu0 0
    %1023 = vmatprep.subr.bf16.mxu0 0
    %1024 = vmatpush1.bf16.msra.mxu0 0
    %1025 = vmatprep.subr.bf16.mxu0 0
    %1026 = vmatpush1.bf16.msra.mxu0 0
    %1027 = vmatprep.subr.bf16.mxu0 0
    %1028 = vmatpush1.bf16.msra.mxu0 0
    %1029 = vmatprep.subr.bf16.mxu0 0
    %1030 = vmatpush1.bf16.msra.mxu0 0
    %1031 = vmatprep.subr.bf16.mxu0 0
    %1032 = vmatpush1.bf16.msra.mxu0 0
    %1033 = vmatprep.subr.bf16.mxu0 0
    %1034 = vmatpush1.bf16.msra.mxu0 0
    %1035 = vmatprep.subr.bf16.mxu0 0
    %1036 = vmatpush1.bf16.msra.mxu0 0
    %1037 = vmatprep.subr.bf16.mxu0 0
    %1038 = vmatpush1.bf16.msra.mxu0 0
    %1039 = vmatprep.subr.bf16.mxu0 0
    %1040 = vmatpush1.bf16.msra.mxu0 0
    %1041 = vmatprep.subr.bf16.mxu0 0
    %1042 = vmatpush1.bf16.msra.mxu0 0
    %1043 = vmatprep.subr.bf16.mxu0 0
    %1044 = vmatpush1.bf16.msra.mxu0 0
    %1045 = vmatprep.subr.bf16.mxu0 0
    %1046 = vmatpush1.bf16.msra.mxu0 0
    %1047 = vmatprep.subr.bf16.mxu0 0
    %1048 = vmatpush1.bf16.msra.mxu0 0
    %1049 = vmatprep.subr.bf16.mxu0 0
    %1050 = vmatpush1.bf16.msra.mxu0 0
    %1051 = vmatprep.mubr.bf16.mxu0 0
    %1052 = vmatmul.mubr.bf16.gmra.mrb[0].mxu0 %v1017
    %v1053 = vpop.f32.mrb[0].mxu0
    %v1054 = vadd.f32 0.0, %v1053
    %v1055 = vpop.f32.mrb[0].mxu0
    %v1056 = vpop.f32.mrb[0].mxu0
    %v1057 = vadd.f32 0.0, %v1056
    %v1058 = vpop.f32.mrb[0].mxu0
    %1059 = vdwg.mxu0
    %1060 = vrot.lane.b32.xlu0 %v238, 64
    %v1061 = vpop.permute.xlu0 %1060
    %v1064 = vsel %vm687, %v868, 0
    %1066 = vmatprep.subr.bf16.mxu0 0
    %1067 = vmatpush1.bf16.msra.mxu0 %v1061
    %1068 = vmatprep.subr.bf16.mxu0 0
    %1069 = vmatpush1.bf16.msra.mxu0 0
    %1070 = vmatprep.subr.bf16.mxu0 0
    %1071 = vmatpush1.bf16.msra.mxu0 0
    %1072 = vmatprep.subr.bf16.mxu0 0
    %1073 = vmatpush1.bf16.msra.mxu0 0
    %1074 = vmatprep.subr.bf16.mxu0 0
    %1075 = vmatpush1.bf16.msra.mxu0 0
    %1076 = vmatprep.subr.bf16.mxu0 0
    %1077 = vmatpush1.bf16.msra.mxu0 0
    %1078 = vmatprep.subr.bf16.mxu0 0
    %1079 = vmatpush1.bf16.msra.mxu0 0
    %1080 = vmatprep.subr.bf16.mxu0 0
    %1081 = vmatpush1.bf16.msra.mxu0 0
    %1082 = vmatprep.subr.bf16.mxu0 0
    %1083 = vmatpush1.bf16.msra.mxu0 0
    %1084 = vmatprep.subr.bf16.mxu0 0
    %1085 = vmatpush1.bf16.msra.mxu0 0
    %1086 = vmatprep.subr.bf16.mxu0 0
    %1087 = vmatpush1.bf16.msra.mxu0 0
    %1088 = vmatprep.subr.bf16.mxu0 0
    %1089 = vmatpush1.bf16.msra.mxu0 0
    %1090 = vmatprep.subr.bf16.mxu0 0
    %1091 = vmatpush1.bf16.msra.mxu0 0
    %1092 = vmatprep.subr.bf16.mxu0 0
    %1093 = vmatpush1.bf16.msra.mxu0 0
    %1094 = vmatprep.subr.bf16.mxu0 0
    %1095 = vmatpush1.bf16.msra.mxu0 0
    %1096 = vmatprep.subr.bf16.mxu0 0
    %1097 = vmatpush1.bf16.msra.mxu0 0
    %1098 = vmatprep.mubr.bf16.mxu0 0
    %1099 = vmatmul.mubr.bf16.gmra.mrb[0].mxu0 %v1064
    %v1100 = vpop.f32.mrb[0].mxu0
    %v1101 = vadd.f32 0.0, %v1100
    %v1102 = vpop.f32.mrb[0].mxu0
    %v1103 = vpop.f32.mrb[0].mxu0
    %v1104 = vadd.f32 0.0, %v1103
    %v1105 = vpop.f32.mrb[0].mxu0
    %1106 = vdwg.mxu0
    %1107 = vrot.lane.b32.xlu0 %v239, 64
    %v1108 = vpop.permute.xlu0 %1107
    %v1111 = vsel %vm687, %v869, 0
    %1113 = vmatprep.subr.bf16.mxu0 0
    %1114 = vmatpush1.bf16.msra.mxu0 %v1108
    %1115 = vmatprep.subr.bf16.mxu0 0
    %1116 = vmatpush1.bf16.msra.mxu0 0
    %1117 = vmatprep.subr.bf16.mxu0 0
    %1118 = vmatpush1.bf16.msra.mxu0 0
    %1119 = vmatprep.subr.bf16.mxu0 0
    %1120 = vmatpush1.bf16.msra.mxu0 0
    %1121 = vmatprep.subr.bf16.mxu0 0
    %1122 = vmatpush1.bf16.msra.mxu0 0
    %1123 = vmatprep.subr.bf16.mxu0 0
    %1124 = vmatpush1.bf16.msra.mxu0 0
    %1125 = vmatprep.subr.bf16.mxu0 0
    %1126 = vmatpush1.bf16.msra.mxu0 0
    %1127 = vmatprep.subr.bf16.mxu0 0
    %1128 = vmatpush1.bf16.msra.mxu0 0
    %1129 = vmatprep.subr.bf16.mxu0 0
    %1130 = vmatpush1.bf16.msra.mxu0 0
    %1131 = vmatprep.subr.bf16.mxu0 0
    %1132 = vmatpush1.bf16.msra.mxu0 0
    %1133 = vmatprep.subr.bf16.mxu0 0
    %1134 = vmatpush1.bf16.msra.mxu0 0
    %1135 = vmatprep.subr.bf16.mxu0 0
    %1136 = vmatpush1.bf16.msra.mxu0 0
    %1137 = vmatprep.subr.bf16.mxu0 0
    %1138 = vmatpush1.bf16.msra.mxu0 0
    %1139 = vmatprep.subr.bf16.mxu0 0
    %1140 = vmatpush1.bf16.msra.mxu0 0
    %1141 = vmatprep.subr.bf16.mxu0 0
    %1142 = vmatpush1.bf16.msra.mxu0 0
    %1143 = vmatprep.subr.bf16.mxu0 0
    %1144 = vmatpush1.bf16.msra.mxu0 0
    %1145 = vmatprep.mubr.bf16.mxu0 0
    %1146 = vmatmul.mubr.bf16.gmra.mrb[0].mxu0 %v1111
    %v1147 = vpop.f32.mrb[0].mxu0
    %v1148 = vadd.f32 0.0, %v1147
    %v1149 = vpop.f32.mrb[0].mxu0
    %v1150 = vpop.f32.mrb[0].mxu0
    %v1151 = vadd.f32 0.0, %v1150
    %v1152 = vpop.f32.mrb[0].mxu0
    %1153 = vdwg.mxu0
    %1154 = vrot.lane.b32.xlu0 %v240, 64
    %v1155 = vpop.permute.xlu0 %1154
    %v1158 = vsel %vm687, %v870, 0
    %1160 = vmatprep.subr.bf16.mxu0 0
    %1161 = vmatpush1.bf16.msra.mxu0 %v1155
    %1162 = vmatprep.subr.bf16.mxu0 0
    %1163 = vmatpush1.bf16.msra.mxu0 0
    %1164 = vmatprep.subr.bf16.mxu0 0
    %1165 = vmatpush1.bf16.msra.mxu0 0
    %1166 = vmatprep.subr.bf16.mxu0 0
    %1167 = vmatpush1.bf16.msra.mxu0 0
    %1168 = vmatprep.subr.bf16.mxu0 0
    %1169 = vmatpush1.bf16.msra.mxu0 0
    %1170 = vmatprep.subr.bf16.mxu0 0
    %1171 = vmatpush1.bf16.msra.mxu0 0
    %1172 = vmatprep.subr.bf16.mxu0 0
    %1173 = vmatpush1.bf16.msra.mxu0 0
    %1174 = vmatprep.subr.bf16.mxu0 0
    %1175 = vmatpush1.bf16.msra.mxu0 0
    %1176 = vmatprep.subr.bf16.mxu0 0
    %1177 = vmatpush1.bf16.msra.mxu0 0
    %1178 = vmatprep.subr.bf16.mxu0 0
    %1179 = vmatpush1.bf16.msra.mxu0 0
    %1180 = vmatprep.subr.bf16.mxu0 0
    %1181 = vmatpush1.bf16.msra.mxu0 0
    %1182 = vmatprep.subr.bf16.mxu0 0
    %1183 = vmatpush1.bf16.msra.mxu0 0
    %1184 = vmatprep.subr.bf16.mxu0 0
    %1185 = vmatpush1.bf16.msra.mxu0 0
    %1186 = vmatprep.subr.bf16.mxu0 0
    %1187 = vmatpush1.bf16.msra.mxu0 0
    %1188 = vmatprep.subr.bf16.mxu0 0
    %1189 = vmatpush1.bf16.msra.mxu0 0
    %1190 = vmatprep.subr.bf16.mxu0 0
    %1191 = vmatpush1.bf16.msra.mxu0 0
    %1192 = vmatprep.mubr.bf16.mxu0 0
    %1193 = vmatmul.mubr.bf16.gmra.mrb[0].mxu0 %v1158
    %v1194 = vpop.f32.mrb[0].mxu0
    %v1195 = vadd.f32 0.0, %v1194
    %v1196 = vpop.f32.mrb[0].mxu0
    %v1197 = vpop.f32.mrb[0].mxu0
    %v1198 = vadd.f32 0.0, %v1197
    %v1199 = vpop.f32.mrb[0].mxu0
    %1200 = vdwg.mxu0
    %1201 = vrot.lane.b32.xlu0 %v241, 64
    %v1202 = vpop.permute.xlu0 %1201
    %v1205 = vsel %vm687, %v871, 0
    %1207 = vmatprep.subr.bf16.mxu0 0
    %1208 = vmatpush1.bf16.msra.mxu0 %v1202
    %1209 = vmatprep.subr.bf16.mxu0 0
    %1210 = vmatpush1.bf16.msra.mxu0 0
    %1211 = vmatprep.subr.bf16.mxu0 0
    %1212 = vmatpush1.bf16.msra.mxu0 0
    %1213 = vmatprep.subr.bf16.mxu0 0
    %1214 = vmatpush1.bf16.msra.mxu0 0
    %1215 = vmatprep.subr.bf16.mxu0 0
    %1216 = vmatpush1.bf16.msra.mxu0 0
    %1217 = vmatprep.subr.bf16.mxu0 0
    %1218 = vmatpush1.bf16.msra.mxu0 0
    %1219 = vmatprep.subr.bf16.mxu0 0
    %1220 = vmatpush1.bf16.msra.mxu0 0
    %1221 = vmatprep.subr.bf16.mxu0 0
    %1222 = vmatpush1.bf16.msra.mxu0 0
    %1223 = vmatprep.subr.bf16.mxu0 0
    %1224 = vmatpush1.bf16.msra.mxu0 0
    %1225 = vmatprep.subr.bf16.mxu0 0
    %1226 = vmatpush1.bf16.msra.mxu0 0
    %1227 = vmatprep.subr.bf16.mxu0 0
    %1228 = vmatpush1.bf16.msra.mxu0 0
    %1229 = vmatprep.subr.bf16.mxu0 0
    %1230 = vmatpush1.bf16.msra.mxu0 0
    %1231 = vmatprep.subr.bf16.mxu0 0
    %1232 = vmatpush1.bf16.msra.mxu0 0
    %1233 = vmatprep.subr.bf16.mxu0 0
    %1234 = vmatpush1.bf16.msra.mxu0 0
    %1235 = vmatprep.subr.bf16.mxu0 0
    %1236 = vmatpush1.bf16.msra.mxu0 0
    %1237 = vmatprep.subr.bf16.mxu0 0
    %1238 = vmatpush1.bf16.msra.mxu0 0
    %1239 = vmatprep.mubr.bf16.mxu0 0
    %1240 = vmatmul.mubr.bf16.gmra.mrb[0].mxu0 %v1205
    %v1241 = vpop.f32.mrb[0].mxu0
    %v1242 = vadd.f32 0.0, %v1241
    %v1243 = vpop.f32.mrb[0].mxu0
    %v1244 = vpop.f32.mrb[0].mxu0
    %v1245 = vadd.f32 0.0, %v1244
    %v1246 = vpop.f32.mrb[0].mxu0
    %1247 = vdwg.mxu0
    %1252 = vrot.lane.b32.xlu0 %v1007, 8
    %v1253 = vpop.permute.xlu0 %1252
    %1254 = vrot.lane.b32.xlu0 %v1010, 8
    %v1255 = vpop.permute.xlu0 %1254
    %1256 = vrot.lane.b32.xlu0 %v1054, 8
    %v1257 = vpop.permute.xlu0 %1256
    %1258 = vrot.lane.b32.xlu0 %v1057, 8
    %v1259 = vpop.permute.xlu0 %1258
    %1268 = vrot.lane.b32.xlu0 %v1101, 16
    %v1269 = vpop.permute.xlu0 %1268
    %1270 = vrot.lane.b32.xlu0 %v1104, 16
    %v1271 = vpop.permute.xlu0 %1270
    %1272 = vrot.lane.b32.xlu0 %v1148, 16
    %v1273 = vpop.permute.xlu0 %1272
    %1274 = vrot.lane.b32.xlu0 %v1151, 16
    %v1275 = vpop.permute.xlu0 %1274
    %1284 = vrot.lane.b32.xlu0 %v1195, 24
    %v1285 = vpop.permute.xlu0 %1284
    %1286 = vrot.lane.b32.xlu0 %v1198, 24
    %v1287 = vpop.permute.xlu0 %1286
    %1288 = vrot.lane.b32.xlu0 %v1242, 24
    %v1289 = vpop.permute.xlu0 %1288
    %1290 = vrot.lane.b32.xlu0 %v1245, 24
    %v1291 = vpop.permute.xlu0 %1290
    %v1296 = vsel %vm245, %v913, %v1253
    %v1297 = vsel %vm245, %v916, %v1255
    %v1298 = vsel %vm245, %v960, %v1257
    %v1299 = vsel %vm245, %v963, %v1259
    %v1300 = vsel %vm687, %v1296, %v1269
    %v1301 = vsel %vm687, %v1297, %v1271
    %v1302 = vsel %vm687, %v1298, %v1273
    %v1303 = vsel %vm687, %v1299, %v1275
    %vm1304 = vcmask 195584
    %v1305 = vsel %vm1304, %v1300, %v1285
    %v1306 = vsel %vm1304, %v1301, %v1287
    %v1307 = vsel %vm1304, %v1302, %v1289
    %v1308 = vsel %vm1304, %v1303, %v1291
    %v1309 = vpack.c.bf16 %v1306, %v1305
    %v1310 = vpack.c.bf16 %v1308, %v1307
    %v1312 = vlaneseq
    %v1313 = vshrl.u32 %v1312, 7
    %v1314 = vsub.s32 0, %v1313
    %v1315 = vrot.slane %v117, %v1314
    %v1321 = vunpack.c.l.b16 %v113
    %v1322 = vunpack.c.l.b16 %v114
    %v1323 = vunpack.c.l.b16 %v115
    %v1324 = vunpack.c.l.b16 %v116
    %v1325 = vpack.c.b16 %v1322, %v1321
    %v1326 = vpack.c.b16 %v1324, %v1323
    %v1330 = vsel %vm138, %v1309, 0
    %v1333 = vsel %vm138, %v1310, 0
    %1335 = vmatprep.subr.bf16.mxu0 0
    %1336 = vmatpush1.bf16.msra.mxu0 %v1325
    %1337 = vmatprep.subr.bf16.mxu0 0
    %1338 = vmatpush1.bf16.msra.mxu0 %v1326
    %1339 = vmatprep.subr.bf16.mxu0 0
    %1340 = vmatpush1.bf16.msra.mxu0 0
    %1341 = vmatprep.subr.bf16.mxu0 0
    %1342 = vmatpush1.bf16.msra.mxu0 0
    %1343 = vmatprep.subr.bf16.mxu0 0
    %1344 = vmatpush1.bf16.msra.mxu0 0
    %1345 = vmatprep.subr.bf16.mxu0 0
    %1346 = vmatpush1.bf16.msra.mxu0 0
    %1347 = vmatprep.subr.bf16.mxu0 0
    %1348 = vmatpush1.bf16.msra.mxu0 0
    %1349 = vmatprep.subr.bf16.mxu0 0
    %1350 = vmatpush1.bf16.msra.mxu0 0
    %1351 = vmatprep.subr.bf16.mxu0 0
    %1352 = vmatpush1.bf16.msra.mxu0 0
    %1353 = vmatprep.subr.bf16.mxu0 0
    %1354 = vmatpush1.bf16.msra.mxu0 0
    %1355 = vmatprep.subr.bf16.mxu0 0
    %1356 = vmatpush1.bf16.msra.mxu0 0
    %1357 = vmatprep.subr.bf16.mxu0 0
    %1358 = vmatpush1.bf16.msra.mxu0 0
    %1359 = vmatprep.subr.bf16.mxu0 0
    %1360 = vmatpush1.bf16.msra.mxu0 0
    %1361 = vmatprep.subr.bf16.mxu0 0
    %1362 = vmatpush1.bf16.msra.mxu0 0
    %1363 = vmatprep.subr.bf16.mxu0 0
    %1364 = vmatpush1.bf16.msra.mxu0 0
    %1365 = vmatprep.subr.bf16.mxu0 0
    %1366 = vmatpush1.bf16.msra.mxu0 0
    %1367 = vmatprep.mubr.bf16.mxu0 0
    %1368 = vmatmul.mubr.bf16.gmra.mrb[0].mxu0 %v1330
    %v1369 = vpop.f32.mrb[0].mxu0
    %v1370 = vadd.f32 %v1315, %v1369
    %v1371 = vpop.f32.mrb[0].mxu0
    %v1372 = vpop.f32.mrb[0].mxu0
    %v1373 = vadd.f32 %v1315, %v1372
    %v1374 = vpop.f32.mrb[0].mxu0
    %1375 = vmatprep.mubr.bf16.mxu0 0
    %1376 = vmatmul.mubr.bf16.gmra.mrb[0].mxu0 %v1333
    %v1377 = vpop.f32.mrb[0].mxu0
    %v1378 = vadd.f32 %v1315, %v1377
    %v1379 = vpop.f32.mrb[0].mxu0
    %v1380 = vpop.f32.mrb[0].mxu0
    %v1381 = vadd.f32 %v1315, %v1380
    %v1382 = vpop.f32.mrb[0].mxu0
    %1383 = vdwg.mxu0
    %v1384 = vadd.f32 %v1370, %v84
    %v1385 = vadd.f32 %v1373, %v85
    %v1386 = vadd.f32 %v1378, %v86
    %v1387 = vadd.f32 %v1381, %v87
    %v1388 = vsel %vm138, %v1384, 0.0
    %1389 = vadd.xlane.f32.xlu0 %v1388
    %v1390 = vpop.xlane.xlu0 %1389
    %v1391 = vsel %vm138, %v1385, 0.0
    %1392 = vadd.xlane.f32.xlu0 %v1391
    %v1393 = vpop.xlane.xlu0 %1392
    %v1394 = vsel %vm138, %v1386, 0.0
    %1395 = vadd.xlane.f32.xlu0 %v1394
    %v1396 = vpop.xlane.xlu0 %1395
    %v1397 = vsel %vm138, %v1387, 0.0
    %1398 = vadd.xlane.f32.xlu0 %v1397
    %v1399 = vpop.xlane.xlu0 %1398
    %v1400 = vrcp.pop 32.0
    %v1401 = vmul.f32 %v1390, %v1400
    %v1402 = vmul.f32 %v1393, %v1400
    %v1403 = vmul.f32 %v1396, %v1400
    %v1404 = vmul.f32 %v1399, %v1400
    %v1405 = vsub.f32 %v1384, %v1401
    %v1406 = vsub.f32 %v1385, %v1402
    %v1407 = vsub.f32 %v1386, %v1403
    %v1408 = vsub.f32 %v1387, %v1404
    %v1409 = vmul.f32 %v1405, %v1405
    %v1410 = vmul.f32 %v1406, %v1406
    %v1411 = vmul.f32 %v1407, %v1407
    %v1412 = vmul.f32 %v1408, %v1408
    %v1413 = vsel %vm138, %v1409, 0.0
    %1414 = vadd.xlane.f32.xlu0 %v1413
    %v1415 = vpop.xlane.xlu0 %1414
    %v1416 = vsel %vm138, %v1410, 0.0
    %1417 = vadd.xlane.f32.xlu0 %v1416
    %v1418 = vpop.xlane.xlu0 %1417
    %v1419 = vsel %vm138, %v1411, 0.0
    %1420 = vadd.xlane.f32.xlu0 %v1419
    %v1421 = vpop.xlane.xlu0 %1420
    %v1422 = vsel %vm138, %v1412, 0.0
    %1423 = vadd.xlane.f32.xlu0 %v1422
    %v1424 = vpop.xlane.xlu0 %1423
    %v1425 = vmul.f32 %v1415, 0.032258064
    %v1426 = vmul.f32 %v1418, 0.032258064
    %v1427 = vmul.f32 %v1421, 0.032258064
    %v1428 = vmul.f32 %v1424, 0.032258064
    %v1429 = vrsqrt.pop %v1425
    %v1430 = vmul.f32 %v1425, %v1429
    %vm1431 = vcmp.eq.f32.partialorder %v1425, inf
    %v1432 = vsel %vm1431, %v1425, %v1430
    %vm1433 = vcmp.eq.f32.partialorder %v1425, 0.0
    %v1434 = vand.u32 %v1425, 2147483648
    %v1435 = vsel %vm1433, %v1434, %v1432
    %v1436 = vrsqrt.pop %v1426
    %v1437 = vmul.f32 %v1426, %v1436
    %vm1438 = vcmp.eq.f32.partialorder %v1426, inf
    %v1439 = vsel %vm1438, %v1426, %v1437
    %vm1440 = vcmp.eq.f32.partialorder %v1426, 0.0
    %v1441 = vand.u32 %v1426, 2147483648
    %v1442 = vsel %vm1440, %v1441, %v1439
    %v1443 = vrsqrt.pop %v1427
    %v1444 = vmul.f32 %v1427, %v1443
    %vm1445 = vcmp.eq.f32.partialorder %v1427, inf
    %v1446 = vsel %vm1445, %v1427, %v1444
    %vm1447 = vcmp.eq.f32.partialorder %v1427, 0.0
    %v1448 = vand.u32 %v1427, 2147483648
    %v1449 = vsel %vm1447, %v1448, %v1446
    %v1450 = vrsqrt.pop %v1428
    %v1451 = vmul.f32 %v1428, %v1450
    %vm1452 = vcmp.eq.f32.partialorder %v1428, inf
    %v1453 = vsel %vm1452, %v1428, %v1451
    %vm1454 = vcmp.eq.f32.partialorder %v1428, 0.0
    %v1455 = vand.u32 %v1428, 2147483648
    %v1456 = vsel %vm1454, %v1455, %v1453
    %v1457 = vadd.f32 %v1435, 1e-06
    %v1458 = vadd.f32 %v1442, 1e-06
    %v1459 = vadd.f32 %v1449, 1e-06
    %v1460 = vadd.f32 %v1456, 1e-06
    %v1461 = vrcp.pop %v1457
    %v1462 = vrcp.pop %v1458
    %v1463 = vrcp.pop %v1459
    %v1464 = vrcp.pop %v1460
    %v1466 = vlaneseq
    %v1467 = vshrl.u32 %v1466, 7
    %v1468 = vsub.s32 0, %v1467
    %v1469 = vrot.slane %v106, %v1468
    %v1471 = vmul.f32 %v1469, %v1405
    %v1472 = vmul.f32 %v1469, %v1406
    %v1473 = vmul.f32 %v1469, %v1407
    %v1474 = vmul.f32 %v1469, %v1408
    %v1475 = vmul.f32 %v1471, %v1461
    %v1476 = vmul.f32 %v1472, %v1462
    %v1477 = vmul.f32 %v1473, %v1463
    %v1478 = vmul.f32 %v1474, %v1464
    %v1480 = vlaneseq
    %v1481 = vshrl.u32 %v1480, 7
    %v1482 = vsub.s32 0, %v1481
    %v1483 = vrot.slane %v107, %v1482
    %v1485 = vadd.f32 %v1475, %v1483
    %v1486 = vadd.f32 %v1476, %v1483
    %v1487 = vadd.f32 %v1477, %v1483
    %v1488 = vadd.f32 %v1478, %v1483
    %v1489 = vld [vmem:[%s13] sm:$0x1]
    %v1490 = vld [vmem:[%s14] sm:$0x1]
    %v1491 = vld [vmem:[%s15] sm:$0xf]
    %v1492 = vld [vmem:[%s15 + $0x4] sm:$0xf]
    %v1493 = vld [vmem:[%s15 + $0x8] sm:$0xf]
    %v1494 = vld [vmem:[%s15 + $0xc] sm:$0xf]
    %v1495 = vld [vmem:[%s16] sm:$0x1]
    %v1496 = vld [vmem:[%s17] sm:$0xf]
    %v1497 = vld [vmem:[%s17 + $0x4] sm:$0xf]
    %v1498 = vld [vmem:[%s17 + $0x8] sm:$0xf]
    %v1499 = vld [vmem:[%s17 + $0xc] sm:$0xf]
    %v1500 = vld [vmem:[%s17 + $0x10] sm:$0xf]
    %v1501 = vld [vmem:[%s17 + $0x14] sm:$0xf]
    %v1502 = vld [vmem:[%s17 + $0x18] sm:$0xf]
    %v1503 = vld [vmem:[%s17 + $0x1c] sm:$0xf]
    %v1504 = vld [vmem:[%s18] sm:$0x1]
    %v1505 = vsel %vm138, %v1485, 0.0
    %1506 = vadd.xlane.f32.xlu0 %v1505
    %v1507 = vpop.xlane.xlu0 %1506
    %v1508 = vsel %vm138, %v1486, 0.0
    %1509 = vadd.xlane.f32.xlu0 %v1508
    %v1510 = vpop.xlane.xlu0 %1509
    %v1511 = vsel %vm138, %v1487, 0.0
    %1512 = vadd.xlane.f32.xlu0 %v1511
    %v1513 = vpop.xlane.xlu0 %1512
    %v1514 = vsel %vm138, %v1488, 0.0
    %1515 = vadd.xlane.f32.xlu0 %v1514
    %v1516 = vpop.xlane.xlu0 %1515
    %v1517 = vmul.f32 %v1507, %v1400
    %v1518 = vmul.f32 %v1510, %v1400
    %v1519 = vmul.f32 %v1513, %v1400
    %v1520 = vmul.f32 %v1516, %v1400
    %v1521 = vsub.f32 %v1485, %v1517
    %v1522 = vsub.f32 %v1486, %v1518
    %v1523 = vsub.f32 %v1487, %v1519
    %v1524 = vsub.f32 %v1488, %v1520
    %v1525 = vmul.f32 %v1521, %v1521
    %v1526 = vmul.f32 %v1522, %v1522
    %v1527 = vmul.f32 %v1523, %v1523
    %v1528 = vmul.f32 %v1524, %v1524
    %v1529 = vsel %vm138, %v1525, 0.0
    %1530 = vadd.xlane.f32.xlu0 %v1529
    %v1531 = vpop.xlane.xlu0 %1530
    %v1532 = vsel %vm138, %v1526, 0.0
    %1533 = vadd.xlane.f32.xlu0 %v1532
    %v1534 = vpop.xlane.xlu0 %1533
    %v1535 = vsel %vm138, %v1527, 0.0
    %1536 = vadd.xlane.f32.xlu0 %v1535
    %v1537 = vpop.xlane.xlu0 %1536
    %v1538 = vsel %vm138, %v1528, 0.0
    %1539 = vadd.xlane.f32.xlu0 %v1538
    %v1540 = vpop.xlane.xlu0 %1539
    %v1541 = vmul.f32 %v1531, 0.032258064
    %v1542 = vmul.f32 %v1534, 0.032258064
    %v1543 = vmul.f32 %v1537, 0.032258064
    %v1544 = vmul.f32 %v1540, 0.032258064
    %v1545 = vrsqrt.pop %v1541
    %v1546 = vmul.f32 %v1541, %v1545
    %vm1547 = vcmp.eq.f32.partialorder %v1541, inf
    %v1548 = vsel %vm1547, %v1541, %v1546
    %vm1549 = vcmp.eq.f32.partialorder %v1541, 0.0
    %v1550 = vand.u32 %v1541, 2147483648
    %v1551 = vsel %vm1549, %v1550, %v1548
    %v1552 = vrsqrt.pop %v1542
    %v1553 = vmul.f32 %v1542, %v1552
    %vm1554 = vcmp.eq.f32.partialorder %v1542, inf
    %v1555 = vsel %vm1554, %v1542, %v1553
    %vm1556 = vcmp.eq.f32.partialorder %v1542, 0.0
    %v1557 = vand.u32 %v1542, 2147483648
    %v1558 = vsel %vm1556, %v1557, %v1555
    %v1559 = vrsqrt.pop %v1543
    %v1560 = vmul.f32 %v1543, %v1559
    %vm1561 = vcmp.eq.f32.partialorder %v1543, inf
    %v1562 = vsel %vm1561, %v1543, %v1560
    %vm1563 = vcmp.eq.f32.partialorder %v1543, 0.0
    %v1564 = vand.u32 %v1543, 2147483648
    %v1565 = vsel %vm1563, %v1564, %v1562
    %v1566 = vrsqrt.pop %v1544
    %v1567 = vmul.f32 %v1544, %v1566
    %vm1568 = vcmp.eq.f32.partialorder %v1544, inf
    %v1569 = vsel %vm1568, %v1544, %v1567
    %vm1570 = vcmp.eq.f32.partialorder %v1544, 0.0
    %v1571 = vand.u32 %v1544, 2147483648
    %v1572 = vsel %vm1570, %v1571, %v1569
    %v1573 = vadd.f32 %v1551, 1e-06
    %v1574 = vadd.f32 %v1558, 1e-06
    %v1575 = vadd.f32 %v1565, 1e-06
    %v1576 = vadd.f32 %v1572, 1e-06
    %v1577 = vrcp.pop %v1573
    %v1578 = vrcp.pop %v1574
    %v1579 = vrcp.pop %v1575
    %v1580 = vrcp.pop %v1576
    %v1582 = vlaneseq
    %v1583 = vshrl.u32 %v1582, 7
    %v1584 = vsub.s32 0, %v1583
    %v1585 = vrot.slane %v1489, %v1584
    %v1587 = vmul.f32 %v1585, %v1521
    %v1588 = vmul.f32 %v1585, %v1522
    %v1589 = vmul.f32 %v1585, %v1523
    %v1590 = vmul.f32 %v1585, %v1524
    %v1591 = vmul.f32 %v1587, %v1577
    %v1592 = vmul.f32 %v1588, %v1578
    %v1593 = vmul.f32 %v1589, %v1579
    %v1594 = vmul.f32 %v1590, %v1580
    %v1596 = vlaneseq
    %v1597 = vshrl.u32 %v1596, 7
    %v1598 = vsub.s32 0, %v1597
    %v1599 = vrot.slane %v1490, %v1598
    %v1601 = vadd.f32 %v1591, %v1599
    %v1602 = vadd.f32 %v1592, %v1599
    %v1603 = vadd.f32 %v1593, %v1599
    %v1604 = vadd.f32 %v1594, %v1599
    %v1605 = vpack.c.bf16 %v1602, %v1601
    %v1606 = vpack.c.bf16 %v1604, %v1603
    %v1608 = vlaneseq
    %v1609 = vshrl.u32 %v1608, 7
    %v1610 = vsub.s32 0, %v1609
    %v1611 = vrot.slane %v1495, %v1610
    %v1617 = vunpack.c.l.b16 %v1491
    %v1618 = vunpack.c.l.b16 %v1492
    %v1619 = vunpack.c.l.b16 %v1493
    %v1620 = vunpack.c.l.b16 %v1494
    %v1621 = vpack.c.b16 %v1618, %v1617
    %v1622 = vpack.c.b16 %v1620, %v1619
    %v1626 = vsel %vm138, %v1605, 0
    %v1629 = vsel %vm138, %v1606, 0
    %1631 = vmatprep.subr.bf16.mxu0 0
    %1632 = vmatpush1.bf16.msra.mxu0 %v1621
    %1633 = vmatprep.subr.bf16.mxu0 0
    %1634 = vmatpush1.bf16.msra.mxu0 %v1622
    %1635 = vmatprep.subr.bf16.mxu0 0
    %1636 = vmatpush1.bf16.msra.mxu0 0
    %1637 = vmatprep.subr.bf16.mxu0 0
    %1638 = vmatpush1.bf16.msra.mxu0 0
    %1639 = vmatprep.subr.bf16.mxu0 0
    %1640 = vmatpush1.bf16.msra.mxu0 0
    %1641 = vmatprep.subr.bf16.mxu0 0
    %1642 = vmatpush1.bf16.msra.mxu0 0
    %1643 = vmatprep.subr.bf16.mxu0 0
    %1644 = vmatpush1.bf16.msra.mxu0 0
    %1645 = vmatprep.subr.bf16.mxu0 0
    %1646 = vmatpush1.bf16.msra.mxu0 0
    %1647 = vmatprep.subr.bf16.mxu0 0
    %1648 = vmatpush1.bf16.msra.mxu0 0
    %1649 = vmatprep.subr.bf16.mxu0 0
    %1650 = vmatpush1.bf16.msra.mxu0 0
    %1651 = vmatprep.subr.bf16.mxu0 0
    %1652 = vmatpush1.bf16.msra.mxu0 0
    %1653 = vmatprep.subr.bf16.mxu0 0
    %1654 = vmatpush1.bf16.msra.mxu0 0
    %1655 = vmatprep.subr.bf16.mxu0 0
    %1656 = vmatpush1.bf16.msra.mxu0 0
    %1657 = vmatprep.subr.bf16.mxu0 0
    %1658 = vmatpush1.bf16.msra.mxu0 0
    %1659 = vmatprep.subr.bf16.mxu0 0
    %1660 = vmatpush1.bf16.msra.mxu0 0
    %1661 = vmatprep.subr.bf16.mxu0 0
    %1662 = vmatpush1.bf16.msra.mxu0 0
    %1663 = vmatprep.mubr.bf16.mxu0 0
    %1664 = vmatmul.mubr.bf16.gmra.mrb[0].mxu0 %v1626
    %v1665 = vpop.f32.mrb[0].mxu0
    %v1666 = vadd.f32 %v1611, %v1665
    %v1667 = vpop.f32.mrb[0].mxu0
    %v1668 = vpop.f32.mrb[0].mxu0
    %v1669 = vadd.f32 %v1611, %v1668
    %v1670 = vpop.f32.mrb[0].mxu0
    %1671 = vmatprep.mubr.bf16.mxu0 0
    %1672 = vmatmul.mubr.bf16.gmra.mrb[0].mxu0 %v1629
    %v1673 = vpop.f32.mrb[0].mxu0
    %v1674 = vadd.f32 %v1611, %v1673
    %v1675 = vpop.f32.mrb[0].mxu0
    %v1676 = vpop.f32.mrb[0].mxu0
    %v1677 = vadd.f32 %v1611, %v1676
    %v1678 = vpop.f32.mrb[0].mxu0
    %1679 = vdwg.mxu0
    %v1680 = vmax.f32 %v1666, 0.0
    %v1681 = vmax.f32 %v1669, 0.0
    %v1682 = vmax.f32 %v1674, 0.0
    %v1683 = vmax.f32 %v1677, 0.0
    %v1684 = vpack.c.bf16 %v1681, %v1680
    %v1685 = vpack.c.bf16 %v1683, %v1682
    %v1687 = vlaneseq
    %v1688 = vshrl.u32 %v1687, 7
    %v1689 = vsub.s32 0, %v1688
    %v1690 = vrot.slane %v1504, %v1689
    %v1700 = vunpack.c.l.b16 %v1496
    %v1701 = vunpack.c.l.b16 %v1497
    %v1702 = vunpack.c.l.b16 %v1498
    %v1703 = vunpack.c.l.b16 %v1499
    %v1704 = vunpack.c.l.b16 %v1500
    %v1705 = vunpack.c.l.b16 %v1501
    %v1706 = vunpack.c.l.b16 %v1502
    %v1707 = vunpack.c.l.b16 %v1503
    %v1708 = vpack.c.b16 %v1701, %v1700
    %v1709 = vpack.c.b16 %v1703, %v1702
    %v1710 = vpack.c.b16 %v1705, %v1704
    %v1711 = vpack.c.b16 %v1707, %v1706
    %vm1716 = vcmask 523264
    %v1718 = vsel %vm1716, %v1684, 0
    %v1721 = vsel %vm1716, %v1685, 0
    %1723 = vmatprep.subr.bf16.mxu0 0
    %1724 = vmatpush1.bf16.msra.mxu0 %v1708
    %1725 = vmatprep.subr.bf16.mxu0 0
    %1726 = vmatpush1.bf16.msra.mxu0 %v1709
    %1727 = vmatprep.subr.bf16.mxu0 0
    %1728 = vmatpush1.bf16.msra.mxu0 %v1710
    %1729 = vmatprep.subr.bf16.mxu0 0
    %1730 = vmatpush1.bf16.msra.mxu0 %v1711
    %1731 = vmatprep.subr.bf16.mxu0 0
    %1732 = vmatpush1.bf16.msra.mxu0 0
    %1733 = vmatprep.subr.bf16.mxu0 0
    %1734 = vmatpush1.bf16.msra.mxu0 0
    %1735 = vmatprep.subr.bf16.mxu0 0
    %1736 = vmatpush1.bf16.msra.mxu0 0
    %1737 = vmatprep.subr.bf16.mxu0 0
    %1738 = vmatpush1.bf16.msra.mxu0 0
    %1739 = vmatprep.subr.bf16.mxu0 0
    %1740 = vmatpush1.bf16.msra.mxu0 0
    %1741 = vmatprep.subr.bf16.mxu0 0
    %1742 = vmatpush1.bf16.msra.mxu0 0
    %1743 = vmatprep.subr.bf16.mxu0 0
    %1744 = vmatpush1.bf16.msra.mxu0 0
    %1745 = vmatprep.subr.bf16.mxu0 0
    %1746 = vmatpush1.bf16.msra.mxu0 0
    %1747 = vmatprep.subr.bf16.mxu0 0
    %1748 = vmatpush1.bf16.msra.mxu0 0
    %1749 = vmatprep.subr.bf16.mxu0 0
    %1750 = vmatpush1.bf16.msra.mxu0 0
    %1751 = vmatprep.subr.bf16.mxu0 0
    %1752 = vmatpush1.bf16.msra.mxu0 0
    %1753 = vmatprep.subr.bf16.mxu0 0
    %1754 = vmatpush1.bf16.msra.mxu0 0
    %1755 = vmatprep.mubr.bf16.mxu0 0
    %1756 = vmatmul.mubr.bf16.gmra.mrb[0].mxu0 %v1718
    %v1757 = vpop.f32.mrb[0].mxu0
    %v1758 = vadd.f32 %v1690, %v1757
    %v1759 = vpop.f32.mrb[0].mxu0
    %v1760 = vpop.f32.mrb[0].mxu0
    %v1761 = vadd.f32 %v1690, %v1760
    %v1762 = vpop.f32.mrb[0].mxu0
    %1763 = vmatprep.mubr.bf16.mxu0 0
    %1764 = vmatmul.mubr.bf16.gmra.mrb[0].mxu0 %v1721
    %v1765 = vpop.f32.mrb[0].mxu0
    %v1766 = vadd.f32 %v1690, %v1765
    %v1767 = vpop.f32.mrb[0].mxu0
    %v1768 = vpop.f32.mrb[0].mxu0
    %v1769 = vadd.f32 %v1690, %v1768
    %v1770 = vpop.f32.mrb[0].mxu0
    %1771 = vdwg.mxu0
    %v1772 = vadd.f32 %v1758, %v1485
    %v1773 = vadd.f32 %v1761, %v1486
    %v1774 = vadd.f32 %v1766, %v1487
    %v1775 = vadd.f32 %v1769, %v1488
    %v1776 = vld [vmem:[%s7] sm:$0xf]
    %v1777 = vld [vmem:[%s7 + $0x4] sm:$0xf]
    %v1778 = vld [vmem:[%s7 + $0x8] sm:$0xf]
    %v1779 = vld [vmem:[%s7 + $0xc] sm:$0xf]
    %v1780 = vld [vmem:[%s8] sm:$0x1]
    %v1781 = vld [vmem:[%s9] sm:$0xf]
    %v1782 = vld [vmem:[%s9 + $0x4] sm:$0xf]
    %v1783 = vld [vmem:[%s9 + $0x8] sm:$0xf]
    %v1784 = vld [vmem:[%s9 + $0xc] sm:$0xf]
    %v1785 = vld [vmem:[%s10] sm:$0x1]
    %v1786 = vpack.c.bf16 %v1773, %v1772
    %v1787 = vpack.c.bf16 %v1775, %v1774
    %v1789 = vlaneseq
    %v1790 = vshrl.u32 %v1789, 7
    %v1791 = vsub.s32 0, %v1790
    %v1792 = vrot.slane %v1780, %v1791
    %v1798 = vunpack.c.l.b16 %v1776
    %v1799 = vunpack.c.l.b16 %v1777
    %v1800 = vunpack.c.l.b16 %v1778
    %v1801 = vunpack.c.l.b16 %v1779
    %v1802 = vpack.c.b16 %v1799, %v1798
    %v1803 = vpack.c.b16 %v1801, %v1800
    %v1807 = vsel %vm138, %v1786, 0
    %v1810 = vsel %vm138, %v1787, 0
    %1812 = vmatprep.subr.bf16.mxu0 0
    %1813 = vmatpush1.bf16.msra.mxu0 %v1802
    %1814 = vmatprep.subr.bf16.mxu0 0
    %1815 = vmatpush1.bf16.msra.mxu0 %v1803
    %1816 = vmatprep.subr.bf16.mxu0 0
    %1817 = vmatpush1.bf16.msra.mxu0 0
    %1818 = vmatprep.subr.bf16.mxu0 0
    %1819 = vmatpush1.bf16.msra.mxu0 0
    %1820 = vmatprep.subr.bf16.mxu0 0
    %1821 = vmatpush1.bf16.msra.mxu0 0
    %1822 = vmatprep.subr.bf16.mxu0 0
    %1823 = vmatpush1.bf16.msra.mxu0 0
    %1824 = vmatprep.subr.bf16.mxu0 0
    %1825 = vmatpush1.bf16.msra.mxu0 0
    %1826 = vmatprep.subr.bf16.mxu0 0
    %1827 = vmatpush1.bf16.msra.mxu0 0
    %1828 = vmatprep.subr.bf16.mxu0 0
    %1829 = vmatpush1.bf16.msra.mxu0 0
    %1830 = vmatprep.subr.bf16.mxu0 0
    %1831 = vmatpush1.bf16.msra.mxu0 0
    %1832 = vmatprep.subr.bf16.mxu0 0
    %1833 = vmatpush1.bf16.msra.mxu0 0
    %1834 = vmatprep.subr.bf16.mxu0 0
    %1835 = vmatpush1.bf16.msra.mxu0 0
    %1836 = vmatprep.subr.bf16.mxu0 0
    %1837 = vmatpush1.bf16.msra.mxu0 0
    %1838 = vmatprep.subr.bf16.mxu0 0
    %1839 = vmatpush1.bf16.msra.mxu0 0
    %1840 = vmatprep.subr.bf16.mxu0 0
    %1841 = vmatpush1.bf16.msra.mxu0 0
    %1842 = vmatprep.subr.bf16.mxu0 0
    %1843 = vmatpush1.bf16.msra.mxu0 0
    %1844 = vmatprep.mubr.bf16.mxu0 0
    %1845 = vmatmul.mubr.bf16.gmra.mrb[0].mxu0 %v1807
    %v1846 = vpop.f32.mrb[0].mxu0
    %v1847 = vadd.f32 %v1792, %v1846
    %v1848 = vpop.f32.mrb[0].mxu0
    %v1849 = vpop.f32.mrb[0].mxu0
    %v1850 = vadd.f32 %v1792, %v1849
    %v1851 = vpop.f32.mrb[0].mxu0
    %1852 = vmatprep.mubr.bf16.mxu0 0
    %1853 = vmatmul.mubr.bf16.gmra.mrb[0].mxu0 %v1810
    %v1854 = vpop.f32.mrb[0].mxu0
    %v1855 = vadd.f32 %v1792, %v1854
    %v1856 = vpop.f32.mrb[0].mxu0
    %v1857 = vpop.f32.mrb[0].mxu0
    %v1858 = vadd.f32 %v1792, %v1857
    %v1859 = vpop.f32.mrb[0].mxu0
    %1860 = vdwg.mxu0
    %1865 = vrot.lane.b32.xlu0 %v1847, 120
    %v1866 = vpop.permute.xlu0 %1865
    %1867 = vrot.lane.b32.xlu0 %v1850, 120
    %v1868 = vpop.permute.xlu0 %1867
    %1869 = vrot.lane.b32.xlu0 %v1855, 120
    %v1870 = vpop.permute.xlu0 %1869
    %1871 = vrot.lane.b32.xlu0 %v1858, 120
    %v1872 = vpop.permute.xlu0 %1871
    %1877 = vrot.lane.b32.xlu0 %v1847, 112
    %v1878 = vpop.permute.xlu0 %1877
    %1879 = vrot.lane.b32.xlu0 %v1850, 112
    %v1880 = vpop.permute.xlu0 %1879
    %1881 = vrot.lane.b32.xlu0 %v1855, 112
    %v1882 = vpop.permute.xlu0 %1881
    %1883 = vrot.lane.b32.xlu0 %v1858, 112
    %v1884 = vpop.permute.xlu0 %1883
    %1889 = vrot.lane.b32.xlu0 %v1847, 104
    %v1890 = vpop.permute.xlu0 %1889
    %1891 = vrot.lane.b32.xlu0 %v1850, 104
    %v1892 = vpop.permute.xlu0 %1891
    %1893 = vrot.lane.b32.xlu0 %v1855, 104
    %v1894 = vpop.permute.xlu0 %1893
    %1895 = vrot.lane.b32.xlu0 %v1858, 104
    %v1896 = vpop.permute.xlu0 %1895
    %v1901 = vpack.c.bf16 %v1850, %v1847
    %v1902 = vpack.c.bf16 %v1858, %v1855
    %v1903 = vpack.c.bf16 %v1868, %v1866
    %v1904 = vpack.c.bf16 %v1872, %v1870
    %v1905 = vpack.c.bf16 %v1880, %v1878
    %v1906 = vpack.c.bf16 %v1884, %v1882
    %v1907 = vpack.c.bf16 %v1892, %v1890
    %v1908 = vpack.c.bf16 %v1896, %v1894
    %1910 = vrot.lane.b32.xlu0 %v1901, 96
    %v1911 = vpop.permute.xlu0 %1910
    %v1913 = vsel %vm245, %v1901, 0
    %v1916 = vsel %vm245, %v1911, 0
    %1918 = vmatprep.subr.bf16.mxu0 0
    %1919 = vmatpush1.bf16.xpose.msra.mxu0 %v1916
    %1920 = vmatprep.subr.bf16.mxu0 0
    %1921 = vmatpush1.bf16.xpose.msra.mxu0 0
    %1922 = vmatprep.subr.bf16.mxu0 0
    %1923 = vmatpush1.bf16.xpose.msra.mxu0 0
    %1924 = vmatprep.subr.bf16.mxu0 0
    %1925 = vmatpush1.bf16.xpose.msra.mxu0 0
    %1926 = vmatprep.subr.bf16.mxu0 0
    %1927 = vmatpush1.bf16.xpose.msra.mxu0 0
    %1928 = vmatprep.subr.bf16.mxu0 0
    %1929 = vmatpush1.bf16.xpose.msra.mxu0 0
    %1930 = vmatprep.subr.bf16.mxu0 0
    %1931 = vmatpush1.bf16.xpose.msra.mxu0 0
    %1932 = vmatprep.subr.bf16.mxu0 0
    %1933 = vmatpush1.bf16.xpose.msra.mxu0 0
    %1934 = vmatprep.subr.bf16.mxu0 0
    %1935 = vmatpush1.bf16.xpose.msra.mxu0 0
    %1936 = vmatprep.subr.bf16.mxu0 0
    %1937 = vmatpush1.bf16.xpose.msra.mxu0 0
    %1938 = vmatprep.subr.bf16.mxu0 0
    %1939 = vmatpush1.bf16.xpose.msra.mxu0 0
    %1940 = vmatprep.subr.bf16.mxu0 0
    %1941 = vmatpush1.bf16.xpose.msra.mxu0 0
    %1942 = vmatprep.subr.bf16.mxu0 0
    %1943 = vmatpush1.bf16.xpose.msra.mxu0 0
    %1944 = vmatprep.subr.bf16.mxu0 0
    %1945 = vmatpush1.bf16.xpose.msra.mxu0 0
    %1946 = vmatprep.subr.bf16.mxu0 0
    %1947 = vmatpush1.bf16.xpose.msra.mxu0 0
    %1948 = vmatprep.subr.bf16.mxu0 0
    %1949 = vmatpush1.bf16.xpose.msra.mxu0 0
    %1950 = vmatprep.mubr.bf16.mxu0 0
    %1951 = vmatmul.mubr.bf16.gmra.mrb[0].mxu0 %v1913
    %v1952 = vpop.f32.mrb[0].mxu0
    %v1953 = vadd.f32 0.0, %v1952
    %v1954 = vpop.f32.mrb[0].mxu0
    %v1955 = vpop.f32.mrb[0].mxu0
    %v1956 = vadd.f32 0.0, %v1955
    %v1957 = vpop.f32.mrb[0].mxu0
    %1958 = vdwg.mxu0
    %1960 = vrot.lane.b32.xlu0 %v1902, 96
    %v1961 = vpop.permute.xlu0 %1960
    %v1963 = vsel %vm245, %v1902, 0
    %v1966 = vsel %vm245, %v1961, 0
    %1968 = vmatprep.subr.bf16.mxu0 0
    %1969 = vmatpush1.bf16.xpose.msra.mxu0 %v1966
    %1970 = vmatprep.subr.bf16.mxu0 0
    %1971 = vmatpush1.bf16.xpose.msra.mxu0 0
    %1972 = vmatprep.subr.bf16.mxu0 0
    %1973 = vmatpush1.bf16.xpose.msra.mxu0 0
    %1974 = vmatprep.subr.bf16.mxu0 0
    %1975 = vmatpush1.bf16.xpose.msra.mxu0 0
    %1976 = vmatprep.subr.bf16.mxu0 0
    %1977 = vmatpush1.bf16.xpose.msra.mxu0 0
    %1978 = vmatprep.subr.bf16.mxu0 0
    %1979 = vmatpush1.bf16.xpose.msra.mxu0 0
    %1980 = vmatprep.subr.bf16.mxu0 0
    %1981 = vmatpush1.bf16.xpose.msra.mxu0 0
    %1982 = vmatprep.subr.bf16.mxu0 0
    %1983 = vmatpush1.bf16.xpose.msra.mxu0 0
    %1984 = vmatprep.subr.bf16.mxu0 0
    %1985 = vmatpush1.bf16.xpose.msra.mxu0 0
    %1986 = vmatprep.subr.bf16.mxu0 0
    %1987 = vmatpush1.bf16.xpose.msra.mxu0 0
    %1988 = vmatprep.subr.bf16.mxu0 0
    %1989 = vmatpush1.bf16.xpose.msra.mxu0 0
    %1990 = vmatprep.subr.bf16.mxu0 0
    %1991 = vmatpush1.bf16.xpose.msra.mxu0 0
    %1992 = vmatprep.subr.bf16.mxu0 0
    %1993 = vmatpush1.bf16.xpose.msra.mxu0 0
    %1994 = vmatprep.subr.bf16.mxu0 0
    %1995 = vmatpush1.bf16.xpose.msra.mxu0 0
    %1996 = vmatprep.subr.bf16.mxu0 0
    %1997 = vmatpush1.bf16.xpose.msra.mxu0 0
    %1998 = vmatprep.subr.bf16.mxu0 0
    %1999 = vmatpush1.bf16.xpose.msra.mxu0 0
    %2000 = vmatprep.mubr.bf16.mxu0 0
    %2001 = vmatmul.mubr.bf16.gmra.mrb[0].mxu0 %v1963
    %v2002 = vpop.f32.mrb[0].mxu0
    %v2003 = vadd.f32 0.0, %v2002
    %v2004 = vpop.f32.mrb[0].mxu0
    %v2005 = vpop.f32.mrb[0].mxu0
    %v2006 = vadd.f32 0.0, %v2005
    %v2007 = vpop.f32.mrb[0].mxu0
    %2008 = vdwg.mxu0
    %2010 = vrot.lane.b32.xlu0 %v1903, 96
    %v2011 = vpop.permute.xlu0 %2010
    %v2013 = vsel %vm245, %v1903, 0
    %v2016 = vsel %vm245, %v2011, 0
    %2018 = vmatprep.subr.bf16.mxu0 0
    %2019 = vmatpush1.bf16.xpose.msra.mxu0 %v2016
    %2020 = vmatprep.subr.bf16.mxu0 0
    %2021 = vmatpush1.bf16.xpose.msra.mxu0 0
    %2022 = vmatprep.subr.bf16.mxu0 0
    %2023 = vmatpush1.bf16.xpose.msra.mxu0 0
    %2024 = vmatprep.subr.bf16.mxu0 0
    %2025 = vmatpush1.bf16.xpose.msra.mxu0 0
    %2026 = vmatprep.subr.bf16.mxu0 0
    %2027 = vmatpush1.bf16.xpose.msra.mxu0 0
    %2028 = vmatprep.subr.bf16.mxu0 0
    %2029 = vmatpush1.bf16.xpose.msra.mxu0 0
    %2030 = vmatprep.subr.bf16.mxu0 0
    %2031 = vmatpush1.bf16.xpose.msra.mxu0 0
    %2032 = vmatprep.subr.bf16.mxu0 0
    %2033 = vmatpush1.bf16.xpose.msra.mxu0 0
    %2034 = vmatprep.subr.bf16.mxu0 0
    %2035 = vmatpush1.bf16.xpose.msra.mxu0 0
    %2036 = vmatprep.subr.bf16.mxu0 0
    %2037 = vmatpush1.bf16.xpose.msra.mxu0 0
    %2038 = vmatprep.subr.bf16.mxu0 0
    %2039 = vmatpush1.bf16.xpose.msra.mxu0 0
    %2040 = vmatprep.subr.bf16.mxu0 0
    %2041 = vmatpush1.bf16.xpose.msra.mxu0 0
    %2042 = vmatprep.subr.bf16.mxu0 0
    %2043 = vmatpush1.bf16.xpose.msra.mxu0 0
    %2044 = vmatprep.subr.bf16.mxu0 0
    %2045 = vmatpush1.bf16.xpose.msra.mxu0 0
    %2046 = vmatprep.subr.bf16.mxu0 0
    %2047 = vmatpush1.bf16.xpose.msra.mxu0 0
    %2048 = vmatprep.subr.bf16.mxu0 0
    %2049 = vmatpush1.bf16.xpose.msra.mxu0 0
    %2050 = vmatprep.mubr.bf16.mxu0 0
    %2051 = vmatmul.mubr.bf16.gmra.mrb[0].mxu0 %v2013
    %v2052 = vpop.f32.mrb[0].mxu0
    %v2053 = vadd.f32 0.0, %v2052
    %v2054 = vpop.f32.mrb[0].mxu0
    %v2055 = vpop.f32.mrb[0].mxu0
    %v2056 = vadd.f32 0.0, %v2055
    %v2057 = vpop.f32.mrb[0].mxu0
    %2058 = vdwg.mxu0
    %2060 = vrot.lane.b32.xlu0 %v1904, 96
    %v2061 = vpop.permute.xlu0 %2060
    %v2063 = vsel %vm245, %v1904, 0
    %v2066 = vsel %vm245, %v2061, 0
    %2068 = vmatprep.subr.bf16.mxu0 0
    %2069 = vmatpush1.bf16.xpose.msra.mxu0 %v2066
    %2070 = vmatprep.subr.bf16.mxu0 0
    %2071 = vmatpush1.bf16.xpose.msra.mxu0 0
    %2072 = vmatprep.subr.bf16.mxu0 0
    %2073 = vmatpush1.bf16.xpose.msra.mxu0 0
    %2074 = vmatprep.subr.bf16.mxu0 0
    %2075 = vmatpush1.bf16.xpose.msra.mxu0 0
    %2076 = vmatprep.subr.bf16.mxu0 0
    %2077 = vmatpush1.bf16.xpose.msra.mxu0 0
    %2078 = vmatprep.subr.bf16.mxu0 0
    %2079 = vmatpush1.bf16.xpose.msra.mxu0 0
    %2080 = vmatprep.subr.bf16.mxu0 0
    %2081 = vmatpush1.bf16.xpose.msra.mxu0 0
    %2082 = vmatprep.subr.bf16.mxu0 0
    %2083 = vmatpush1.bf16.xpose.msra.mxu0 0
    %2084 = vmatprep.subr.bf16.mxu0 0
    %2085 = vmatpush1.bf16.xpose.msra.mxu0 0
    %2086 = vmatprep.subr.bf16.mxu0 0
    %2087 = vmatpush1.bf16.xpose.msra.mxu0 0
    %2088 = vmatprep.subr.bf16.mxu0 0
    %2089 = vmatpush1.bf16.xpose.msra.mxu0 0
    %2090 = vmatprep.subr.bf16.mxu0 0
    %2091 = vmatpush1.bf16.xpose.msra.mxu0 0
    %2092 = vmatprep.subr.bf16.mxu0 0
    %2093 = vmatpush1.bf16.xpose.msra.mxu0 0
    %2094 = vmatprep.subr.bf16.mxu0 0
    %2095 = vmatpush1.bf16.xpose.msra.mxu0 0
    %2096 = vmatprep.subr.bf16.mxu0 0
    %2097 = vmatpush1.bf16.xpose.msra.mxu0 0
    %2098 = vmatprep.subr.bf16.mxu0 0
    %2099 = vmatpush1.bf16.xpose.msra.mxu0 0
    %2100 = vmatprep.mubr.bf16.mxu0 0
    %2101 = vmatmul.mubr.bf16.gmra.mrb[0].mxu0 %v2063
    %v2102 = vpop.f32.mrb[0].mxu0
    %v2103 = vadd.f32 0.0, %v2102
    %v2104 = vpop.f32.mrb[0].mxu0
    %v2105 = vpop.f32.mrb[0].mxu0
    %v2106 = vadd.f32 0.0, %v2105
    %v2107 = vpop.f32.mrb[0].mxu0
    %2108 = vdwg.mxu0
    %2110 = vrot.lane.b32.xlu0 %v1905, 96
    %v2111 = vpop.permute.xlu0 %2110
    %v2113 = vsel %vm245, %v1905, 0
    %v2116 = vsel %vm245, %v2111, 0
    %2118 = vmatprep.subr.bf16.mxu0 0
    %2119 = vmatpush1.bf16.xpose.msra.mxu0 %v2116
    %2120 = vmatprep.subr.bf16.mxu0 0
    %2121 = vmatpush1.bf16.xpose.msra.mxu0 0
    %2122 = vmatprep.subr.bf16.mxu0 0
    %2123 = vmatpush1.bf16.xpose.msra.mxu0 0
    %2124 = vmatprep.subr.bf16.mxu0 0
    %2125 = vmatpush1.bf16.xpose.msra.mxu0 0
    %2126 = vmatprep.subr.bf16.mxu0 0
    %2127 = vmatpush1.bf16.xpose.msra.mxu0 0
    %2128 = vmatprep.subr.bf16.mxu0 0
    %2129 = vmatpush1.bf16.xpose.msra.mxu0 0
    %2130 = vmatprep.subr.bf16.mxu0 0
    %2131 = vmatpush1.bf16.xpose.msra.mxu0 0
    %2132 = vmatprep.subr.bf16.mxu0 0
    %2133 = vmatpush1.bf16.xpose.msra.mxu0 0
    %2134 = vmatprep.subr.bf16.mxu0 0
    %2135 = vmatpush1.bf16.xpose.msra.mxu0 0
    %2136 = vmatprep.subr.bf16.mxu0 0
    %2137 = vmatpush1.bf16.xpose.msra.mxu0 0
    %2138 = vmatprep.subr.bf16.mxu0 0
    %2139 = vmatpush1.bf16.xpose.msra.mxu0 0
    %2140 = vmatprep.subr.bf16.mxu0 0
    %2141 = vmatpush1.bf16.xpose.msra.mxu0 0
    %2142 = vmatprep.subr.bf16.mxu0 0
    %2143 = vmatpush1.bf16.xpose.msra.mxu0 0
    %2144 = vmatprep.subr.bf16.mxu0 0
    %2145 = vmatpush1.bf16.xpose.msra.mxu0 0
    %2146 = vmatprep.subr.bf16.mxu0 0
    %2147 = vmatpush1.bf16.xpose.msra.mxu0 0
    %2148 = vmatprep.subr.bf16.mxu0 0
    %2149 = vmatpush1.bf16.xpose.msra.mxu0 0
    %2150 = vmatprep.mubr.bf16.mxu0 0
    %2151 = vmatmul.mubr.bf16.gmra.mrb[0].mxu0 %v2113
    %v2152 = vpop.f32.mrb[0].mxu0
    %v2153 = vadd.f32 0.0, %v2152
    %v2154 = vpop.f32.mrb[0].mxu0
    %v2155 = vpop.f32.mrb[0].mxu0
    %v2156 = vadd.f32 0.0, %v2155
    %v2157 = vpop.f32.mrb[0].mxu0
    %2158 = vdwg.mxu0
    %2160 = vrot.lane.b32.xlu0 %v1906, 96
    %v2161 = vpop.permute.xlu0 %2160
    %v2163 = vsel %vm245, %v1906, 0
    %v2166 = vsel %vm245, %v2161, 0
    %2168 = vmatprep.subr.bf16.mxu0 0
    %2169 = vmatpush1.bf16.xpose.msra.mxu0 %v2166
    %2170 = vmatprep.subr.bf16.mxu0 0
    %2171 = vmatpush1.bf16.xpose.msra.mxu0 0
    %2172 = vmatprep.subr.bf16.mxu0 0
    %2173 = vmatpush1.bf16.xpose.msra.mxu0 0
    %2174 = vmatprep.subr.bf16.mxu0 0
    %2175 = vmatpush1.bf16.xpose.msra.mxu0 0
    %2176 = vmatprep.subr.bf16.mxu0 0
    %2177 = vmatpush1.bf16.xpose.msra.mxu0 0
    %2178 = vmatprep.subr.bf16.mxu0 0
    %2179 = vmatpush1.bf16.xpose.msra.mxu0 0
    %2180 = vmatprep.subr.bf16.mxu0 0
    %2181 = vmatpush1.bf16.xpose.msra.mxu0 0
    %2182 = vmatprep.subr.bf16.mxu0 0
    %2183 = vmatpush1.bf16.xpose.msra.mxu0 0
    %2184 = vmatprep.subr.bf16.mxu0 0
    %2185 = vmatpush1.bf16.xpose.msra.mxu0 0
    %2186 = vmatprep.subr.bf16.mxu0 0
    %2187 = vmatpush1.bf16.xpose.msra.mxu0 0
    %2188 = vmatprep.subr.bf16.mxu0 0
    %2189 = vmatpush1.bf16.xpose.msra.mxu0 0
    %2190 = vmatprep.subr.bf16.mxu0 0
    %2191 = vmatpush1.bf16.xpose.msra.mxu0 0
    %2192 = vmatprep.subr.bf16.mxu0 0
    %2193 = vmatpush1.bf16.xpose.msra.mxu0 0
    %2194 = vmatprep.subr.bf16.mxu0 0
    %2195 = vmatpush1.bf16.xpose.msra.mxu0 0
    %2196 = vmatprep.subr.bf16.mxu0 0
    %2197 = vmatpush1.bf16.xpose.msra.mxu0 0
    %2198 = vmatprep.subr.bf16.mxu0 0
    %2199 = vmatpush1.bf16.xpose.msra.mxu0 0
    %2200 = vmatprep.mubr.bf16.mxu0 0
    %2201 = vmatmul.mubr.bf16.gmra.mrb[0].mxu0 %v2163
    %v2202 = vpop.f32.mrb[0].mxu0
    %v2203 = vadd.f32 0.0, %v2202
    %v2204 = vpop.f32.mrb[0].mxu0
    %v2205 = vpop.f32.mrb[0].mxu0
    %v2206 = vadd.f32 0.0, %v2205
    %v2207 = vpop.f32.mrb[0].mxu0
    %2208 = vdwg.mxu0
    %2210 = vrot.lane.b32.xlu0 %v1907, 96
    %v2211 = vpop.permute.xlu0 %2210
    %v2213 = vsel %vm245, %v1907, 0
    %v2216 = vsel %vm245, %v2211, 0
    %2218 = vmatprep.subr.bf16.mxu0 0
    %2219 = vmatpush1.bf16.xpose.msra.mxu0 %v2216
    %2220 = vmatprep.subr.bf16.mxu0 0
    %2221 = vmatpush1.bf16.xpose.msra.mxu0 0
    %2222 = vmatprep.subr.bf16.mxu0 0
    %2223 = vmatpush1.bf16.xpose.msra.mxu0 0
    %2224 = vmatprep.subr.bf16.mxu0 0
    %2225 = vmatpush1.bf16.xpose.msra.mxu0 0
    %2226 = vmatprep.subr.bf16.mxu0 0
    %2227 = vmatpush1.bf16.xpose.msra.mxu0 0
    %2228 = vmatprep.subr.bf16.mxu0 0
    %2229 = vmatpush1.bf16.xpose.msra.mxu0 0
    %2230 = vmatprep.subr.bf16.mxu0 0
    %2231 = vmatpush1.bf16.xpose.msra.mxu0 0
    %2232 = vmatprep.subr.bf16.mxu0 0
    %2233 = vmatpush1.bf16.xpose.msra.mxu0 0
    %2234 = vmatprep.subr.bf16.mxu0 0
    %2235 = vmatpush1.bf16.xpose.msra.mxu0 0
    %2236 = vmatprep.subr.bf16.mxu0 0
    %2237 = vmatpush1.bf16.xpose.msra.mxu0 0
    %2238 = vmatprep.subr.bf16.mxu0 0
    %2239 = vmatpush1.bf16.xpose.msra.mxu0 0
    %2240 = vmatprep.subr.bf16.mxu0 0
    %2241 = vmatpush1.bf16.xpose.msra.mxu0 0
    %2242 = vmatprep.subr.bf16.mxu0 0
    %2243 = vmatpush1.bf16.xpose.msra.mxu0 0
    %2244 = vmatprep.subr.bf16.mxu0 0
    %2245 = vmatpush1.bf16.xpose.msra.mxu0 0
    %2246 = vmatprep.subr.bf16.mxu0 0
    %2247 = vmatpush1.bf16.xpose.msra.mxu0 0
    %2248 = vmatprep.subr.bf16.mxu0 0
    %2249 = vmatpush1.bf16.xpose.msra.mxu0 0
    %2250 = vmatprep.mubr.bf16.mxu0 0
    %2251 = vmatmul.mubr.bf16.gmra.mrb[0].mxu0 %v2213
    %v2252 = vpop.f32.mrb[0].mxu0
    %v2253 = vadd.f32 0.0, %v2252
    %v2254 = vpop.f32.mrb[0].mxu0
    %v2255 = vpop.f32.mrb[0].mxu0
    %v2256 = vadd.f32 0.0, %v2255
    %v2257 = vpop.f32.mrb[0].mxu0
    %2258 = vdwg.mxu0
    %2260 = vrot.lane.b32.xlu0 %v1908, 96
    %v2261 = vpop.permute.xlu0 %2260
    %v2263 = vsel %vm245, %v1908, 0
    %v2266 = vsel %vm245, %v2261, 0
    %2268 = vmatprep.subr.bf16.mxu0 0
    %2269 = vmatpush1.bf16.xpose.msra.mxu0 %v2266
    %2270 = vmatprep.subr.bf16.mxu0 0
    %2271 = vmatpush1.bf16.xpose.msra.mxu0 0
    %2272 = vmatprep.subr.bf16.mxu0 0
    %2273 = vmatpush1.bf16.xpose.msra.mxu0 0
    %2274 = vmatprep.subr.bf16.mxu0 0
    %2275 = vmatpush1.bf16.xpose.msra.mxu0 0
    %2276 = vmatprep.subr.bf16.mxu0 0
    %2277 = vmatpush1.bf16.xpose.msra.mxu0 0
    %2278 = vmatprep.subr.bf16.mxu0 0
    %2279 = vmatpush1.bf16.xpose.msra.mxu0 0
    %2280 = vmatprep.subr.bf16.mxu0 0
    %2281 = vmatpush1.bf16.xpose.msra.mxu0 0
    %2282 = vmatprep.subr.bf16.mxu0 0
    %2283 = vmatpush1.bf16.xpose.msra.mxu0 0
    %2284 = vmatprep.subr.bf16.mxu0 0
    %2285 = vmatpush1.bf16.xpose.msra.mxu0 0
    %2286 = vmatprep.subr.bf16.mxu0 0
    %2287 = vmatpush1.bf16.xpose.msra.mxu0 0
    %2288 = vmatprep.subr.bf16.mxu0 0
    %2289 = vmatpush1.bf16.xpose.msra.mxu0 0
    %2290 = vmatprep.subr.bf16.mxu0 0
    %2291 = vmatpush1.bf16.xpose.msra.mxu0 0
    %2292 = vmatprep.subr.bf16.mxu0 0
    %2293 = vmatpush1.bf16.xpose.msra.mxu0 0
    %2294 = vmatprep.subr.bf16.mxu0 0
    %2295 = vmatpush1.bf16.xpose.msra.mxu0 0
    %2296 = vmatprep.subr.bf16.mxu0 0
    %2297 = vmatpush1.bf16.xpose.msra.mxu0 0
    %2298 = vmatprep.subr.bf16.mxu0 0
    %2299 = vmatpush1.bf16.xpose.msra.mxu0 0
    %2300 = vmatprep.mubr.bf16.mxu0 0
    %2301 = vmatmul.mubr.bf16.gmra.mrb[0].mxu0 %v2263
    %v2302 = vpop.f32.mrb[0].mxu0
    %v2303 = vadd.f32 0.0, %v2302
    %v2304 = vpop.f32.mrb[0].mxu0
    %v2305 = vpop.f32.mrb[0].mxu0
    %v2306 = vadd.f32 0.0, %v2305
    %v2307 = vpop.f32.mrb[0].mxu0
    %2308 = vdwg.mxu0
    %v2309 = vmul.f32 %v1953, 0.35355338
    %v2310 = vmul.f32 %v1956, 0.35355338
    %v2311 = vmul.f32 %v2003, 0.35355338
    %v2312 = vmul.f32 %v2006, 0.35355338
    %v2313 = vmul.f32 %v2053, 0.35355338
    %v2314 = vmul.f32 %v2056, 0.35355338
    %v2315 = vmul.f32 %v2103, 0.35355338
    %v2316 = vmul.f32 %v2106, 0.35355338
    %v2317 = vmul.f32 %v2153, 0.35355338
    %v2318 = vmul.f32 %v2156, 0.35355338
    %v2319 = vmul.f32 %v2203, 0.35355338
    %v2320 = vmul.f32 %v2206, 0.35355338
    %v2321 = vmul.f32 %v2253, 0.35355338
    %v2322 = vmul.f32 %v2256, 0.35355338
    %v2323 = vmul.f32 %v2303, 0.35355338
    %v2324 = vmul.f32 %v2306, 0.35355338
    %v2325 = vadd.f32 %v2309, %v102
    %v2326 = vadd.f32 %v2310, %v103
    %v2327 = vadd.f32 %v2311, %v104
    %v2328 = vadd.f32 %v2312, %v105
    %v2329 = vadd.f32 %v2313, %v102
    %v2330 = vadd.f32 %v2314, %v103
    %v2331 = vadd.f32 %v2315, %v104
    %v2332 = vadd.f32 %v2316, %v105
    %v2333 = vadd.f32 %v2317, %v102
    %v2334 = vadd.f32 %v2318, %v103
    %v2335 = vadd.f32 %v2319, %v104
    %v2336 = vadd.f32 %v2320, %v105
    %v2337 = vadd.f32 %v2321, %v102
    %v2338 = vadd.f32 %v2322, %v103
    %v2339 = vadd.f32 %v2323, %v104
    %v2340 = vadd.f32 %v2324, %v105
    %v2341 = vsel %vm687, %v2325, -inf
    %2342 = vmax.xlane.f32.xlu0 %v2341
    %v2343 = vpop.xlane.xlu0 %2342
    %v2344 = vsel %vm687, %v2326, -inf
    %2345 = vmax.xlane.f32.xlu0 %v2344
    %v2346 = vpop.xlane.xlu0 %2345
    %v2347 = vsel %vm687, %v2327, -inf
    %2348 = vmax.xlane.f32.xlu0 %v2347
    %v2349 = vpop.xlane.xlu0 %2348
    %v2350 = vsel %vm687, %v2328, -inf
    %2351 = vmax.xlane.f32.xlu0 %v2350
    %v2352 = vpop.xlane.xlu0 %2351
    %v2353 = vsel %vm687, %v2329, -inf
    %2354 = vmax.xlane.f32.xlu0 %v2353
    %v2355 = vpop.xlane.xlu0 %2354
    %v2356 = vsel %vm687, %v2330, -inf
    %2357 = vmax.xlane.f32.xlu0 %v2356
    %v2358 = vpop.xlane.xlu0 %2357
    %v2359 = vsel %vm687, %v2331, -inf
    %2360 = vmax.xlane.f32.xlu0 %v2359
    %v2361 = vpop.xlane.xlu0 %2360
    %v2362 = vsel %vm687, %v2332, -inf
    %2363 = vmax.xlane.f32.xlu0 %v2362
    %v2364 = vpop.xlane.xlu0 %2363
    %v2365 = vsel %vm687, %v2333, -inf
    %2366 = vmax.xlane.f32.xlu0 %v2365
    %v2367 = vpop.xlane.xlu0 %2366
    %v2368 = vsel %vm687, %v2334, -inf
    %2369 = vmax.xlane.f32.xlu0 %v2368
    %v2370 = vpop.xlane.xlu0 %2369
    %v2371 = vsel %vm687, %v2335, -inf
    %2372 = vmax.xlane.f32.xlu0 %v2371
    %v2373 = vpop.xlane.xlu0 %2372
    %v2374 = vsel %vm687, %v2336, -inf
    %2375 = vmax.xlane.f32.xlu0 %v2374
    %v2376 = vpop.xlane.xlu0 %2375
    %v2377 = vsel %vm687, %v2337, -inf
    %2378 = vmax.xlane.f32.xlu0 %v2377
    %v2379 = vpop.xlane.xlu0 %2378
    %v2380 = vsel %vm687, %v2338, -inf
    %2381 = vmax.xlane.f32.xlu0 %v2380
    %v2382 = vpop.xlane.xlu0 %2381
    %v2383 = vsel %vm687, %v2339, -inf
    %2384 = vmax.xlane.f32.xlu0 %v2383
    %v2385 = vpop.xlane.xlu0 %2384
    %v2386 = vsel %vm687, %v2340, -inf
    %2387 = vmax.xlane.f32.xlu0 %v2386
    %v2388 = vpop.xlane.xlu0 %2387
    %v2389 = vsub.f32 %v2325, %v2343
    %v2390 = vsub.f32 %v2326, %v2346
    %v2391 = vsub.f32 %v2327, %v2349
    %v2392 = vsub.f32 %v2328, %v2352
    %v2393 = vsub.f32 %v2329, %v2355
    %v2394 = vsub.f32 %v2330, %v2358
    %v2395 = vsub.f32 %v2331, %v2361
    %v2396 = vsub.f32 %v2332, %v2364
    %v2397 = vsub.f32 %v2333, %v2367
    %v2398 = vsub.f32 %v2334, %v2370
    %v2399 = vsub.f32 %v2335, %v2373
    %v2400 = vsub.f32 %v2336, %v2376
    %v2401 = vsub.f32 %v2337, %v2379
    %v2402 = vsub.f32 %v2338, %v2382
    %v2403 = vsub.f32 %v2339, %v2385
    %v2404 = vsub.f32 %v2340, %v2388
    %v2405 = vmul.f32 %v2389, 1.442695
    %v2406 = vpow.pop %v2405
    %v2407 = vmul.f32 %v2390, 1.442695
    %v2408 = vpow.pop %v2407
    %v2409 = vmul.f32 %v2391, 1.442695
    %v2410 = vpow.pop %v2409
    %v2411 = vmul.f32 %v2392, 1.442695
    %v2412 = vpow.pop %v2411
    %v2413 = vmul.f32 %v2393, 1.442695
    %v2414 = vpow.pop %v2413
    %v2415 = vmul.f32 %v2394, 1.442695
    %v2416 = vpow.pop %v2415
    %v2417 = vmul.f32 %v2395, 1.442695
    %v2418 = vpow.pop %v2417
    %v2419 = vmul.f32 %v2396, 1.442695
    %v2420 = vpow.pop %v2419
    %v2421 = vmul.f32 %v2397, 1.442695
    %v2422 = vpow.pop %v2421
    %v2423 = vmul.f32 %v2398, 1.442695
    %v2424 = vpow.pop %v2423
    %v2425 = vmul.f32 %v2399, 1.442695
    %v2426 = vpow.pop %v2425
    %v2427 = vmul.f32 %v2400, 1.442695
    %v2428 = vpow.pop %v2427
    %v2429 = vmul.f32 %v2401, 1.442695
    %v2430 = vpow.pop %v2429
    %v2431 = vmul.f32 %v2402, 1.442695
    %v2432 = vpow.pop %v2431
    %v2433 = vmul.f32 %v2403, 1.442695
    %v2434 = vpow.pop %v2433
    %v2435 = vmul.f32 %v2404, 1.442695
    %v2436 = vpow.pop %v2435
    %v2437 = vsel %vm687, %v2406, 0.0
    %2438 = vadd.xlane.f32.xlu0 %v2437
    %v2439 = vpop.xlane.xlu0 %2438
    %v2440 = vsel %vm687, %v2408, 0.0
    %2441 = vadd.xlane.f32.xlu0 %v2440
    %v2442 = vpop.xlane.xlu0 %2441
    %v2443 = vsel %vm687, %v2410, 0.0
    %2444 = vadd.xlane.f32.xlu0 %v2443
    %v2445 = vpop.xlane.xlu0 %2444
    %v2446 = vsel %vm687, %v2412, 0.0
    %2447 = vadd.xlane.f32.xlu0 %v2446
    %v2448 = vpop.xlane.xlu0 %2447
    %v2449 = vsel %vm687, %v2414, 0.0
    %2450 = vadd.xlane.f32.xlu0 %v2449
    %v2451 = vpop.xlane.xlu0 %2450
    %v2452 = vsel %vm687, %v2416, 0.0
    %2453 = vadd.xlane.f32.xlu0 %v2452
    %v2454 = vpop.xlane.xlu0 %2453
    %v2455 = vsel %vm687, %v2418, 0.0
    %2456 = vadd.xlane.f32.xlu0 %v2455
    %v2457 = vpop.xlane.xlu0 %2456
    %v2458 = vsel %vm687, %v2420, 0.0
    %2459 = vadd.xlane.f32.xlu0 %v2458
    %v2460 = vpop.xlane.xlu0 %2459
    %v2461 = vsel %vm687, %v2422, 0.0
    %2462 = vadd.xlane.f32.xlu0 %v2461
    %v2463 = vpop.xlane.xlu0 %2462
    %v2464 = vsel %vm687, %v2424, 0.0
    %2465 = vadd.xlane.f32.xlu0 %v2464
    %v2466 = vpop.xlane.xlu0 %2465
    %v2467 = vsel %vm687, %v2426, 0.0
    %2468 = vadd.xlane.f32.xlu0 %v2467
    %v2469 = vpop.xlane.xlu0 %2468
    %v2470 = vsel %vm687, %v2428, 0.0
    %2471 = vadd.xlane.f32.xlu0 %v2470
    %v2472 = vpop.xlane.xlu0 %2471
    %v2473 = vsel %vm687, %v2430, 0.0
    %2474 = vadd.xlane.f32.xlu0 %v2473
    %v2475 = vpop.xlane.xlu0 %2474
    %v2476 = vsel %vm687, %v2432, 0.0
    %2477 = vadd.xlane.f32.xlu0 %v2476
    %v2478 = vpop.xlane.xlu0 %2477
    %v2479 = vsel %vm687, %v2434, 0.0
    %2480 = vadd.xlane.f32.xlu0 %v2479
    %v2481 = vpop.xlane.xlu0 %2480
    %v2482 = vsel %vm687, %v2436, 0.0
    %2483 = vadd.xlane.f32.xlu0 %v2482
    %v2484 = vpop.xlane.xlu0 %2483
    %v2485 = vrcp.pop %v2439
    %v2486 = vrcp.pop %v2442
    %v2487 = vrcp.pop %v2445
    %v2488 = vrcp.pop %v2448
    %v2489 = vrcp.pop %v2451
    %v2490 = vrcp.pop %v2454
    %v2491 = vrcp.pop %v2457
    %v2492 = vrcp.pop %v2460
    %v2493 = vrcp.pop %v2463
    %v2494 = vrcp.pop %v2466
    %v2495 = vrcp.pop %v2469
    %v2496 = vrcp.pop %v2472
    %v2497 = vrcp.pop %v2475
    %v2498 = vrcp.pop %v2478
    %v2499 = vrcp.pop %v2481
    %v2500 = vrcp.pop %v2484
    %v2501 = vmul.f32 %v2406, %v2485
    %v2502 = vmul.f32 %v2408, %v2486
    %v2503 = vmul.f32 %v2410, %v2487
    %v2504 = vmul.f32 %v2412, %v2488
    %v2505 = vmul.f32 %v2414, %v2489
    %v2506 = vmul.f32 %v2416, %v2490
    %v2507 = vmul.f32 %v2418, %v2491
    %v2508 = vmul.f32 %v2420, %v2492
    %v2509 = vmul.f32 %v2422, %v2493
    %v2510 = vmul.f32 %v2424, %v2494
    %v2511 = vmul.f32 %v2426, %v2495
    %v2512 = vmul.f32 %v2428, %v2496
    %v2513 = vmul.f32 %v2430, %v2497
    %v2514 = vmul.f32 %v2432, %v2498
    %v2515 = vmul.f32 %v2434, %v2499
    %v2516 = vmul.f32 %v2436, %v2500
    %v2517 = vpack.c.bf16 %v2502, %v2501
    %v2518 = vpack.c.bf16 %v2504, %v2503
    %v2519 = vpack.c.bf16 %v2506, %v2505
    %v2520 = vpack.c.bf16 %v2508, %v2507
    %v2521 = vpack.c.bf16 %v2510, %v2509
    %v2522 = vpack.c.bf16 %v2512, %v2511
    %v2523 = vpack.c.bf16 %v2514, %v2513
    %v2524 = vpack.c.bf16 %v2516, %v2515
    %2525 = vrot.lane.b32.xlu0 %v1901, 64
    %v2526 = vpop.permute.xlu0 %2525
    %v2529 = vsel %vm687, %v2517, 0
    %2531 = vmatprep.subr.bf16.mxu0 0
    %2532 = vmatpush1.bf16.msra.mxu0 %v2526
    %2533 = vmatprep.subr.bf16.mxu0 0
    %2534 = vmatpush1.bf16.msra.mxu0 0
    %2535 = vmatprep.subr.bf16.mxu0 0
    %2536 = vmatpush1.bf16.msra.mxu0 0
    %2537 = vmatprep.subr.bf16.mxu0 0
    %2538 = vmatpush1.bf16.msra.mxu0 0
    %2539 = vmatprep.subr.bf16.mxu0 0
    %2540 = vmatpush1.bf16.msra.mxu0 0
    %2541 = vmatprep.subr.bf16.mxu0 0
    %2542 = vmatpush1.bf16.msra.mxu0 0
    %2543 = vmatprep.subr.bf16.mxu0 0
    %2544 = vmatpush1.bf16.msra.mxu0 0
    %2545 = vmatprep.subr.bf16.mxu0 0
    %2546 = vmatpush1.bf16.msra.mxu0 0
    %2547 = vmatprep.subr.bf16.mxu0 0
    %2548 = vmatpush1.bf16.msra.mxu0 0
    %2549 = vmatprep.subr.bf16.mxu0 0
    %2550 = vmatpush1.bf16.msra.mxu0 0
    %2551 = vmatprep.subr.bf16.mxu0 0
    %2552 = vmatpush1.bf16.msra.mxu0 0
    %2553 = vmatprep.subr.bf16.mxu0 0
    %2554 = vmatpush1.bf16.msra.mxu0 0
    %2555 = vmatprep.subr.bf16.mxu0 0
    %2556 = vmatpush1.bf16.msra.mxu0 0
    %2557 = vmatprep.subr.bf16.mxu0 0
    %2558 = vmatpush1.bf16.msra.mxu0 0
    %2559 = vmatprep.subr.bf16.mxu0 0
    %2560 = vmatpush1.bf16.msra.mxu0 0
    %2561 = vmatprep.subr.bf16.mxu0 0
    %2562 = vmatpush1.bf16.msra.mxu0 0
    %2563 = vmatprep.mubr.bf16.mxu0 0
    %2564 = vmatmul.mubr.bf16.gmra.mrb[0].mxu0 %v2529
    %v2565 = vpop.f32.mrb[0].mxu0
    %v2566 = vadd.f32 0.0, %v2565
    %v2567 = vpop.f32.mrb[0].mxu0
    %v2568 = vpop.f32.mrb[0].mxu0
    %v2569 = vadd.f32 0.0, %v2568
    %v2570 = vpop.f32.mrb[0].mxu0
    %2571 = vdwg.mxu0
    %2572 = vrot.lane.b32.xlu0 %v1902, 64
    %v2573 = vpop.permute.xlu0 %2572
    %v2576 = vsel %vm687, %v2518, 0
    %2578 = vmatprep.subr.bf16.mxu0 0
    %2579 = vmatpush1.bf16.msra.mxu0 %v2573
    %2580 = vmatprep.subr.bf16.mxu0 0
    %2581 = vmatpush1.bf16.msra.mxu0 0
    %2582 = vmatprep.subr.bf16.mxu0 0
    %2583 = vmatpush1.bf16.msra.mxu0 0
    %2584 = vmatprep.subr.bf16.mxu0 0
    %2585 = vmatpush1.bf16.msra.mxu0 0
    %2586 = vmatprep.subr.bf16.mxu0 0
    %2587 = vmatpush1.bf16.msra.mxu0 0
    %2588 = vmatprep.subr.bf16.mxu0 0
    %2589 = vmatpush1.bf16.msra.mxu0 0
    %2590 = vmatprep.subr.bf16.mxu0 0
    %2591 = vmatpush1.bf16.msra.mxu0 0
    %2592 = vmatprep.subr.bf16.mxu0 0
    %2593 = vmatpush1.bf16.msra.mxu0 0
    %2594 = vmatprep.subr.bf16.mxu0 0
    %2595 = vmatpush1.bf16.msra.mxu0 0
    %2596 = vmatprep.subr.bf16.mxu0 0
    %2597 = vmatpush1.bf16.msra.mxu0 0
    %2598 = vmatprep.subr.bf16.mxu0 0
    %2599 = vmatpush1.bf16.msra.mxu0 0
    %2600 = vmatprep.subr.bf16.mxu0 0
    %2601 = vmatpush1.bf16.msra.mxu0 0
    %2602 = vmatprep.subr.bf16.mxu0 0
    %2603 = vmatpush1.bf16.msra.mxu0 0
    %2604 = vmatprep.subr.bf16.mxu0 0
    %2605 = vmatpush1.bf16.msra.mxu0 0
    %2606 = vmatprep.subr.bf16.mxu0 0
    %2607 = vmatpush1.bf16.msra.mxu0 0
    %2608 = vmatprep.subr.bf16.mxu0 0
    %2609 = vmatpush1.bf16.msra.mxu0 0
    %2610 = vmatprep.mubr.bf16.mxu0 0
    %2611 = vmatmul.mubr.bf16.gmra.mrb[0].mxu0 %v2576
    %v2612 = vpop.f32.mrb[0].mxu0
    %v2613 = vadd.f32 0.0, %v2612
    %v2614 = vpop.f32.mrb[0].mxu0
    %v2615 = vpop.f32.mrb[0].mxu0
    %v2616 = vadd.f32 0.0, %v2615
    %v2617 = vpop.f32.mrb[0].mxu0
    %2618 = vdwg.mxu0
    %2619 = vrot.lane.b32.xlu0 %v1903, 64
    %v2620 = vpop.permute.xlu0 %2619
    %v2623 = vsel %vm687, %v2519, 0
    %2625 = vmatprep.subr.bf16.mxu0 0
    %2626 = vmatpush1.bf16.msra.mxu0 %v2620
    %2627 = vmatprep.subr.bf16.mxu0 0
    %2628 = vmatpush1.bf16.msra.mxu0 0
    %2629 = vmatprep.subr.bf16.mxu0 0
    %2630 = vmatpush1.bf16.msra.mxu0 0
    %2631 = vmatprep.subr.bf16.mxu0 0
    %2632 = vmatpush1.bf16.msra.mxu0 0
    %2633 = vmatprep.subr.bf16.mxu0 0
    %2634 = vmatpush1.bf16.msra.mxu0 0
    %2635 = vmatprep.subr.bf16.mxu0 0
    %2636 = vmatpush1.bf16.msra.mxu0 0
    %2637 = vmatprep.subr.bf16.mxu0 0
    %2638 = vmatpush1.bf16.msra.mxu0 0
    %2639 = vmatprep.subr.bf16.mxu0 0
    %2640 = vmatpush1.bf16.msra.mxu0 0
    %2641 = vmatprep.subr.bf16.mxu0 0
    %2642 = vmatpush1.bf16.msra.mxu0 0
    %2643 = vmatprep.subr.bf16.mxu0 0
    %2644 = vmatpush1.bf16.msra.mxu0 0
    %2645 = vmatprep.subr.bf16.mxu0 0
    %2646 = vmatpush1.bf16.msra.mxu0 0
    %2647 = vmatprep.subr.bf16.mxu0 0
    %2648 = vmatpush1.bf16.msra.mxu0 0
    %2649 = vmatprep.subr.bf16.mxu0 0
    %2650 = vmatpush1.bf16.msra.mxu0 0
    %2651 = vmatprep.subr.bf16.mxu0 0
    %2652 = vmatpush1.bf16.msra.mxu0 0
    %2653 = vmatprep.subr.bf16.mxu0 0
    %2654 = vmatpush1.bf16.msra.mxu0 0
    %2655 = vmatprep.subr.bf16.mxu0 0
    %2656 = vmatpush1.bf16.msra.mxu0 0
    %2657 = vmatprep.mubr.bf16.mxu0 0
    %2658 = vmatmul.mubr.bf16.gmra.mrb[0].mxu0 %v2623
    %v2659 = vpop.f32.mrb[0].mxu0
    %v2660 = vadd.f32 0.0, %v2659
    %v2661 = vpop.f32.mrb[0].mxu0
    %v2662 = vpop.f32.mrb[0].mxu0
    %v2663 = vadd.f32 0.0, %v2662
    %v2664 = vpop.f32.mrb[0].mxu0
    %2665 = vdwg.mxu0
    %2666 = vrot.lane.b32.xlu0 %v1904, 64
    %v2667 = vpop.permute.xlu0 %2666
    %v2670 = vsel %vm687, %v2520, 0
    %2672 = vmatprep.subr.bf16.mxu0 0
    %2673 = vmatpush1.bf16.msra.mxu0 %v2667
    %2674 = vmatprep.subr.bf16.mxu0 0
    %2675 = vmatpush1.bf16.msra.mxu0 0
    %2676 = vmatprep.subr.bf16.mxu0 0
    %2677 = vmatpush1.bf16.msra.mxu0 0
    %2678 = vmatprep.subr.bf16.mxu0 0
    %2679 = vmatpush1.bf16.msra.mxu0 0
    %2680 = vmatprep.subr.bf16.mxu0 0
    %2681 = vmatpush1.bf16.msra.mxu0 0
    %2682 = vmatprep.subr.bf16.mxu0 0
    %2683 = vmatpush1.bf16.msra.mxu0 0
    %2684 = vmatprep.subr.bf16.mxu0 0
    %2685 = vmatpush1.bf16.msra.mxu0 0
    %2686 = vmatprep.subr.bf16.mxu0 0
    %2687 = vmatpush1.bf16.msra.mxu0 0
    %2688 = vmatprep.subr.bf16.mxu0 0
    %2689 = vmatpush1.bf16.msra.mxu0 0
    %2690 = vmatprep.subr.bf16.mxu0 0
    %2691 = vmatpush1.bf16.msra.mxu0 0
    %2692 = vmatprep.subr.bf16.mxu0 0
    %2693 = vmatpush1.bf16.msra.mxu0 0
    %2694 = vmatprep.subr.bf16.mxu0 0
    %2695 = vmatpush1.bf16.msra.mxu0 0
    %2696 = vmatprep.subr.bf16.mxu0 0
    %2697 = vmatpush1.bf16.msra.mxu0 0
    %2698 = vmatprep.subr.bf16.mxu0 0
    %2699 = vmatpush1.bf16.msra.mxu0 0
    %2700 = vmatprep.subr.bf16.mxu0 0
    %2701 = vmatpush1.bf16.msra.mxu0 0
    %2702 = vmatprep.subr.bf16.mxu0 0
    %2703 = vmatpush1.bf16.msra.mxu0 0
    %2704 = vmatprep.mubr.bf16.mxu0 0
    %2705 = vmatmul.mubr.bf16.gmra.mrb[0].mxu0 %v2670
    %v2706 = vpop.f32.mrb[0].mxu0
    %v2707 = vadd.f32 0.0, %v2706
    %v2708 = vpop.f32.mrb[0].mxu0
    %v2709 = vpop.f32.mrb[0].mxu0
    %v2710 = vadd.f32 0.0, %v2709
    %v2711 = vpop.f32.mrb[0].mxu0
    %2712 = vdwg.mxu0
    %2713 = vrot.lane.b32.xlu0 %v1905, 64
    %v2714 = vpop.permute.xlu0 %2713
    %v2717 = vsel %vm687, %v2521, 0
    %2719 = vmatprep.subr.bf16.mxu0 0
    %2720 = vmatpush1.bf16.msra.mxu0 %v2714
    %2721 = vmatprep.subr.bf16.mxu0 0
    %2722 = vmatpush1.bf16.msra.mxu0 0
    %2723 = vmatprep.subr.bf16.mxu0 0
    %2724 = vmatpush1.bf16.msra.mxu0 0
    %2725 = vmatprep.subr.bf16.mxu0 0
    %2726 = vmatpush1.bf16.msra.mxu0 0
    %2727 = vmatprep.subr.bf16.mxu0 0
    %2728 = vmatpush1.bf16.msra.mxu0 0
    %2729 = vmatprep.subr.bf16.mxu0 0
    %2730 = vmatpush1.bf16.msra.mxu0 0
    %2731 = vmatprep.subr.bf16.mxu0 0
    %2732 = vmatpush1.bf16.msra.mxu0 0
    %2733 = vmatprep.subr.bf16.mxu0 0
    %2734 = vmatpush1.bf16.msra.mxu0 0
    %2735 = vmatprep.subr.bf16.mxu0 0
    %2736 = vmatpush1.bf16.msra.mxu0 0
    %2737 = vmatprep.subr.bf16.mxu0 0
    %2738 = vmatpush1.bf16.msra.mxu0 0
    %2739 = vmatprep.subr.bf16.mxu0 0
    %2740 = vmatpush1.bf16.msra.mxu0 0
    %2741 = vmatprep.subr.bf16.mxu0 0
    %2742 = vmatpush1.bf16.msra.mxu0 0
    %2743 = vmatprep.subr.bf16.mxu0 0
    %2744 = vmatpush1.bf16.msra.mxu0 0
    %2745 = vmatprep.subr.bf16.mxu0 0
    %2746 = vmatpush1.bf16.msra.mxu0 0
    %2747 = vmatprep.subr.bf16.mxu0 0
    %2748 = vmatpush1.bf16.msra.mxu0 0
    %2749 = vmatprep.subr.bf16.mxu0 0
    %2750 = vmatpush1.bf16.msra.mxu0 0
    %2751 = vmatprep.mubr.bf16.mxu0 0
    %2752 = vmatmul.mubr.bf16.gmra.mrb[0].mxu0 %v2717
    %v2753 = vpop.f32.mrb[0].mxu0
    %v2754 = vadd.f32 0.0, %v2753
    %v2755 = vpop.f32.mrb[0].mxu0
    %v2756 = vpop.f32.mrb[0].mxu0
    %v2757 = vadd.f32 0.0, %v2756
    %v2758 = vpop.f32.mrb[0].mxu0
    %2759 = vdwg.mxu0
    %2760 = vrot.lane.b32.xlu0 %v1906, 64
    %v2761 = vpop.permute.xlu0 %2760
    %v2764 = vsel %vm687, %v2522, 0
    %2766 = vmatprep.subr.bf16.mxu0 0
    %2767 = vmatpush1.bf16.msra.mxu0 %v2761
    %2768 = vmatprep.subr.bf16.mxu0 0
    %2769 = vmatpush1.bf16.msra.mxu0 0
    %2770 = vmatprep.subr.bf16.mxu0 0
    %2771 = vmatpush1.bf16.msra.mxu0 0
    %2772 = vmatprep.subr.bf16.mxu0 0
    %2773 = vmatpush1.bf16.msra.mxu0 0
    %2774 = vmatprep.subr.bf16.mxu0 0
    %2775 = vmatpush1.bf16.msra.mxu0 0
    %2776 = vmatprep.subr.bf16.mxu0 0
    %2777 = vmatpush1.bf16.msra.mxu0 0
    %2778 = vmatprep.subr.bf16.mxu0 0
    %2779 = vmatpush1.bf16.msra.mxu0 0
    %2780 = vmatprep.subr.bf16.mxu0 0
    %2781 = vmatpush1.bf16.msra.mxu0 0
    %2782 = vmatprep.subr.bf16.mxu0 0
    %2783 = vmatpush1.bf16.msra.mxu0 0
    %2784 = vmatprep.subr.bf16.mxu0 0
    %2785 = vmatpush1.bf16.msra.mxu0 0
    %2786 = vmatprep.subr.bf16.mxu0 0
    %2787 = vmatpush1.bf16.msra.mxu0 0
    %2788 = vmatprep.subr.bf16.mxu0 0
    %2789 = vmatpush1.bf16.msra.mxu0 0
    %2790 = vmatprep.subr.bf16.mxu0 0
    %2791 = vmatpush1.bf16.msra.mxu0 0
    %2792 = vmatprep.subr.bf16.mxu0 0
    %2793 = vmatpush1.bf16.msra.mxu0 0
    %2794 = vmatprep.subr.bf16.mxu0 0
    %2795 = vmatpush1.bf16.msra.mxu0 0
    %2796 = vmatprep.subr.bf16.mxu0 0
    %2797 = vmatpush1.bf16.msra.mxu0 0
    %2798 = vmatprep.mubr.bf16.mxu0 0
    %2799 = vmatmul.mubr.bf16.gmra.mrb[0].mxu0 %v2764
    %v2800 = vpop.f32.mrb[0].mxu0
    %v2801 = vadd.f32 0.0, %v2800
    %v2802 = vpop.f32.mrb[0].mxu0
    %v2803 = vpop.f32.mrb[0].mxu0
    %v2804 = vadd.f32 0.0, %v2803
    %v2805 = vpop.f32.mrb[0].mxu0
    %2806 = vdwg.mxu0
    %2807 = vrot.lane.b32.xlu0 %v1907, 64
    %v2808 = vpop.permute.xlu0 %2807
    %v2811 = vsel %vm687, %v2523, 0
    %2813 = vmatprep.subr.bf16.mxu0 0
    %2814 = vmatpush1.bf16.msra.mxu0 %v2808
    %2815 = vmatprep.subr.bf16.mxu0 0
    %2816 = vmatpush1.bf16.msra.mxu0 0
    %2817 = vmatprep.subr.bf16.mxu0 0
    %2818 = vmatpush1.bf16.msra.mxu0 0
    %2819 = vmatprep.subr.bf16.mxu0 0
    %2820 = vmatpush1.bf16.msra.mxu0 0
    %2821 = vmatprep.subr.bf16.mxu0 0
    %2822 = vmatpush1.bf16.msra.mxu0 0
    %2823 = vmatprep.subr.bf16.mxu0 0
    %2824 = vmatpush1.bf16.msra.mxu0 0
    %2825 = vmatprep.subr.bf16.mxu0 0
    %2826 = vmatpush1.bf16.msra.mxu0 0
    %2827 = vmatprep.subr.bf16.mxu0 0
    %2828 = vmatpush1.bf16.msra.mxu0 0
    %2829 = vmatprep.subr.bf16.mxu0 0
    %2830 = vmatpush1.bf16.msra.mxu0 0
    %2831 = vmatprep.subr.bf16.mxu0 0
    %2832 = vmatpush1.bf16.msra.mxu0 0
    %2833 = vmatprep.subr.bf16.mxu0 0
    %2834 = vmatpush1.bf16.msra.mxu0 0
    %2835 = vmatprep.subr.bf16.mxu0 0
    %2836 = vmatpush1.bf16.msra.mxu0 0
    %2837 = vmatprep.subr.bf16.mxu0 0
    %2838 = vmatpush1.bf16.msra.mxu0 0
    %2839 = vmatprep.subr.bf16.mxu0 0
    %2840 = vmatpush1.bf16.msra.mxu0 0
    %2841 = vmatprep.subr.bf16.mxu0 0
    %2842 = vmatpush1.bf16.msra.mxu0 0
    %2843 = vmatprep.subr.bf16.mxu0 0
    %2844 = vmatpush1.bf16.msra.mxu0 0
    %2845 = vmatprep.mubr.bf16.mxu0 0
    %2846 = vmatmul.mubr.bf16.gmra.mrb[0].mxu0 %v2811
    %v2847 = vpop.f32.mrb[0].mxu0
    %v2848 = vadd.f32 0.0, %v2847
    %v2849 = vpop.f32.mrb[0].mxu0
    %v2850 = vpop.f32.mrb[0].mxu0
    %v2851 = vadd.f32 0.0, %v2850
    %v2852 = vpop.f32.mrb[0].mxu0
    %2853 = vdwg.mxu0
    %2854 = vrot.lane.b32.xlu0 %v1908, 64
    %v2855 = vpop.permute.xlu0 %2854
    %v2858 = vsel %vm687, %v2524, 0
    %2860 = vmatprep.subr.bf16.mxu0 0
    %2861 = vmatpush1.bf16.msra.mxu0 %v2855
    %2862 = vmatprep.subr.bf16.mxu0 0
    %2863 = vmatpush1.bf16.msra.mxu0 0
    %2864 = vmatprep.subr.bf16.mxu0 0
    %2865 = vmatpush1.bf16.msra.mxu0 0
    %2866 = vmatprep.subr.bf16.mxu0 0
    %2867 = vmatpush1.bf16.msra.mxu0 0
    %2868 = vmatprep.subr.bf16.mxu0 0
    %2869 = vmatpush1.bf16.msra.mxu0 0
    %2870 = vmatprep.subr.bf16.mxu0 0
    %2871 = vmatpush1.bf16.msra.mxu0 0
    %2872 = vmatprep.subr.bf16.mxu0 0
    %2873 = vmatpush1.bf16.msra.mxu0 0
    %2874 = vmatprep.subr.bf16.mxu0 0
    %2875 = vmatpush1.bf16.msra.mxu0 0
    %2876 = vmatprep.subr.bf16.mxu0 0
    %2877 = vmatpush1.bf16.msra.mxu0 0
    %2878 = vmatprep.subr.bf16.mxu0 0
    %2879 = vmatpush1.bf16.msra.mxu0 0
    %2880 = vmatprep.subr.bf16.mxu0 0
    %2881 = vmatpush1.bf16.msra.mxu0 0
    %2882 = vmatprep.subr.bf16.mxu0 0
    %2883 = vmatpush1.bf16.msra.mxu0 0
    %2884 = vmatprep.subr.bf16.mxu0 0
    %2885 = vmatpush1.bf16.msra.mxu0 0
    %2886 = vmatprep.subr.bf16.mxu0 0
    %2887 = vmatpush1.bf16.msra.mxu0 0
    %2888 = vmatprep.subr.bf16.mxu0 0
    %2889 = vmatpush1.bf16.msra.mxu0 0
    %2890 = vmatprep.subr.bf16.mxu0 0
    %2891 = vmatpush1.bf16.msra.mxu0 0
    %2892 = vmatprep.mubr.bf16.mxu0 0
    %2893 = vmatmul.mubr.bf16.gmra.mrb[0].mxu0 %v2858
    %v2894 = vpop.f32.mrb[0].mxu0
    %v2895 = vadd.f32 0.0, %v2894
    %v2896 = vpop.f32.mrb[0].mxu0
    %v2897 = vpop.f32.mrb[0].mxu0
    %v2898 = vadd.f32 0.0, %v2897
    %v2899 = vpop.f32.mrb[0].mxu0
    %2900 = vdwg.mxu0
    %2905 = vrot.lane.b32.xlu0 %v2660, 8
    %v2906 = vpop.permute.xlu0 %2905
    %2907 = vrot.lane.b32.xlu0 %v2663, 8
    %v2908 = vpop.permute.xlu0 %2907
    %2909 = vrot.lane.b32.xlu0 %v2707, 8
    %v2910 = vpop.permute.xlu0 %2909
    %2911 = vrot.lane.b32.xlu0 %v2710, 8
    %v2912 = vpop.permute.xlu0 %2911
    %2921 = vrot.lane.b32.xlu0 %v2754, 16
    %v2922 = vpop.permute.xlu0 %2921
    %2923 = vrot.lane.b32.xlu0 %v2757, 16
    %v2924 = vpop.permute.xlu0 %2923
    %2925 = vrot.lane.b32.xlu0 %v2801, 16
    %v2926 = vpop.permute.xlu0 %2925
    %2927 = vrot.lane.b32.xlu0 %v2804, 16
    %v2928 = vpop.permute.xlu0 %2927
    %2937 = vrot.lane.b32.xlu0 %v2848, 24
    %v2938 = vpop.permute.xlu0 %2937
    %2939 = vrot.lane.b32.xlu0 %v2851, 24
    %v2940 = vpop.permute.xlu0 %2939
    %2941 = vrot.lane.b32.xlu0 %v2895, 24
    %v2942 = vpop.permute.xlu0 %2941
    %2943 = vrot.lane.b32.xlu0 %v2898, 24
    %v2944 = vpop.permute.xlu0 %2943
    %v2949 = vsel %vm245, %v2566, %v2906
    %v2950 = vsel %vm245, %v2569, %v2908
    %v2951 = vsel %vm245, %v2613, %v2910
    %v2952 = vsel %vm245, %v2616, %v2912
    %v2953 = vsel %vm687, %v2949, %v2922
    %v2954 = vsel %vm687, %v2950, %v2924
    %v2955 = vsel %vm687, %v2951, %v2926
    %v2956 = vsel %vm687, %v2952, %v2928
    %v2957 = vsel %vm1304, %v2953, %v2938
    %v2958 = vsel %vm1304, %v2954, %v2940
    %v2959 = vsel %vm1304, %v2955, %v2942
    %v2960 = vsel %vm1304, %v2956, %v2944
    %v2961 = vpack.c.bf16 %v2958, %v2957
    %v2962 = vpack.c.bf16 %v2960, %v2959
    %v2964 = vlaneseq
    %v2965 = vshrl.u32 %v2964, 7
    %v2966 = vsub.s32 0, %v2965
    %v2967 = vrot.slane %v1785, %v2966
    %v2973 = vunpack.c.l.b16 %v1781
    %v2974 = vunpack.c.l.b16 %v1782
    %v2975 = vunpack.c.l.b16 %v1783
    %v2976 = vunpack.c.l.b16 %v1784
    %v2977 = vpack.c.b16 %v2974, %v2973
    %v2978 = vpack.c.b16 %v2976, %v2975
    %v2982 = vsel %vm138, %v2961, 0
    %v2985 = vsel %vm138, %v2962, 0
    %2987 = vmatprep.subr.bf16.mxu0 0
    %2988 = vmatpush1.bf16.msra.mxu0 %v2977
    %2989 = vmatprep.subr.bf16.mxu0 0
    %2990 = vmatpush1.bf16.msra.mxu0 %v2978
    %2991 = vmatprep.subr.bf16.mxu0 0
    %2992 = vmatpush1.bf16.msra.mxu0 0
    %2993 = vmatprep.subr.bf16.mxu0 0
    %2994 = vmatpush1.bf16.msra.mxu0 0
    %2995 = vmatprep.subr.bf16.mxu0 0
    %2996 = vmatpush1.bf16.msra.mxu0 0
    %2997 = vmatprep.subr.bf16.mxu0 0
    %2998 = vmatpush1.bf16.msra.mxu0 0
    %2999 = vmatprep.subr.bf16.mxu0 0
    %3000 = vmatpush1.bf16.msra.mxu0 0
    %3001 = vmatprep.subr.bf16.mxu0 0
    %3002 = vmatpush1.bf16.msra.mxu0 0
    %3003 = vmatprep.subr.bf16.mxu0 0
    %3004 = vmatpush1.bf16.msra.mxu0 0
    %3005 = vmatprep.subr.bf16.mxu0 0
    %3006 = vmatpush1.bf16.msra.mxu0 0
    %3007 = vmatprep.subr.bf16.mxu0 0
    %3008 = vmatpush1.bf16.msra.mxu0 0
    %3009 = vmatprep.subr.bf16.mxu0 0
    %3010 = vmatpush1.bf16.msra.mxu0 0
    %3011 = vmatprep.subr.bf16.mxu0 0
    %3012 = vmatpush1.bf16.msra.mxu0 0
    %3013 = vmatprep.subr.bf16.mxu0 0
    %3014 = vmatpush1.bf16.msra.mxu0 0
    %3015 = vmatprep.subr.bf16.mxu0 0
    %3016 = vmatpush1.bf16.msra.mxu0 0
    %3017 = vmatprep.subr.bf16.mxu0 0
    %3018 = vmatpush1.bf16.msra.mxu0 0
    %3019 = vmatprep.mubr.bf16.mxu0 0
    %3020 = vmatmul.mubr.bf16.gmra.mrb[0].mxu0 %v2982
    %v3021 = vpop.f32.mrb[0].mxu0
    %v3022 = vadd.f32 %v2967, %v3021
    %v3023 = vpop.f32.mrb[0].mxu0
    %v3024 = vpop.f32.mrb[0].mxu0
    %v3025 = vadd.f32 %v2967, %v3024
    %v3026 = vpop.f32.mrb[0].mxu0
    %3027 = vmatprep.mubr.bf16.mxu0 0
    %3028 = vmatmul.mubr.bf16.gmra.mrb[0].mxu0 %v2985
    %v3029 = vpop.f32.mrb[0].mxu0
    %v3030 = vadd.f32 %v2967, %v3029
    %v3031 = vpop.f32.mrb[0].mxu0
    %v3032 = vpop.f32.mrb[0].mxu0
    %v3033 = vadd.f32 %v2967, %v3032
    %v3034 = vpop.f32.mrb[0].mxu0
    %3035 = vdwg.mxu0
    %3036 = vst.msk [vmem:[%s26] sm:$0xff] %vm687, %v2501
    %3037 = vst.msk [vmem:[%s26 + $0x8] sm:$0xff] %vm687, %v2502
    %3038 = vst.msk [vmem:[%s26 + $0x10] sm:$0xff] %vm687, %v2503
    %3039 = vst.msk [vmem:[%s26 + $0x18] sm:$0xff] %vm687, %v2504
    %3040 = vst.msk [vmem:[%s26 + $0x20] sm:$0xff] %vm687, %v2505
    %3041 = vst.msk [vmem:[%s26 + $0x28] sm:$0xff] %vm687, %v2506
    %3042 = vst.msk [vmem:[%s26 + $0x30] sm:$0xff] %vm687, %v2507
    %3043 = vst.msk [vmem:[%s26 + $0x38] sm:$0xff] %vm687, %v2508
    %3044 = vst.msk [vmem:[%s26 + $0x40] sm:$0xff] %vm687, %v2509
    %3045 = vst.msk [vmem:[%s26 + $0x48] sm:$0xff] %vm687, %v2510
    %3046 = vst.msk [vmem:[%s26 + $0x50] sm:$0xff] %vm687, %v2511
    %3047 = vst.msk [vmem:[%s26 + $0x58] sm:$0xff] %vm687, %v2512
    %3048 = vst.msk [vmem:[%s26 + $0x60] sm:$0xff] %vm687, %v2513
    %3049 = vst.msk [vmem:[%s26 + $0x68] sm:$0xff] %vm687, %v2514
    %3050 = vst.msk [vmem:[%s26 + $0x70] sm:$0xff] %vm687, %v2515
    %3051 = vst.msk [vmem:[%s26 + $0x78] sm:$0xff] %vm687, %v2516
    %v3052 = vadd.f32 %v3022, %v1772
    %v3053 = vadd.f32 %v3025, %v1773
    %v3054 = vadd.f32 %v3030, %v1774
    %v3055 = vadd.f32 %v3033, %v1775
    %v3056 = vsel %vm138, %v3052, 0.0
    %3057 = vadd.xlane.f32.xlu0 %v3056
    %v3058 = vpop.xlane.xlu0 %3057
    %v3059 = vsel %vm138, %v3053, 0.0
    %3060 = vadd.xlane.f32.xlu0 %v3059
    %v3061 = vpop.xlane.xlu0 %3060
    %v3062 = vsel %vm138, %v3054, 0.0
    %3063 = vadd.xlane.f32.xlu0 %v3062
    %v3064 = vpop.xlane.xlu0 %3063
    %v3065 = vsel %vm138, %v3055, 0.0
    %3066 = vadd.xlane.f32.xlu0 %v3065
    %v3067 = vpop.xlane.xlu0 %3066
    %v3068 = vmul.f32 %v3058, %v1400
    %v3069 = vmul.f32 %v3061, %v1400
    %v3070 = vmul.f32 %v3064, %v1400
    %v3071 = vmul.f32 %v3067, %v1400
    %v3072 = vsub.f32 %v3052, %v3068
    %v3073 = vsub.f32 %v3053, %v3069
    %v3074 = vsub.f32 %v3054, %v3070
    %v3075 = vsub.f32 %v3055, %v3071
    %v3076 = vmul.f32 %v3072, %v3072
    %v3077 = vmul.f32 %v3073, %v3073
    %v3078 = vmul.f32 %v3074, %v3074
    %v3079 = vmul.f32 %v3075, %v3075
    %v3080 = vsel %vm138, %v3076, 0.0
    %3081 = vadd.xlane.f32.xlu0 %v3080
    %v3082 = vpop.xlane.xlu0 %3081
    %v3083 = vsel %vm138, %v3077, 0.0
    %3084 = vadd.xlane.f32.xlu0 %v3083
    %v3085 = vpop.xlane.xlu0 %3084
    %v3086 = vsel %vm138, %v3078, 0.0
    %3087 = vadd.xlane.f32.xlu0 %v3086
    %v3088 = vpop.xlane.xlu0 %3087
    %v3089 = vsel %vm138, %v3079, 0.0
    %3090 = vadd.xlane.f32.xlu0 %v3089
    %v3091 = vpop.xlane.xlu0 %3090
    %v3092 = vmul.f32 %v3082, 0.032258064
    %v3093 = vmul.f32 %v3085, 0.032258064
    %v3094 = vmul.f32 %v3088, 0.032258064
    %v3095 = vmul.f32 %v3091, 0.032258064
    %v3096 = vrsqrt.pop %v3092
    %v3097 = vmul.f32 %v3092, %v3096
    %vm3098 = vcmp.eq.f32.partialorder %v3092, inf
    %v3099 = vsel %vm3098, %v3092, %v3097
    %vm3100 = vcmp.eq.f32.partialorder %v3092, 0.0
    %v3101 = vand.u32 %v3092, 2147483648
    %v3102 = vsel %vm3100, %v3101, %v3099
    %v3103 = vrsqrt.pop %v3093
    %v3104 = vmul.f32 %v3093, %v3103
    %vm3105 = vcmp.eq.f32.partialorder %v3093, inf
    %v3106 = vsel %vm3105, %v3093, %v3104
    %vm3107 = vcmp.eq.f32.partialorder %v3093, 0.0
    %v3108 = vand.u32 %v3093, 2147483648
    %v3109 = vsel %vm3107, %v3108, %v3106
    %v3110 = vrsqrt.pop %v3094
    %v3111 = vmul.f32 %v3094, %v3110
    %vm3112 = vcmp.eq.f32.partialorder %v3094, inf
    %v3113 = vsel %vm3112, %v3094, %v3111
    %vm3114 = vcmp.eq.f32.partialorder %v3094, 0.0
    %v3115 = vand.u32 %v3094, 2147483648
    %v3116 = vsel %vm3114, %v3115, %v3113
    %v3117 = vrsqrt.pop %v3095
    %v3118 = vmul.f32 %v3095, %v3117
    %vm3119 = vcmp.eq.f32.partialorder %v3095, inf
    %v3120 = vsel %vm3119, %v3095, %v3118
    %vm3121 = vcmp.eq.f32.partialorder %v3095, 0.0
    %v3122 = vand.u32 %v3095, 2147483648
    %v3123 = vsel %vm3121, %v3122, %v3120
    %v3124 = vadd.f32 %v3102, 1e-06
    %v3125 = vadd.f32 %v3109, 1e-06
    %v3126 = vadd.f32 %v3116, 1e-06
    %v3127 = vadd.f32 %v3123, 1e-06
    %v3128 = vrcp.pop %v3124
    %v3129 = vrcp.pop %v3125
    %v3130 = vrcp.pop %v3126
    %v3131 = vrcp.pop %v3127
    %v3132 = vmul.f32 %v1469, %v3072
    %v3133 = vmul.f32 %v1469, %v3073
    %v3134 = vmul.f32 %v1469, %v3074
    %v3135 = vmul.f32 %v1469, %v3075
    %v3136 = vmul.f32 %v3132, %v3128
    %v3137 = vmul.f32 %v3133, %v3129
    %v3138 = vmul.f32 %v3134, %v3130
    %v3139 = vmul.f32 %v3135, %v3131
    %v3140 = vadd.f32 %v3136, %v1483
    %v3141 = vadd.f32 %v3137, %v1483
    %v3142 = vadd.f32 %v3138, %v1483
    %v3143 = vadd.f32 %v3139, %v1483
    %v3144 = vld [vmem:[%s19] sm:$0x1]
    %v3145 = vld [vmem:[%s20] sm:$0x1]
    %v3146 = vld [vmem:[%s21] sm:$0xf]
    %v3147 = vld [vmem:[%s21 + $0x4] sm:$0xf]
    %v3148 = vld [vmem:[%s21 + $0x8] sm:$0xf]
    %v3149 = vld [vmem:[%s21 + $0xc] sm:$0xf]
    %v3150 = vld [vmem:[%s22] sm:$0x1]
    %v3151 = vld [vmem:[%s23] sm:$0xf]
    %v3152 = vld [vmem:[%s23 + $0x4] sm:$0xf]
    %v3153 = vld [vmem:[%s23 + $0x8] sm:$0xf]
    %v3154 = vld [vmem:[%s23 + $0xc] sm:$0xf]
    %v3155 = vld [vmem:[%s23 + $0x10] sm:$0xf]
    %v3156 = vld [vmem:[%s23 + $0x14] sm:$0xf]
    %v3157 = vld [vmem:[%s23 + $0x18] sm:$0xf]
    %v3158 = vld [vmem:[%s23 + $0x1c] sm:$0xf]
    %v3159 = vld [vmem:[%s24] sm:$0x1]
    %v3160 = vsel %vm138, %v3140, 0.0
    %3161 = vadd.xlane.f32.xlu0 %v3160
    %v3162 = vpop.xlane.xlu0 %3161
    %v3163 = vsel %vm138, %v3141, 0.0
    %3164 = vadd.xlane.f32.xlu0 %v3163
    %v3165 = vpop.xlane.xlu0 %3164
    %v3166 = vsel %vm138, %v3142, 0.0
    %3167 = vadd.xlane.f32.xlu0 %v3166
    %v3168 = vpop.xlane.xlu0 %3167
    %v3169 = vsel %vm138, %v3143, 0.0
    %3170 = vadd.xlane.f32.xlu0 %v3169
    %v3171 = vpop.xlane.xlu0 %3170
    %v3172 = vmul.f32 %v3162, %v1400
    %v3173 = vmul.f32 %v3165, %v1400
    %v3174 = vmul.f32 %v3168, %v1400
    %v3175 = vmul.f32 %v3171, %v1400
    %v3176 = vsub.f32 %v3140, %v3172
    %v3177 = vsub.f32 %v3141, %v3173
    %v3178 = vsub.f32 %v3142, %v3174
    %v3179 = vsub.f32 %v3143, %v3175
    %v3180 = vmul.f32 %v3176, %v3176
    %v3181 = vmul.f32 %v3177, %v3177
    %v3182 = vmul.f32 %v3178, %v3178
    %v3183 = vmul.f32 %v3179, %v3179
    %v3184 = vsel %vm138, %v3180, 0.0
    %3185 = vadd.xlane.f32.xlu0 %v3184
    %v3186 = vpop.xlane.xlu0 %3185
    %v3187 = vsel %vm138, %v3181, 0.0
    %3188 = vadd.xlane.f32.xlu0 %v3187
    %v3189 = vpop.xlane.xlu0 %3188
    %v3190 = vsel %vm138, %v3182, 0.0
    %3191 = vadd.xlane.f32.xlu0 %v3190
    %v3192 = vpop.xlane.xlu0 %3191
    %v3193 = vsel %vm138, %v3183, 0.0
    %3194 = vadd.xlane.f32.xlu0 %v3193
    %v3195 = vpop.xlane.xlu0 %3194
    %v3196 = vmul.f32 %v3186, 0.032258064
    %v3197 = vmul.f32 %v3189, 0.032258064
    %v3198 = vmul.f32 %v3192, 0.032258064
    %v3199 = vmul.f32 %v3195, 0.032258064
    %v3200 = vrsqrt.pop %v3196
    %v3201 = vmul.f32 %v3196, %v3200
    %vm3202 = vcmp.eq.f32.partialorder %v3196, inf
    %v3203 = vsel %vm3202, %v3196, %v3201
    %vm3204 = vcmp.eq.f32.partialorder %v3196, 0.0
    %v3205 = vand.u32 %v3196, 2147483648
    %v3206 = vsel %vm3204, %v3205, %v3203
    %v3207 = vrsqrt.pop %v3197
    %v3208 = vmul.f32 %v3197, %v3207
    %vm3209 = vcmp.eq.f32.partialorder %v3197, inf
    %v3210 = vsel %vm3209, %v3197, %v3208
    %vm3211 = vcmp.eq.f32.partialorder %v3197, 0.0
    %v3212 = vand.u32 %v3197, 2147483648
    %v3213 = vsel %vm3211, %v3212, %v3210
    %v3214 = vrsqrt.pop %v3198
    %v3215 = vmul.f32 %v3198, %v3214
    %vm3216 = vcmp.eq.f32.partialorder %v3198, inf
    %v3217 = vsel %vm3216, %v3198, %v3215
    %vm3218 = vcmp.eq.f32.partialorder %v3198, 0.0
    %v3219 = vand.u32 %v3198, 2147483648
    %v3220 = vsel %vm3218, %v3219, %v3217
    %v3221 = vrsqrt.pop %v3199
    %v3222 = vmul.f32 %v3199, %v3221
    %vm3223 = vcmp.eq.f32.partialorder %v3199, inf
    %v3224 = vsel %vm3223, %v3199, %v3222
    %vm3225 = vcmp.eq.f32.partialorder %v3199, 0.0
    %v3226 = vand.u32 %v3199, 2147483648
    %v3227 = vsel %vm3225, %v3226, %v3224
    %v3228 = vadd.f32 %v3206, 1e-06
    %v3229 = vadd.f32 %v3213, 1e-06
    %v3230 = vadd.f32 %v3220, 1e-06
    %v3231 = vadd.f32 %v3227, 1e-06
    %v3232 = vrcp.pop %v3228
    %v3233 = vrcp.pop %v3229
    %v3234 = vrcp.pop %v3230
    %v3235 = vrcp.pop %v3231
    %v3237 = vlaneseq
    %v3238 = vshrl.u32 %v3237, 7
    %v3239 = vsub.s32 0, %v3238
    %v3240 = vrot.slane %v3144, %v3239
    %v3242 = vmul.f32 %v3240, %v3176
    %v3243 = vmul.f32 %v3240, %v3177
    %v3244 = vmul.f32 %v3240, %v3178
    %v3245 = vmul.f32 %v3240, %v3179
    %v3246 = vmul.f32 %v3242, %v3232
    %v3247 = vmul.f32 %v3243, %v3233
    %v3248 = vmul.f32 %v3244, %v3234
    %v3249 = vmul.f32 %v3245, %v3235
    %v3251 = vlaneseq
    %v3252 = vshrl.u32 %v3251, 7
    %v3253 = vsub.s32 0, %v3252
    %v3254 = vrot.slane %v3145, %v3253
    %v3256 = vadd.f32 %v3246, %v3254
    %v3257 = vadd.f32 %v3247, %v3254
    %v3258 = vadd.f32 %v3248, %v3254
    %v3259 = vadd.f32 %v3249, %v3254
    %v3260 = vpack.c.bf16 %v3257, %v3256
    %v3261 = vpack.c.bf16 %v3259, %v3258
    %v3263 = vlaneseq
    %v3264 = vshrl.u32 %v3263, 7
    %v3265 = vsub.s32 0, %v3264
    %v3266 = vrot.slane %v3150, %v3265
    %v3272 = vunpack.c.l.b16 %v3146
    %v3273 = vunpack.c.l.b16 %v3147
    %v3274 = vunpack.c.l.b16 %v3148
    %v3275 = vunpack.c.l.b16 %v3149
    %v3276 = vpack.c.b16 %v3273, %v3272
    %v3277 = vpack.c.b16 %v3275, %v3274
    %v3281 = vsel %vm138, %v3260, 0
    %v3284 = vsel %vm138, %v3261, 0
    %3286 = vmatprep.subr.bf16.mxu0 0
    %3287 = vmatpush1.bf16.msra.mxu0 %v3276
    %3288 = vmatprep.subr.bf16.mxu0 0
    %3289 = vmatpush1.bf16.msra.mxu0 %v3277
    %3290 = vmatprep.subr.bf16.mxu0 0
    %3291 = vmatpush1.bf16.msra.mxu0 0
    %3292 = vmatprep.subr.bf16.mxu0 0
    %3293 = vmatpush1.bf16.msra.mxu0 0
    %3294 = vmatprep.subr.bf16.mxu0 0
    %3295 = vmatpush1.bf16.msra.mxu0 0
    %3296 = vmatprep.subr.bf16.mxu0 0
    %3297 = vmatpush1.bf16.msra.mxu0 0
    %3298 = vmatprep.subr.bf16.mxu0 0
    %3299 = vmatpush1.bf16.msra.mxu0 0
    %3300 = vmatprep.subr.bf16.mxu0 0
    %3301 = vmatpush1.bf16.msra.mxu0 0
    %3302 = vmatprep.subr.bf16.mxu0 0
    %3303 = vmatpush1.bf16.msra.mxu0 0
    %3304 = vmatprep.subr.bf16.mxu0 0
    %3305 = vmatpush1.bf16.msra.mxu0 0
    %3306 = vmatprep.subr.bf16.mxu0 0
    %3307 = vmatpush1.bf16.msra.mxu0 0
    %3308 = vmatprep.subr.bf16.mxu0 0
    %3309 = vmatpush1.bf16.msra.mxu0 0
    %3310 = vmatprep.subr.bf16.mxu0 0
    %3311 = vmatpush1.bf16.msra.mxu0 0
    %3312 = vmatprep.subr.bf16.mxu0 0
    %3313 = vmatpush1.bf16.msra.mxu0 0
    %3314 = vmatprep.subr.bf16.mxu0 0
    %3315 = vmatpush1.bf16.msra.mxu0 0
    %3316 = vmatprep.subr.bf16.mxu0 0
    %3317 = vmatpush1.bf16.msra.mxu0 0
    %3318 = vmatprep.mubr.bf16.mxu0 0
    %3319 = vmatmul.mubr.bf16.gmra.mrb[0].mxu0 %v3281
    %v3320 = vpop.f32.mrb[0].mxu0
    %v3321 = vadd.f32 %v3266, %v3320
    %v3322 = vpop.f32.mrb[0].mxu0
    %v3323 = vpop.f32.mrb[0].mxu0
    %v3324 = vadd.f32 %v3266, %v3323
    %v3325 = vpop.f32.mrb[0].mxu0
    %3326 = vmatprep.mubr.bf16.mxu0 0
    %3327 = vmatmul.mubr.bf16.gmra.mrb[0].mxu0 %v3284
    %v3328 = vpop.f32.mrb[0].mxu0
    %v3329 = vadd.f32 %v3266, %v3328
    %v3330 = vpop.f32.mrb[0].mxu0
    %v3331 = vpop.f32.mrb[0].mxu0
    %v3332 = vadd.f32 %v3266, %v3331
    %v3333 = vpop.f32.mrb[0].mxu0
    %3334 = vdwg.mxu0
    %v3335 = vmax.f32 %v3321, 0.0
    %v3336 = vmax.f32 %v3324, 0.0
    %v3337 = vmax.f32 %v3329, 0.0
    %v3338 = vmax.f32 %v3332, 0.0
    %v3339 = vpack.c.bf16 %v3336, %v3335
    %v3340 = vpack.c.bf16 %v3338, %v3337
    %v3342 = vlaneseq
    %v3343 = vshrl.u32 %v3342, 7
    %v3344 = vsub.s32 0, %v3343
    %v3345 = vrot.slane %v3159, %v3344
    %v3355 = vunpack.c.l.b16 %v3151
    %v3356 = vunpack.c.l.b16 %v3152
    %v3357 = vunpack.c.l.b16 %v3153
    %v3358 = vunpack.c.l.b16 %v3154
    %v3359 = vunpack.c.l.b16 %v3155
    %v3360 = vunpack.c.l.b16 %v3156
    %v3361 = vunpack.c.l.b16 %v3157
    %v3362 = vunpack.c.l.b16 %v3158
    %v3363 = vpack.c.b16 %v3356, %v3355
    %v3364 = vpack.c.b16 %v3358, %v3357
    %v3365 = vpack.c.b16 %v3360, %v3359
    %v3366 = vpack.c.b16 %v3362, %v3361
    %v3372 = vsel %vm1716, %v3339, 0
    %v3375 = vsel %vm1716, %v3340, 0
    %3377 = vmatprep.subr.bf16.mxu0 0
    %3378 = vmatpush1.bf16.msra.mxu0 %v3363
    %3379 = vmatprep.subr.bf16.mxu0 0
    %3380 = vmatpush1.bf16.msra.mxu0 %v3364
    %3381 = vmatprep.subr.bf16.mxu0 0
    %3382 = vmatpush1.bf16.msra.mxu0 %v3365
    %3383 = vmatprep.subr.bf16.mxu0 0
    %3384 = vmatpush1.bf16.msra.mxu0 %v3366
    %3385 = vmatprep.subr.bf16.mxu0 0
    %3386 = vmatpush1.bf16.msra.mxu0 0
    %3387 = vmatprep.subr.bf16.mxu0 0
    %3388 = vmatpush1.bf16.msra.mxu0 0
    %3389 = vmatprep.subr.bf16.mxu0 0
    %3390 = vmatpush1.bf16.msra.mxu0 0
    %3391 = vmatprep.subr.bf16.mxu0 0
    %3392 = vmatpush1.bf16.msra.mxu0 0
    %3393 = vmatprep.subr.bf16.mxu0 0
    %3394 = vmatpush1.bf16.msra.mxu0 0
    %3395 = vmatprep.subr.bf16.mxu0 0
    %3396 = vmatpush1.bf16.msra.mxu0 0
    %3397 = vmatprep.subr.bf16.mxu0 0
    %3398 = vmatpush1.bf16.msra.mxu0 0
    %3399 = vmatprep.subr.bf16.mxu0 0
    %3400 = vmatpush1.bf16.msra.mxu0 0
    %3401 = vmatprep.subr.bf16.mxu0 0
    %3402 = vmatpush1.bf16.msra.mxu0 0
    %3403 = vmatprep.subr.bf16.mxu0 0
    %3404 = vmatpush1.bf16.msra.mxu0 0
    %3405 = vmatprep.subr.bf16.mxu0 0
    %3406 = vmatpush1.bf16.msra.mxu0 0
    %3407 = vmatprep.subr.bf16.mxu0 0
    %3408 = vmatpush1.bf16.msra.mxu0 0
    %3409 = vmatprep.mubr.bf16.mxu0 0
    %3410 = vmatmul.mubr.bf16.gmra.mrb[0].mxu0 %v3372
    %v3411 = vpop.f32.mrb[0].mxu0
    %v3412 = vadd.f32 %v3345, %v3411
    %v3413 = vpop.f32.mrb[0].mxu0
    %v3414 = vpop.f32.mrb[0].mxu0
    %v3415 = vadd.f32 %v3345, %v3414
    %v3416 = vpop.f32.mrb[0].mxu0
    %3417 = vmatprep.mubr.bf16.mxu0 0
    %3418 = vmatmul.mubr.bf16.gmra.mrb[0].mxu0 %v3375
    %v3419 = vpop.f32.mrb[0].mxu0
    %v3420 = vadd.f32 %v3345, %v3419
    %v3421 = vpop.f32.mrb[0].mxu0
    %v3422 = vpop.f32.mrb[0].mxu0
    %v3423 = vadd.f32 %v3345, %v3422
    %v3424 = vpop.f32.mrb[0].mxu0
    %3425 = vdwg.mxu0
    %v3426 = vadd.f32 %v3412, %v3140
    %v3427 = vadd.f32 %v3415, %v3141
    %v3428 = vadd.f32 %v3420, %v3142
    %v3429 = vadd.f32 %v3423, %v3143
    %3430 = vst.msk [vmem:[#allocation2] sm:$0xff] %vm138, %v3426
    %3431 = vst.msk [vmem:[#allocation2 + $0x8] sm:$0xff] %vm138, %v3427
    %3432 = vst.msk [vmem:[#allocation2 + $0x10] sm:$0xff] %vm138, %v3428
    %3433 = vst.msk [vmem:[#allocation2 + $0x18] sm:$0xff] %vm138, %v3429
    // Predicated region
    $region102: #{transformer_encoder_layer.1} parent=1 // pred_check
      _
    $region103: #{transformer_encoder_layer.1} parent=1 // pred_check_branch
      %3435 = sbr.rel (0) target = $region105
    $region104: #{transformer_encoder_layer.1} parent=1 // pred_region
      %s3437 = ssub.s32 512, 512
      %3438 = vsyncadd [#allocation3], %s3437
      %s3439 = sshll.u32 [#allocation2], 4
      %s3440 = int_to_ptr.vmem [resolvable:$true] %s3439
      %3445 = dma.vmem_to_hbm [thread:$0]  %s3440, 512, %s25, [#allocation3], 128, 128, 8
    $region105: #{transformer_encoder_layer.1} parent=1 // pred_fallthru
      _
    // Predicated region
    $region106: #{transformer_encoder_layer.1} parent=1 // pred_check
      _
    $region107: #{transformer_encoder_layer.1} parent=1 // pred_check_branch
      %3447 = sbr.rel (0) target = $region109
    $region108: #{transformer_encoder_layer.1} parent=1 // pred_region
      _
    $region109: #{transformer_encoder_layer.1} parent=1 // pred_fallthru
      _
    // Predicated region
    $region110: #{transformer_encoder_layer.1} parent=1 // pred_check
      _
    $region111: #{transformer_encoder_layer.1} parent=1 // pred_check_branch
      %3449 = sbr.rel (0) target = $region113
    $region112: #{transformer_encoder_layer.1} parent=1 // pred_region
      %3450 = dma.done [#allocation3], 512
    $region113: #{transformer_encoder_layer.1} parent=1 // pred_fallthru
      _
    // Predicated region
    $region114: #{transformer_encoder_layer.1} parent=1 // pred_check
      _
    $region115: #{transformer_encoder_layer.1} parent=1 // pred_check_branch
      %3452 = sbr.rel (0) target = $region117
    $region116: #{transformer_encoder_layer.1} parent=1 // pred_region
      _
    $region117: #{transformer_encoder_layer.1} parent=1 // pred_fallthru
      _
    %3453 = vsyncpa [#allocation3], 1

</llo_original>
